<compile_context>
chip_gen: v7x
topology: tpu7x:2x2x1
jax: 0.10.0
libtpu: 0.0.40
codegen_flags: <defaults>
</compile_context>

<pallas_src>
import math

import jax
import jax.numpy as jnp
from jax import lax
from jax.experimental import pallas as pl
from jax.experimental.pallas import tpu as pltpu

# ----------------------------- config (small) ------------------------------
VOCAB_SIZE = 120          # model.vocab_size
MEM_SIZE = 8              # model_args.mem_size
V_TOTAL = VOCAB_SIZE + MEM_SIZE   # 128 -> lane friendly
HIDDEN = 128
FFN = 256
N_LAYERS = 2
EPS = 1e-6

# TODO(synk): tokenizer calls, torch.load checkpoint, LoRA adapter
# enable/disable, graph message passing (g_layers) and RoPE have no Pallas
# equivalent here; inputs arrive pre-tokenized and weights are synthetic.


# ------------------------------- fused kernel -------------------------------
def _gofa_fwd_kernel(onehot_ref, table_ref, n1_ref, wq_ref, wk_ref, wv_ref,
                     wo_ref, n2_ref, wg_ref, wu_ref, wd_ref, nf_ref,
                     lmh_ref, out_ref):
    # onehot_ref: (B, S, Vt) bf16      table_ref: (Vt, H) bf16
    # n1/n2_ref:  (L, 1, H) f32        wq/wk/wv/wo_ref: (L, H, H) bf16
    # wg/wu_ref:  (L, H, F) bf16       wd_ref: (L, F, H) bf16
    # nf_ref:     (1, H) f32           lmh_ref: (H, Vt) bf16
    # out_ref:    (B, S, Vt) f32
    B, S, Vt = onehot_ref.shape
    H = table_ref.shape[1]
    inv_sqrt_h = 1.0 / math.sqrt(H)

    # --- embedding: one-hot @ combined table (MXU, f32 accumulate) ---
    onehot = onehot_ref[...].reshape(B * S, Vt)                     # bf16
    x = jnp.dot(onehot, table_ref[...],
                preferred_element_type=jnp.float32)                 # (B*S, H) f32

    # --- causal mask built once, reused by every layer ---
    row = lax.broadcasted_iota(jnp.int32, (S, S), 0)
    col = lax.broadcasted_iota(jnp.int32, (S, S), 1)
    causal = (row >= col)[None, :, :]                               # (1, S, S)

    # --- decoder layers (statically unrolled; weights full-resident) ---
    for l in range(N_LAYERS):
        # RMSNorm (f32 stats) -> bf16 for the projections
        var = jnp.mean(x * x, axis=-1, keepdims=True)
        xn = (x * lax.rsqrt(var + EPS) * n1_ref[l]).astype(jnp.bfloat16)

        q = jnp.dot(xn, wq_ref[l], preferred_element_type=jnp.float32)
        k = jnp.dot(xn, wk_ref[l], preferred_element_type=jnp.float32)
        v = jnp.dot(xn, wv_ref[l], preferred_element_type=jnp.float32)
        q = q * inv_sqrt_h                                          # scale folded into q

        qb = q.reshape(B, S, H).astype(jnp.bfloat16)
        kb = k.reshape(B, S, H).astype(jnp.bfloat16)
        vb = v.reshape(B, S, H).astype(jnp.bfloat16)

        # causal attention (scores/softmax in f32)
        scores = jnp.einsum('bqd,bkd->bqk', qb, kb,
                            preferred_element_type=jnp.float32)     # (B, S, S)
        scores = jnp.where(causal, scores, -1e30)
        m = jnp.max(scores, axis=-1, keepdims=True)
        p = jnp.exp(scores - m)
        denom = jnp.sum(p, axis=-1, keepdims=True)
        p = p * pl.reciprocal(denom, approx=True)

        attn = jnp.einsum('bqk,bkd->bqd', p.astype(jnp.bfloat16), vb,
                          preferred_element_type=jnp.float32)       # (B, S, H)
        attn = attn.reshape(B * S, H).astype(jnp.bfloat16)
        h = x + jnp.dot(attn, wo_ref[l], preferred_element_type=jnp.float32)

        # RMSNorm + SwiGLU MLP
        var2 = jnp.mean(h * h, axis=-1, keepdims=True)
        hn = (h * lax.rsqrt(var2 + EPS) * n2_ref[l]).astype(jnp.bfloat16)

        g = jnp.dot(hn, wg_ref[l], preferred_element_type=jnp.float32)
        u = jnp.dot(hn, wu_ref[l], preferred_element_type=jnp.float32)
        mlp_in = (g * jax.nn.sigmoid(g) * u).astype(jnp.bfloat16)
        x = h + jnp.dot(mlp_in, wd_ref[l], preferred_element_type=jnp.float32)

    # --- final RMSNorm + LM head ---
    var_f = jnp.mean(x * x, axis=-1, keepdims=True)
    xf = (x * lax.rsqrt(var_f + EPS) * nf_ref[...]).astype(jnp.bfloat16)
    logits = jnp.dot(xf, lmh_ref[...], preferred_element_type=jnp.float32)
    out_ref[...] = logits.reshape(B, S, Vt)


# ------------------------------ wrapper -------------------------------------
def _full_spec(shape):
    n = len(shape)
    return pl.BlockSpec(shape, lambda i, _n=n: (0,) * _n)


def gofa_fused_forward(onehot, table, p):
    B, S, Vt = onehot.shape
    H = table.shape[1]
    F = p["wg"].shape[2]
    L = p["wq"].shape[0]
    return pl.pallas_call(
        _gofa_fwd_kernel,
        out_shape=jax.ShapeDtypeStruct((B, S, Vt), jnp.float32),
        grid=(1,),
        in_specs=[_full_spec((B, S, Vt)),   # one-hot ids
                  _full_spec((Vt, H)),      # combined embed table
                  _full_spec((L, 1, H)),    # norm1 (stacked)
                  _full_spec((L, H, H)),    # wq
                  _full_spec((L, H, H)),    # wk
                  _full_spec((L, H, H)),    # wv
                  _full_spec((L, H, H)),    # wo
                  _full_spec((L, 1, H)),    # norm2
                  _full_spec((L, H, F)),    # w_gate
                  _full_spec((L, H, F)),    # w_up
                  _full_spec((L, F, H)),    # w_down
                  _full_spec((1, H)),       # final norm
                  _full_spec((H, Vt))],     # lm_head
        out_specs=pl.BlockSpec((B, S, Vt), lambda i: (0, 0, 0)),
        compiler_params=pltpu.CompilerParams(
            dimension_semantics=("arbitrary",)),
    )(onehot, table, p["norm1"], p["wq"], p["wk"], p["wv"], p["wo"],
      p["norm2"], p["wg"], p["wu"], p["wd"], p["final_norm"], p["lm_head"])


def gofa_helper_forward(params, input_ids, target_ids, target_mask):
    """Mirrors GOFALlamaHelper.forward: returns (logits, target_ids, target_mask)."""
    # Combined table: rows [0, VOCAB_SIZE) = embed_tokens,
    # rows [VOCAB_SIZE, V_TOTAL) = memory_token_embed  -> reproduces the
    # `autoencoder_input_embedding[mem_mask] = memory_token_embed(id - vocab)` override.
    table = jnp.concatenate(
        [params["embed_tokens"], params["memory_token_embed"]], axis=0)
    # TODO(synk): at real LLaMA vocab replace the one-hot matmul with an
    # index gather (scalar-prefetch ids + pl.Element row BlockSpec).
    onehot = jax.nn.one_hot(input_ids, V_TOTAL, dtype=jnp.bfloat16)  # glue
    logits = gofa_fused_forward(onehot, table, params)
    return logits, target_ids, target_mask


# --------------------------- deterministic init -----------------------------
def init_params(key):
    scale = 0.02
    keys = jax.random.split(key, 10)
    ki = iter(range(len(keys)))

    def bf16_normal(k, shape):
        return (scale * jax.random.normal(k, shape, jnp.float32)).astype(jnp.bfloat16)

    params = {
        # matmul weights stored in bf16 (MXU-native); norms stay f32.
        "embed_tokens": bf16_normal(keys[next(ki)], (VOCAB_SIZE, HIDDEN)),
        "memory_token_embed": bf16_normal(keys[next(ki)], (MEM_SIZE, HIDDEN)),
        "final_norm": jnp.ones((1, HIDDEN), jnp.float32),
        "lm_head": bf16_normal(keys[next(ki)], (HIDDEN, V_TOTAL)),
        "norm1": jnp.ones((N_LAYERS, 1, HIDDEN), jnp.float32),
        "norm2": jnp.ones((N_LAYERS, 1, HIDDEN), jnp.float32),
        "wq": bf16_normal(keys[next(ki)], (N_LAYERS, HIDDEN, HIDDEN)),
        "wk": bf16_normal(keys[next(ki)], (N_LAYERS, HIDDEN, HIDDEN)),
        "wv": bf16_normal(keys[next(ki)], (N_LAYERS, HIDDEN, HIDDEN)),
        "wo": bf16_normal(keys[next(ki)], (N_LAYERS, HIDDEN, HIDDEN)),
        "wg": bf16_normal(keys[next(ki)], (N_LAYERS, HIDDEN, FFN)),
        "wu": bf16_normal(keys[next(ki)], (N_LAYERS, HIDDEN, FFN)),
        "wd": bf16_normal(keys[next(ki)], (N_LAYERS, FFN, HIDDEN)),
    }
    return params


# --------------------------------- main --------------------------------------
if __name__ == "__main__":
    key = jax.random.PRNGKey(0)
    k_param, k_text, k_tgt = jax.random.split(key, 3)

    params = init_params(k_param)

    B = 2
    TEXT_LEN, TGT_LEN = 8, 8
    S = TEXT_LEN + MEM_SIZE + TGT_LEN   # 24

    # synthetic "tokenized" sequences: text + mem tokens + target  (as in forward)
    text = jax.random.randint(k_text, (B, TEXT_LEN), 1, VOCAB_SIZE)
    mem_row = jnp.arange(VOCAB_SIZE, VOCAB_SIZE + MEM_SIZE, dtype=jnp.int32)
    mem = jnp.broadcast_to(mem_row[None, :], (B, MEM_SIZE))
    target = jax.random.randint(k_tgt, (B, TGT_LEN), 1, VOCAB_SIZE)
    input_ids = jnp.concatenate([text, mem, target], axis=1).astype(jnp.int32)

    # target_ids = concatenation of per-sample targets; target_mask marks the
    # target span (shifted by one, final position False) as in the module.
    target_ids = target.reshape(-1).astype(jnp.int32)
    target_mask = jnp.concatenate(
        [jnp.zeros((B, TEXT_LEN + MEM_SIZE - 1), bool),
         jnp.ones((B, TGT_LEN), bool),
         jnp.zeros((B, 1), bool)], axis=1)

    logits, t_ids, t_mask = jax.jit(gofa_helper_forward)(
        params, input_ids, target_ids, target_mask)
    jax.block_until_ready(logits)

    assert logits.shape == (B, S, V_TOTAL)
    assert t_ids.shape == (B * TGT_LEN,)
    assert t_mask.shape == (B, S)
    print("KERNEL_OK")
</pallas_src>

<mosaic_0001>
module attributes {stable_mosaic.version = 11 : i64} {
  func.func @_gofa_fwd_kernel(%arg0: i32, %arg1: memref<2x24x128xbf16, #tpu.memory_space<vmem>>, %arg2: memref<128x128xbf16, #tpu.memory_space<vmem>>, %arg3: memref<2x1x128xf32, #tpu.memory_space<vmem>>, %arg4: memref<2x128x128xbf16, #tpu.memory_space<vmem>>, %arg5: memref<2x128x128xbf16, #tpu.memory_space<vmem>>, %arg6: memref<2x128x128xbf16, #tpu.memory_space<vmem>>, %arg7: memref<2x128x128xbf16, #tpu.memory_space<vmem>>, %arg8: memref<2x1x128xf32, #tpu.memory_space<vmem>>, %arg9: memref<2x128x256xbf16, #tpu.memory_space<vmem>>, %arg10: memref<2x128x256xbf16, #tpu.memory_space<vmem>>, %arg11: memref<2x256x128xbf16, #tpu.memory_space<vmem>>, %arg12: memref<1x128xf32, #tpu.memory_space<vmem>>, %arg13: memref<128x128xbf16, #tpu.memory_space<vmem>>, %arg14: memref<2x24x128xf32, #tpu.memory_space<vmem>>) attributes {dimension_semantics = [#tpu.dimension_semantics<arbitrary>], iteration_bounds = array<i64: 1>, scalar_prefetch = 0 : i64, scratch_operands = 0 : i64, tpu.core_type = #tpu.core_type<tc>, window_params = [{pipeline_mode = #tpu.pipeline_mode<synchronous>, transform_indices = @transform_0, window_bounds = array<i64: 2, 24, 128>}, {pipeline_mode = #tpu.pipeline_mode<synchronous>, transform_indices = @transform_1, window_bounds = array<i64: 128, 128>}, {pipeline_mode = #tpu.pipeline_mode<synchronous>, transform_indices = @transform_2, window_bounds = array<i64: 2, 1, 128>}, {pipeline_mode = #tpu.pipeline_mode<synchronous>, transform_indices = @transform_3, window_bounds = array<i64: 2, 128, 128>}, {pipeline_mode = #tpu.pipeline_mode<synchronous>, transform_indices = @transform_4, window_bounds = array<i64: 2, 128, 128>}, {pipeline_mode = #tpu.pipeline_mode<synchronous>, transform_indices = @transform_5, window_bounds = array<i64: 2, 128, 128>}, {pipeline_mode = #tpu.pipeline_mode<synchronous>, transform_indices = @transform_6, window_bounds = array<i64: 2, 128, 128>}, {pipeline_mode = #tpu.pipeline_mode<synchronous>, transform_indices = @transform_7, window_bounds = array<i64: 2, 1, 128>}, {pipeline_mode = #tpu.pipeline_mode<synchronous>, transform_indices = @transform_8, window_bounds = array<i64: 2, 128, 256>}, {pipeline_mode = #tpu.pipeline_mode<synchronous>, transform_indices = @transform_9, window_bounds = array<i64: 2, 128, 256>}, {pipeline_mode = #tpu.pipeline_mode<synchronous>, transform_indices = @transform_10, window_bounds = array<i64: 2, 256, 128>}, {pipeline_mode = #tpu.pipeline_mode<synchronous>, transform_indices = @transform_11, window_bounds = array<i64: 1, 128>}, {pipeline_mode = #tpu.pipeline_mode<synchronous>, transform_indices = @transform_12, window_bounds = array<i64: 128, 128>}, {pipeline_mode = #tpu.pipeline_mode<synchronous>, transform_indices = @transform_13, window_bounds = array<i64: 2, 24, 128>}]} {
    %c0 = arith.constant 0 : index
    %c0_0 = arith.constant 0 : index
    %c0_1 = arith.constant 0 : index
    %0 = vector.load %arg1[%c0, %c0_0, %c0_1] : memref<2x24x128xbf16, #tpu.memory_space<vmem>>, vector<2x24x128xbf16>
    %1 = vector.shape_cast %0 : vector<2x24x128xbf16> to vector<48x128xbf16>
    %c0_2 = arith.constant 0 : index
    %c0_3 = arith.constant 0 : index
    %2 = vector.load %arg2[%c0_2, %c0_3] : memref<128x128xbf16, #tpu.memory_space<vmem>>, vector<128x128xbf16>
    %cst = arith.constant dense<0.000000e+00> : vector<48x128xf32>
    %3 = tpu.matmul %1, %2, %cst {dimension_numbers = #tpu.dot_dimension_numbers<[1], [0], [0], [1], [0, 0, 1, 1], [], []>} : vector<48x128xbf16>, vector<128x128xbf16>, vector<48x128xf32> -> vector<48x128xf32>
    %4 = tpu.iota {dimensions = array<i32: 0>} : vector<24x24xi32>
    %5 = tpu.iota {dimensions = array<i32: 1>} : vector<24x24xi32>
    %6 = arith.cmpi sge, %4, %5 : vector<24x24xi32>
    %7 = vector.shape_cast %6 : vector<24x24xi1> to vector<1x24x24xi1>
    %8 = arith.mulf %3, %3 : vector<48x128xf32>
    %cst_4 = arith.constant dense<0.000000e+00> : vector<48xf32>
    %9 = vector.multi_reduction <add>, %8, %cst_4 [1] : vector<48x128xf32> to vector<48xf32>
    %10 = vector.shape_cast %9 : vector<48xf32> to vector<48x1xf32>
    %cst_5 = arith.constant 1.280000e+02 : f32
    %11 = vector.broadcast %cst_5 : f32 to vector<48x1xf32>
    %12 = arith.divf %10, %11 : vector<48x1xf32>
    %cst_6 = arith.constant 9.99999997E-7 : f32
    %13 = vector.broadcast %cst_6 : f32 to vector<48x1xf32>
    %14 = arith.addf %12, %13 : vector<48x1xf32>
    %15 = math.rsqrt %14 : vector<48x1xf32>
    %16 = vector.broadcast %15 : vector<48x1xf32> to vector<48x128xf32>
    %17 = arith.mulf %3, %16 : vector<48x128xf32>
    %c0_7 = arith.constant 0 : index
    %c0_8 = arith.constant 0 : index
    %c0_9 = arith.constant 0 : index
    %18 = vector.load %arg3[%c0_7, %c0_8, %c0_9] : memref<2x1x128xf32, #tpu.memory_space<vmem>>, vector<1x1x128xf32>
    %19 = vector.shape_cast %18 : vector<1x1x128xf32> to vector<1x128xf32>
    %20 = vector.broadcast %19 : vector<1x128xf32> to vector<48x128xf32>
    %21 = arith.mulf %17, %20 : vector<48x128xf32>
    %22 = arith.truncf %21 : vector<48x128xf32> to vector<48x128xbf16>
    %c0_10 = arith.constant 0 : index
    %c0_11 = arith.constant 0 : index
    %c0_12 = arith.constant 0 : index
    %23 = vector.load %arg4[%c0_10, %c0_11, %c0_12] : memref<2x128x128xbf16, #tpu.memory_space<vmem>>, vector<1x128x128xbf16>
    %24 = vector.shape_cast %23 : vector<1x128x128xbf16> to vector<128x128xbf16>
    %cst_13 = arith.constant dense<0.000000e+00> : vector<48x128xf32>
    %25 = tpu.matmul %22, %24, %cst_13 {dimension_numbers = #tpu.dot_dimension_numbers<[1], [0], [0], [1], [0, 0, 1, 1], [], []>} : vector<48x128xbf16>, vector<128x128xbf16>, vector<48x128xf32> -> vector<48x128xf32>
    %c0_14 = arith.constant 0 : index
    %c0_15 = arith.constant 0 : index
    %c0_16 = arith.constant 0 : index
    %26 = vector.load %arg5[%c0_14, %c0_15, %c0_16] : memref<2x128x128xbf16, #tpu.memory_space<vmem>>, vector<1x128x128xbf16>
    %27 = vector.shape_cast %26 : vector<1x128x128xbf16> to vector<128x128xbf16>
    %cst_17 = arith.constant dense<0.000000e+00> : vector<48x128xf32>
    %28 = tpu.matmul %22, %27, %cst_17 {dimension_numbers = #tpu.dot_dimension_numbers<[1], [0], [0], [1], [0, 0, 1, 1], [], []>} : vector<48x128xbf16>, vector<128x128xbf16>, vector<48x128xf32> -> vector<48x128xf32>
    %c0_18 = arith.constant 0 : index
    %c0_19 = arith.constant 0 : index
    %c0_20 = arith.constant 0 : index
    %29 = vector.load %arg6[%c0_18, %c0_19, %c0_20] : memref<2x128x128xbf16, #tpu.memory_space<vmem>>, vector<1x128x128xbf16>
    %30 = vector.shape_cast %29 : vector<1x128x128xbf16> to vector<128x128xbf16>
    %cst_21 = arith.constant dense<0.000000e+00> : vector<48x128xf32>
    %31 = tpu.matmul %22, %30, %cst_21 {dimension_numbers = #tpu.dot_dimension_numbers<[1], [0], [0], [1], [0, 0, 1, 1], [], []>} : vector<48x128xbf16>, vector<128x128xbf16>, vector<48x128xf32> -> vector<48x128xf32>
    %cst_22 = arith.constant 0.0883883461 : f32
    %32 = vector.broadcast %cst_22 : f32 to vector<48x128xf32>
    %33 = arith.mulf %25, %32 : vector<48x128xf32>
    %34 = vector.shape_cast %33 : vector<48x128xf32> to vector<2x24x128xf32>
    %35 = arith.truncf %34 : vector<2x24x128xf32> to vector<2x24x128xbf16>
    %36 = vector.shape_cast %28 : vector<48x128xf32> to vector<2x24x128xf32>
    %37 = arith.truncf %36 : vector<2x24x128xf32> to vector<2x24x128xbf16>
    %38 = vector.shape_cast %31 : vector<48x128xf32> to vector<2x24x128xf32>
    %39 = arith.truncf %38 : vector<2x24x128xf32> to vector<2x24x128xbf16>
    "tpu.trace_start"() <{level = 10 : i32, message = "bqd,bkd->bqk"}> : () -> ()
    %cst_23 = arith.constant dense<0.000000e+00> : vector<2x24x24xf32>
    %40 = tpu.matmul %35, %37, %cst_23 {dimension_numbers = #tpu.dot_dimension_numbers<[2], [2], [1], [1], [0, 0, 0, 1, 1, 1], [0], [0]>} : vector<2x24x128xbf16>, vector<2x24x128xbf16>, vector<2x24x24xf32> -> vector<2x24x24xf32>
    %cst_24 = arith.constant -1.000000e+30 : f32
    "tpu.trace_stop"() : () -> ()
    %41 = vector.shape_cast %7 : vector<1x24x24xi1> to vector<1x24x24xi1>
    %42 = vector.broadcast %41 : vector<1x24x24xi1> to vector<2x24x24xi1>
    %43 = vector.broadcast %cst_24 : f32 to vector<2x24x24xf32>
    %44 = arith.select %42, %40, %43 : vector<2x24x24xi1>, vector<2x24x24xf32>
    %cst_25 = arith.constant dense<0xFF800000> : vector<2x24xf32>
    %45 = vector.multi_reduction <maximumf>, %44, %cst_25 [2] : vector<2x24x24xf32> to vector<2x24xf32>
    %46 = vector.shape_cast %45 : vector<2x24xf32> to vector<2x24x1xf32>
    %47 = vector.broadcast %46 : vector<2x24x1xf32> to vector<2x24x24xf32>
    %48 = arith.subf %44, %47 : vector<2x24x24xf32>
    %49 = math.exp %48 : vector<2x24x24xf32>
    %cst_26 = arith.constant dense<0.000000e+00> : vector<2x24xf32>
    %50 = vector.multi_reduction <add>, %49, %cst_26 [2] : vector<2x24x24xf32> to vector<2x24xf32>
    %51 = vector.shape_cast %50 : vector<2x24xf32> to vector<2x24x1xf32>
    %52 = tpu.reciprocal %51 {approx = true} : vector<2x24x1xf32> -> vector<2x24x1xf32>
    %53 = vector.broadcast %52 : vector<2x24x1xf32> to vector<2x24x24xf32>
    %54 = arith.mulf %49, %53 : vector<2x24x24xf32>
    %55 = arith.truncf %54 : vector<2x24x24xf32> to vector<2x24x24xbf16>
    "tpu.trace_start"() <{level = 10 : i32, message = "bqk,bkd->bqd"}> : () -> ()
    %cst_27 = arith.constant dense<0.000000e+00> : vector<2x24x128xf32>
    %56 = tpu.matmul %55, %39, %cst_27 {dimension_numbers = #tpu.dot_dimension_numbers<[2], [1], [1], [2], [0, 0, 0, 1, 1, 2], [0], [0]>} : vector<2x24x24xbf16>, vector<2x24x128xbf16>, vector<2x24x128xf32> -> vector<2x24x128xf32>
    "tpu.trace_stop"() : () -> ()
    %57 = vector.shape_cast %56 : vector<2x24x128xf32> to vector<48x128xf32>
    %58 = arith.truncf %57 : vector<48x128xf32> to vector<48x128xbf16>
    %c0_28 = arith.constant 0 : index
    %c0_29 = arith.constant 0 : index
    %c0_30 = arith.constant 0 : index
    %59 = vector.load %arg7[%c0_28, %c0_29, %c0_30] : memref<2x128x128xbf16, #tpu.memory_space<vmem>>, vector<1x128x128xbf16>
    %60 = vector.shape_cast %59 : vector<1x128x128xbf16> to vector<128x128xbf16>
    %cst_31 = arith.constant dense<0.000000e+00> : vector<48x128xf32>
    %61 = tpu.matmul %58, %60, %cst_31 {dimension_numbers = #tpu.dot_dimension_numbers<[1], [0], [0], [1], [0, 0, 1, 1], [], []>} : vector<48x128xbf16>, vector<128x128xbf16>, vector<48x128xf32> -> vector<48x128xf32>
    %62 = arith.addf %3, %61 : vector<48x128xf32>
    %63 = arith.mulf %62, %62 : vector<48x128xf32>
    %cst_32 = arith.constant dense<0.000000e+00> : vector<48xf32>
    %64 = vector.multi_reduction <add>, %63, %cst_32 [1] : vector<48x128xf32> to vector<48xf32>
    %65 = vector.shape_cast %64 : vector<48xf32> to vector<48x1xf32>
    %cst_33 = arith.constant 1.280000e+02 : f32
    %66 = vector.broadcast %cst_33 : f32 to vector<48x1xf32>
    %67 = arith.divf %65, %66 : vector<48x1xf32>
    %cst_34 = arith.constant 9.99999997E-7 : f32
    %68 = vector.broadcast %cst_34 : f32 to vector<48x1xf32>
    %69 = arith.addf %67, %68 : vector<48x1xf32>
    %70 = math.rsqrt %69 : vector<48x1xf32>
    %71 = vector.broadcast %70 : vector<48x1xf32> to vector<48x128xf32>
    %72 = arith.mulf %62, %71 : vector<48x128xf32>
    %c0_35 = arith.constant 0 : index
    %c0_36 = arith.constant 0 : index
    %c0_37 = arith.constant 0 : index
    %73 = vector.load %arg8[%c0_35, %c0_36, %c0_37] : memref<2x1x128xf32, #tpu.memory_space<vmem>>, vector<1x1x128xf32>
    %74 = vector.shape_cast %73 : vector<1x1x128xf32> to vector<1x128xf32>
    %75 = vector.broadcast %74 : vector<1x128xf32> to vector<48x128xf32>
    %76 = arith.mulf %72, %75 : vector<48x128xf32>
    %77 = arith.truncf %76 : vector<48x128xf32> to vector<48x128xbf16>
    %c0_38 = arith.constant 0 : index
    %c0_39 = arith.constant 0 : index
    %c0_40 = arith.constant 0 : index
    %78 = vector.load %arg9[%c0_38, %c0_39, %c0_40] : memref<2x128x256xbf16, #tpu.memory_space<vmem>>, vector<1x128x256xbf16>
    %79 = vector.shape_cast %78 : vector<1x128x256xbf16> to vector<128x256xbf16>
    %cst_41 = arith.constant dense<0.000000e+00> : vector<48x256xf32>
    %80 = tpu.matmul %77, %79, %cst_41 {dimension_numbers = #tpu.dot_dimension_numbers<[1], [0], [0], [1], [0, 0, 1, 1], [], []>} : vector<48x128xbf16>, vector<128x256xbf16>, vector<48x256xf32> -> vector<48x256xf32>
    %c0_42 = arith.constant 0 : index
    %c0_43 = arith.constant 0 : index
    %c0_44 = arith.constant 0 : index
    %81 = vector.load %arg10[%c0_42, %c0_43, %c0_44] : memref<2x128x256xbf16, #tpu.memory_space<vmem>>, vector<1x128x256xbf16>
    %82 = vector.shape_cast %81 : vector<1x128x256xbf16> to vector<128x256xbf16>
    %cst_45 = arith.constant dense<0.000000e+00> : vector<48x256xf32>
    %83 = tpu.matmul %77, %82, %cst_45 {dimension_numbers = #tpu.dot_dimension_numbers<[1], [0], [0], [1], [0, 0, 1, 1], [], []>} : vector<48x128xbf16>, vector<128x256xbf16>, vector<48x256xf32> -> vector<48x256xf32>
    %84 = arith.negf %80 : vector<48x256xf32>
    %85 = math.exp %84 : vector<48x256xf32>
    %cst_46 = arith.constant 1.000000e+00 : f32
    %86 = vector.broadcast %cst_46 : f32 to vector<48x256xf32>
    %87 = arith.addf %86, %85 : vector<48x256xf32>
    %88 = arith.divf %86, %87 : vector<48x256xf32>
    %89 = arith.mulf %80, %88 : vector<48x256xf32>
    %90 = arith.mulf %89, %83 : vector<48x256xf32>
    %91 = arith.truncf %90 : vector<48x256xf32> to vector<48x256xbf16>
    %c0_47 = arith.constant 0 : index
    %c0_48 = arith.constant 0 : index
    %c0_49 = arith.constant 0 : index
    %92 = vector.load %arg11[%c0_47, %c0_48, %c0_49] : memref<2x256x128xbf16, #tpu.memory_space<vmem>>, vector<1x256x128xbf16>
    %93 = vector.shape_cast %92 : vector<1x256x128xbf16> to vector<256x128xbf16>
    %cst_50 = arith.constant dense<0.000000e+00> : vector<48x128xf32>
    %94 = tpu.matmul %91, %93, %cst_50 {dimension_numbers = #tpu.dot_dimension_numbers<[1], [0], [0], [1], [0, 0, 1, 1], [], []>} : vector<48x256xbf16>, vector<256x128xbf16>, vector<48x128xf32> -> vector<48x128xf32>
    %95 = arith.addf %62, %94 : vector<48x128xf32>
    %96 = arith.mulf %95, %95 : vector<48x128xf32>
    %cst_51 = arith.constant dense<0.000000e+00> : vector<48xf32>
    %97 = vector.multi_reduction <add>, %96, %cst_51 [1] : vector<48x128xf32> to vector<48xf32>
    %98 = vector.shape_cast %97 : vector<48xf32> to vector<48x1xf32>
    %cst_52 = arith.constant 1.280000e+02 : f32
    %99 = vector.broadcast %cst_52 : f32 to vector<48x1xf32>
    %100 = arith.divf %98, %99 : vector<48x1xf32>
    %cst_53 = arith.constant 9.99999997E-7 : f32
    %101 = vector.broadcast %cst_53 : f32 to vector<48x1xf32>
    %102 = arith.addf %100, %101 : vector<48x1xf32>
    %103 = math.rsqrt %102 : vector<48x1xf32>
    %104 = vector.broadcast %103 : vector<48x1xf32> to vector<48x128xf32>
    %105 = arith.mulf %95, %104 : vector<48x128xf32>
    %c1 = arith.constant 1 : index
    %c0_54 = arith.constant 0 : index
    %c0_55 = arith.constant 0 : index
    %106 = vector.load %arg3[%c1, %c0_54, %c0_55] : memref<2x1x128xf32, #tpu.memory_space<vmem>>, vector<1x1x128xf32>
    %107 = vector.shape_cast %106 : vector<1x1x128xf32> to vector<1x128xf32>
    %108 = vector.broadcast %107 : vector<1x128xf32> to vector<48x128xf32>
    %109 = arith.mulf %105, %108 : vector<48x128xf32>
    %110 = arith.truncf %109 : vector<48x128xf32> to vector<48x128xbf16>
    %c1_56 = arith.constant 1 : index
    %c0_57 = arith.constant 0 : index
    %c0_58 = arith.constant 0 : index
    %111 = vector.load %arg4[%c1_56, %c0_57, %c0_58] : memref<2x128x128xbf16, #tpu.memory_space<vmem>>, vector<1x128x128xbf16>
    %112 = vector.shape_cast %111 : vector<1x128x128xbf16> to vector<128x128xbf16>
    %cst_59 = arith.constant dense<0.000000e+00> : vector<48x128xf32>
    %113 = tpu.matmul %110, %112, %cst_59 {dimension_numbers = #tpu.dot_dimension_numbers<[1], [0], [0], [1], [0, 0, 1, 1], [], []>} : vector<48x128xbf16>, vector<128x128xbf16>, vector<48x128xf32> -> vector<48x128xf32>
    %c1_60 = arith.constant 1 : index
    %c0_61 = arith.constant 0 : index
    %c0_62 = arith.constant 0 : index
    %114 = vector.load %arg5[%c1_60, %c0_61, %c0_62] : memref<2x128x128xbf16, #tpu.memory_space<vmem>>, vector<1x128x128xbf16>
    %115 = vector.shape_cast %114 : vector<1x128x128xbf16> to vector<128x128xbf16>
    %cst_63 = arith.constant dense<0.000000e+00> : vector<48x128xf32>
    %116 = tpu.matmul %110, %115, %cst_63 {dimension_numbers = #tpu.dot_dimension_numbers<[1], [0], [0], [1], [0, 0, 1, 1], [], []>} : vector<48x128xbf16>, vector<128x128xbf16>, vector<48x128xf32> -> vector<48x128xf32>
    %c1_64 = arith.constant 1 : index
    %c0_65 = arith.constant 0 : index
    %c0_66 = arith.constant 0 : index
    %117 = vector.load %arg6[%c1_64, %c0_65, %c0_66] : memref<2x128x128xbf16, #tpu.memory_space<vmem>>, vector<1x128x128xbf16>
    %118 = vector.shape_cast %117 : vector<1x128x128xbf16> to vector<128x128xbf16>
    %cst_67 = arith.constant dense<0.000000e+00> : vector<48x128xf32>
    %119 = tpu.matmul %110, %118, %cst_67 {dimension_numbers = #tpu.dot_dimension_numbers<[1], [0], [0], [1], [0, 0, 1, 1], [], []>} : vector<48x128xbf16>, vector<128x128xbf16>, vector<48x128xf32> -> vector<48x128xf32>
    %cst_68 = arith.constant 0.0883883461 : f32
    %120 = vector.broadcast %cst_68 : f32 to vector<48x128xf32>
    %121 = arith.mulf %113, %120 : vector<48x128xf32>
    %122 = vector.shape_cast %121 : vector<48x128xf32> to vector<2x24x128xf32>
    %123 = arith.truncf %122 : vector<2x24x128xf32> to vector<2x24x128xbf16>
    %124 = vector.shape_cast %116 : vector<48x128xf32> to vector<2x24x128xf32>
    %125 = arith.truncf %124 : vector<2x24x128xf32> to vector<2x24x128xbf16>
    %126 = vector.shape_cast %119 : vector<48x128xf32> to vector<2x24x128xf32>
    %127 = arith.truncf %126 : vector<2x24x128xf32> to vector<2x24x128xbf16>
    "tpu.trace_start"() <{level = 10 : i32, message = "bqd,bkd->bqk"}> : () -> ()
    %cst_69 = arith.constant dense<0.000000e+00> : vector<2x24x24xf32>
    %128 = tpu.matmul %123, %125, %cst_69 {dimension_numbers = #tpu.dot_dimension_numbers<[2], [2], [1], [1], [0, 0, 0, 1, 1, 1], [0], [0]>} : vector<2x24x128xbf16>, vector<2x24x128xbf16>, vector<2x24x24xf32> -> vector<2x24x24xf32>
    %cst_70 = arith.constant -1.000000e+30 : f32
    "tpu.trace_stop"() : () -> ()
    %129 = vector.shape_cast %7 : vector<1x24x24xi1> to vector<1x24x24xi1>
    %130 = vector.broadcast %129 : vector<1x24x24xi1> to vector<2x24x24xi1>
    %131 = vector.broadcast %cst_70 : f32 to vector<2x24x24xf32>
    %132 = arith.select %130, %128, %131 : vector<2x24x24xi1>, vector<2x24x24xf32>
    %cst_71 = arith.constant dense<0xFF800000> : vector<2x24xf32>
    %133 = vector.multi_reduction <maximumf>, %132, %cst_71 [2] : vector<2x24x24xf32> to vector<2x24xf32>
    %134 = vector.shape_cast %133 : vector<2x24xf32> to vector<2x24x1xf32>
    %135 = vector.broadcast %134 : vector<2x24x1xf32> to vector<2x24x24xf32>
    %136 = arith.subf %132, %135 : vector<2x24x24xf32>
    %137 = math.exp %136 : vector<2x24x24xf32>
    %cst_72 = arith.constant dense<0.000000e+00> : vector<2x24xf32>
    %138 = vector.multi_reduction <add>, %137, %cst_72 [2] : vector<2x24x24xf32> to vector<2x24xf32>
    %139 = vector.shape_cast %138 : vector<2x24xf32> to vector<2x24x1xf32>
    %140 = tpu.reciprocal %139 {approx = true} : vector<2x24x1xf32> -> vector<2x24x1xf32>
    %141 = vector.broadcast %140 : vector<2x24x1xf32> to vector<2x24x24xf32>
    %142 = arith.mulf %137, %141 : vector<2x24x24xf32>
    %143 = arith.truncf %142 : vector<2x24x24xf32> to vector<2x24x24xbf16>
    "tpu.trace_start"() <{level = 10 : i32, message = "bqk,bkd->bqd"}> : () -> ()
    %cst_73 = arith.constant dense<0.000000e+00> : vector<2x24x128xf32>
    %144 = tpu.matmul %143, %127, %cst_73 {dimension_numbers = #tpu.dot_dimension_numbers<[2], [1], [1], [2], [0, 0, 0, 1, 1, 2], [0], [0]>} : vector<2x24x24xbf16>, vector<2x24x128xbf16>, vector<2x24x128xf32> -> vector<2x24x128xf32>
    "tpu.trace_stop"() : () -> ()
    %145 = vector.shape_cast %144 : vector<2x24x128xf32> to vector<48x128xf32>
    %146 = arith.truncf %145 : vector<48x128xf32> to vector<48x128xbf16>
    %c1_74 = arith.constant 1 : index
    %c0_75 = arith.constant 0 : index
    %c0_76 = arith.constant 0 : index
    %147 = vector.load %arg7[%c1_74, %c0_75, %c0_76] : memref<2x128x128xbf16, #tpu.memory_space<vmem>>, vector<1x128x128xbf16>
    %148 = vector.shape_cast %147 : vector<1x128x128xbf16> to vector<128x128xbf16>
    %cst_77 = arith.constant dense<0.000000e+00> : vector<48x128xf32>
    %149 = tpu.matmul %146, %148, %cst_77 {dimension_numbers = #tpu.dot_dimension_numbers<[1], [0], [0], [1], [0, 0, 1, 1], [], []>} : vector<48x128xbf16>, vector<128x128xbf16>, vector<48x128xf32> -> vector<48x128xf32>
    %150 = arith.addf %95, %149 : vector<48x128xf32>
    %151 = arith.mulf %150, %150 : vector<48x128xf32>
    %cst_78 = arith.constant dense<0.000000e+00> : vector<48xf32>
    %152 = vector.multi_reduction <add>, %151, %cst_78 [1] : vector<48x128xf32> to vector<48xf32>
    %153 = vector.shape_cast %152 : vector<48xf32> to vector<48x1xf32>
    %cst_79 = arith.constant 1.280000e+02 : f32
    %154 = vector.broadcast %cst_79 : f32 to vector<48x1xf32>
    %155 = arith.divf %153, %154 : vector<48x1xf32>
    %cst_80 = arith.constant 9.99999997E-7 : f32
    %156 = vector.broadcast %cst_80 : f32 to vector<48x1xf32>
    %157 = arith.addf %155, %156 : vector<48x1xf32>
    %158 = math.rsqrt %157 : vector<48x1xf32>
    %159 = vector.broadcast %158 : vector<48x1xf32> to vector<48x128xf32>
    %160 = arith.mulf %150, %159 : vector<48x128xf32>
    %c1_81 = arith.constant 1 : index
    %c0_82 = arith.constant 0 : index
    %c0_83 = arith.constant 0 : index
    %161 = vector.load %arg8[%c1_81, %c0_82, %c0_83] : memref<2x1x128xf32, #tpu.memory_space<vmem>>, vector<1x1x128xf32>
    %162 = vector.shape_cast %161 : vector<1x1x128xf32> to vector<1x128xf32>
    %163 = vector.broadcast %162 : vector<1x128xf32> to vector<48x128xf32>
    %164 = arith.mulf %160, %163 : vector<48x128xf32>
    %165 = arith.truncf %164 : vector<48x128xf32> to vector<48x128xbf16>
    %c1_84 = arith.constant 1 : index
    %c0_85 = arith.constant 0 : index
    %c0_86 = arith.constant 0 : index
    %166 = vector.load %arg9[%c1_84, %c0_85, %c0_86] : memref<2x128x256xbf16, #tpu.memory_space<vmem>>, vector<1x128x256xbf16>
    %167 = vector.shape_cast %166 : vector<1x128x256xbf16> to vector<128x256xbf16>
    %cst_87 = arith.constant dense<0.000000e+00> : vector<48x256xf32>
    %168 = tpu.matmul %165, %167, %cst_87 {dimension_numbers = #tpu.dot_dimension_numbers<[1], [0], [0], [1], [0, 0, 1, 1], [], []>} : vector<48x128xbf16>, vector<128x256xbf16>, vector<48x256xf32> -> vector<48x256xf32>
    %c1_88 = arith.constant 1 : index
    %c0_89 = arith.constant 0 : index
    %c0_90 = arith.constant 0 : index
    %169 = vector.load %arg10[%c1_88, %c0_89, %c0_90] : memref<2x128x256xbf16, #tpu.memory_space<vmem>>, vector<1x128x256xbf16>
    %170 = vector.shape_cast %169 : vector<1x128x256xbf16> to vector<128x256xbf16>
    %cst_91 = arith.constant dense<0.000000e+00> : vector<48x256xf32>
    %171 = tpu.matmul %165, %170, %cst_91 {dimension_numbers = #tpu.dot_dimension_numbers<[1], [0], [0], [1], [0, 0, 1, 1], [], []>} : vector<48x128xbf16>, vector<128x256xbf16>, vector<48x256xf32> -> vector<48x256xf32>
    %172 = arith.negf %168 : vector<48x256xf32>
    %173 = math.exp %172 : vector<48x256xf32>
    %cst_92 = arith.constant 1.000000e+00 : f32
    %174 = vector.broadcast %cst_92 : f32 to vector<48x256xf32>
    %175 = arith.addf %174, %173 : vector<48x256xf32>
    %176 = arith.divf %174, %175 : vector<48x256xf32>
    %177 = arith.mulf %168, %176 : vector<48x256xf32>
    %178 = arith.mulf %177, %171 : vector<48x256xf32>
    %179 = arith.truncf %178 : vector<48x256xf32> to vector<48x256xbf16>
    %c1_93 = arith.constant 1 : index
    %c0_94 = arith.constant 0 : index
    %c0_95 = arith.constant 0 : index
    %180 = vector.load %arg11[%c1_93, %c0_94, %c0_95] : memref<2x256x128xbf16, #tpu.memory_space<vmem>>, vector<1x256x128xbf16>
    %181 = vector.shape_cast %180 : vector<1x256x128xbf16> to vector<256x128xbf16>
    %cst_96 = arith.constant dense<0.000000e+00> : vector<48x128xf32>
    %182 = tpu.matmul %179, %181, %cst_96 {dimension_numbers = #tpu.dot_dimension_numbers<[1], [0], [0], [1], [0, 0, 1, 1], [], []>} : vector<48x256xbf16>, vector<256x128xbf16>, vector<48x128xf32> -> vector<48x128xf32>
    %183 = arith.addf %150, %182 : vector<48x128xf32>
    %184 = arith.mulf %183, %183 : vector<48x128xf32>
    %cst_97 = arith.constant dense<0.000000e+00> : vector<48xf32>
    %185 = vector.multi_reduction <add>, %184, %cst_97 [1] : vector<48x128xf32> to vector<48xf32>
    %186 = vector.shape_cast %185 : vector<48xf32> to vector<48x1xf32>
    %cst_98 = arith.constant 1.280000e+02 : f32
    %187 = vector.broadcast %cst_98 : f32 to vector<48x1xf32>
    %188 = arith.divf %186, %187 : vector<48x1xf32>
    %cst_99 = arith.constant 9.99999997E-7 : f32
    %189 = vector.broadcast %cst_99 : f32 to vector<48x1xf32>
    %190 = arith.addf %188, %189 : vector<48x1xf32>
    %191 = math.rsqrt %190 : vector<48x1xf32>
    %192 = vector.broadcast %191 : vector<48x1xf32> to vector<48x128xf32>
    %193 = arith.mulf %183, %192 : vector<48x128xf32>
    %c0_100 = arith.constant 0 : index
    %c0_101 = arith.constant 0 : index
    %194 = vector.load %arg12[%c0_100, %c0_101] : memref<1x128xf32, #tpu.memory_space<vmem>>, vector<1x128xf32>
    %195 = vector.broadcast %194 : vector<1x128xf32> to vector<48x128xf32>
    %196 = arith.mulf %193, %195 : vector<48x128xf32>
    %197 = arith.truncf %196 : vector<48x128xf32> to vector<48x128xbf16>
    %c0_102 = arith.constant 0 : index
    %c0_103 = arith.constant 0 : index
    %198 = vector.load %arg13[%c0_102, %c0_103] : memref<128x128xbf16, #tpu.memory_space<vmem>>, vector<128x128xbf16>
    %cst_104 = arith.constant dense<0.000000e+00> : vector<48x128xf32>
    %199 = tpu.matmul %197, %198, %cst_104 {dimension_numbers = #tpu.dot_dimension_numbers<[1], [0], [0], [1], [0, 0, 1, 1], [], []>} : vector<48x128xbf16>, vector<128x128xbf16>, vector<48x128xf32> -> vector<48x128xf32>
    %200 = vector.shape_cast %199 : vector<48x128xf32> to vector<2x24x128xf32>
    %c0_105 = arith.constant 0 : index
    %c0_106 = arith.constant 0 : index
    %c0_107 = arith.constant 0 : index
    %201 = vector.load %arg14[%c0_105, %c0_106, %c0_107] : memref<2x24x128xf32, #tpu.memory_space<vmem>>, vector<2x24x128xf32>
    tpu.vector_store %arg14[%c0_105, %c0_106, %c0_107], %200 {strides = array<i32>} : memref<2x24x128xf32, #tpu.memory_space<vmem>>, vector<2x24x128xf32>,
    return
  }
  func.func @transform_0(%arg0: i32) -> (i32, i32, i32) {
    %c0_i32 = arith.constant 0 : i32
    %c0_i32_0 = arith.constant 0 : i32
    %c0_i32_1 = arith.constant 0 : i32
    %c0_i32_2 = arith.constant 0 : i32
    return %c0_i32, %c0_i32_0, %c0_i32_1 : i32, i32, i32
  }
  func.func @transform_1(%arg0: i32) -> (i32, i32) {
    %c0_i32 = arith.constant 0 : i32
    %c0_i32_0 = arith.constant 0 : i32
    %c0_i32_1 = arith.constant 0 : i32
    return %c0_i32, %c0_i32_0 : i32, i32
  }
  func.func @transform_2(%arg0: i32) -> (i32, i32, i32) {
    %c0_i32 = arith.constant 0 : i32
    %c0_i32_0 = arith.constant 0 : i32
    %c0_i32_1 = arith.constant 0 : i32
    %c0_i32_2 = arith.constant 0 : i32
    return %c0_i32, %c0_i32_0, %c0_i32_1 : i32, i32, i32
  }
  func.func @transform_3(%arg0: i32) -> (i32, i32, i32) {
    %c0_i32 = arith.constant 0 : i32
    %c0_i32_0 = arith.constant 0 : i32
    %c0_i32_1 = arith.constant 0 : i32
    %c0_i32_2 = arith.constant 0 : i32
    return %c0_i32, %c0_i32_0, %c0_i32_1 : i32, i32, i32
  }
  func.func @transform_4(%arg0: i32) -> (i32, i32, i32) {
    %c0_i32 = arith.constant 0 : i32
    %c0_i32_0 = arith.constant 0 : i32
    %c0_i32_1 = arith.constant 0 : i32
    %c0_i32_2 = arith.constant 0 : i32
    return %c0_i32, %c0_i32_0, %c0_i32_1 : i32, i32, i32
  }
  func.func @transform_5(%arg0: i32) -> (i32, i32, i32) {
    %c0_i32 = arith.constant 0 : i32
    %c0_i32_0 = arith.constant 0 : i32
    %c0_i32_1 = arith.constant 0 : i32
    %c0_i32_2 = arith.constant 0 : i32
    return %c0_i32, %c0_i32_0, %c0_i32_1 : i32, i32, i32
  }
  func.func @transform_6(%arg0: i32) -> (i32, i32, i32) {
    %c0_i32 = arith.constant 0 : i32
    %c0_i32_0 = arith.constant 0 : i32
    %c0_i32_1 = arith.constant 0 : i32
    %c0_i32_2 = arith.constant 0 : i32
    return %c0_i32, %c0_i32_0, %c0_i32_1 : i32, i32, i32
  }
  func.func @transform_7(%arg0: i32) -> (i32, i32, i32) {
    %c0_i32 = arith.constant 0 : i32
    %c0_i32_0 = arith.constant 0 : i32
    %c0_i32_1 = arith.constant 0 : i32
    %c0_i32_2 = arith.constant 0 : i32
    return %c0_i32, %c0_i32_0, %c0_i32_1 : i32, i32, i32
  }
  func.func @transform_8(%arg0: i32) -> (i32, i32, i32) {
    %c0_i32 = arith.constant 0 : i32
    %c0_i32_0 = arith.constant 0 : i32
    %c0_i32_1 = arith.constant 0 : i32
    %c0_i32_2 = arith.constant 0 : i32
    return %c0_i32, %c0_i32_0, %c0_i32_1 : i32, i32, i32
  }
  func.func @transform_9(%arg0: i32) -> (i32, i32, i32) {
    %c0_i32 = arith.constant 0 : i32
    %c0_i32_0 = arith.constant 0 : i32
    %c0_i32_1 = arith.constant 0 : i32
    %c0_i32_2 = arith.constant 0 : i32
    return %c0_i32, %c0_i32_0, %c0_i32_1 : i32, i32, i32
  }
  func.func @transform_10(%arg0: i32) -> (i32, i32, i32) {
    %c0_i32 = arith.constant 0 : i32
    %c0_i32_0 = arith.constant 0 : i32
    %c0_i32_1 = arith.constant 0 : i32
    %c0_i32_2 = arith.constant 0 : i32
    return %c0_i32, %c0_i32_0, %c0_i32_1 : i32, i32, i32
  }
  func.func @transform_11(%arg0: i32) -> (i32, i32) {
    %c0_i32 = arith.constant 0 : i32
    %c0_i32_0 = arith.constant 0 : i32
    %c0_i32_1 = arith.constant 0 : i32
    return %c0_i32, %c0_i32_0 : i32, i32
  }
  func.func @transform_12(%arg0: i32) -> (i32, i32) {
    %c0_i32 = arith.constant 0 : i32
    %c0_i32_0 = arith.constant 0 : i32
    %c0_i32_1 = arith.constant 0 : i32
    return %c0_i32, %c0_i32_0 : i32, i32
  }
  func.func @transform_13(%arg0: i32) -> (i32, i32, i32) {
    %c0_i32 = arith.constant 0 : i32
    %c0_i32_0 = arith.constant 0 : i32
    %c0_i32_1 = arith.constant 0 : i32
    %c0_i32_2 = arith.constant 0 : i32
    return %c0_i32, %c0_i32_0, %c0_i32_1 : i32, i32, i32
  }
}

</mosaic_0001>

<llo_original>
// kernel: gofa_helper_forward.1
$region0: #{gofa_helper_forward.1}
  #allocation0 [shape = 'u32[]', space=smem, size = 0x4, offset = 0x4, fixed_abs, tag = 'smem constant byte address 0x4 - core index']
  #allocation1 [shape = 'u32[144,128]{1,0:T(1,128)}', space=vmem, size = 0x12000, scoped, tag = 'internal scratch']
  %s0 = inlined_call_operand.vmem [shape: bf16[2,24,128], index: 0, kind: input, shape index: {}]
  %s1 = inlined_call_operand.vmem [shape: bf16[128,128], index: 1, kind: input, shape index: {}]
  %s2 = inlined_call_operand.vmem [shape: f32[2,1,128], index: 2, kind: input, shape index: {}]
  %s3 = inlined_call_operand.vmem [shape: bf16[2,128,128], index: 3, kind: input, shape index: {}]
  %s4 = inlined_call_operand.hbm [shape: bf16[2,128,128], index: 4, kind: input, shape index: {}]
  %s5 = inlined_call_operand.hbm [shape: bf16[2,128,128], index: 5, kind: input, shape index: {}]
  %s6 = inlined_call_operand.hbm [shape: bf16[2,128,128], index: 6, kind: input, shape index: {}]
  %s7 = inlined_call_operand.hbm [shape: f32[2,1,128], index: 7, kind: input, shape index: {}]
  %s8 = inlined_call_operand.hbm [shape: bf16[2,128,256], index: 8, kind: input, shape index: {}]
  %s9 = inlined_call_operand.hbm [shape: bf16[2,128,256], index: 9, kind: input, shape index: {}]
  %s10 = inlined_call_operand.hbm [shape: bf16[2,256,128], index: 10, kind: input, shape index: {}]
  %s11 = inlined_call_operand.vmem [shape: f32[1,128], index: 11, kind: input, shape index: {}]
  %s12 = inlined_call_operand.vmem [shape: bf16[128,128], index: 12, kind: input, shape index: {}]
  %s13 = inlined_call_operand.hbm [shape: f32[2,24,128], index: 13, kind: output, shape index: {}]
  %s14 = sld [smem:[#allocation0]]
  $region90: #{gofa_helper_forward.1} parent=0
    _
  %s16 = ssub.s32 1, %s14
  %s17 = scalar_select 0, %s16, %s14
  $region1: #{gofa_helper_forward.1} parent=0
    #allocation2 [shape = 'u8[65536]{0}', space=vmem, size = 0x10000, scoped, tag = 'input window, operand 4, single buffered']
    #allocation3 [shape = 's32[1]{0}', space=sflag, size = 0x4, scoped, tag = 'scoped memory for gofa_helper_forward.1']
    #allocation4 [shape = 's32[1]{0}', space=sflag, size = 0x4, scoped, tag = 'scoped memory for gofa_helper_forward.1']
    #allocation5 [shape = 'u8[65536]{0}', space=vmem, size = 0x10000, scoped, tag = 'input window, operand 5, single buffered']
    #allocation6 [shape = 's32[1]{0}', space=sflag, size = 0x4, scoped, tag = 'scoped memory for gofa_helper_forward.1']
    #allocation7 [shape = 'u8[65536]{0}', space=vmem, size = 0x10000, scoped, tag = 'input window, operand 6, single buffered']
    #allocation8 [shape = 'u8[1024]{0}', space=vmem, size = 0x400, scoped, tag = 'input window, operand 7, single buffered']
    #allocation9 [shape = 's32[1]{0}', space=sflag, size = 0x4, scoped, tag = 'scoped memory for gofa_helper_forward.1']
    #allocation10 [shape = 'u8[131072]{0}', space=vmem, size = 0x20000, scoped, tag = 'input window, operand 8, single buffered']
    #allocation11 [shape = 'u8[131072]{0}', space=vmem, size = 0x20000, scoped, tag = 'input window, operand 9, single buffered']
    #allocation12 [shape = 's32[1]{0}', space=sflag, size = 0x4, scoped, tag = 'scoped memory for gofa_helper_forward.1']
    #allocation13 [shape = 'u8[131072]{0}', space=vmem, size = 0x20000, scoped, tag = 'input window, operand 10, single buffered']
    #allocation14 [shape = 'u8[24576]{0}', space=vmem, size = 0x6000, scoped, tag = 'output window, operand 0, single buffered']
    %18 = vsyncpa [#allocation3], 0
    %19 = vsyncpa [#allocation6], 0
    %20 = vsyncpa [#allocation9], 0
    %21 = vsyncpa [#allocation12], 0
    %22 = vsyncpa [#allocation4], 0
    // Predicated region
    $region2: #{gofa_helper_forward.1} parent=1 // pred_check
      _
    $region3: #{gofa_helper_forward.1} parent=1 // pred_check_branch
      %24 = sbr.rel (0) target = $region5
    $region4: #{gofa_helper_forward.1} parent=1 // pred_region
      _
    $region5: #{gofa_helper_forward.1} parent=1 // pred_fallthru
      _
    // Predicated region
    $region6: #{gofa_helper_forward.1} parent=1 // pred_check
      _
    $region7: #{gofa_helper_forward.1} parent=1 // pred_check_branch
      %26 = sbr.rel (0) target = $region9
    $region8: #{gofa_helper_forward.1} parent=1 // pred_region
      _
    $region9: #{gofa_helper_forward.1} parent=1 // pred_fallthru
      _
    // Predicated region
    $region10: #{gofa_helper_forward.1} parent=1 // pred_check
      _
    $region11: #{gofa_helper_forward.1} parent=1 // pred_check_branch
      %28 = sbr.rel (0) target = $region13
    $region12: #{gofa_helper_forward.1} parent=1 // pred_region
      _
    $region13: #{gofa_helper_forward.1} parent=1 // pred_fallthru
      _
    // Predicated region
    $region14: #{gofa_helper_forward.1} parent=1 // pred_check
      _
    $region15: #{gofa_helper_forward.1} parent=1 // pred_check_branch
      %30 = sbr.rel (0) target = $region17
    $region16: #{gofa_helper_forward.1} parent=1 // pred_region
      _
    $region17: #{gofa_helper_forward.1} parent=1 // pred_fallthru
      _
    // Predicated region
    $region18: #{gofa_helper_forward.1} parent=1 // pred_check
      _
    $region19: #{gofa_helper_forward.1} parent=1 // pred_check_branch
      %32 = sbr.rel (0) target = $region21
    $region20: #{gofa_helper_forward.1} parent=1 // pred_region
      %s34 = ssub.s32 2048, 2048
      %35 = vsyncadd [#allocation3], %s34
      %s36 = sshll.u32 [#allocation2], 4
      %s37 = int_to_ptr.vmem [resolvable:$true] %s36
      %42 = dma.hbm_to_vmem [thread:$0]  %s4, 2048, %s37, [#allocation3], 64, 64, 4
    $region21: #{gofa_helper_forward.1} parent=1 // pred_fallthru
      _
    // Predicated region
    $region22: #{gofa_helper_forward.1} parent=1 // pred_check
      _
    $region23: #{gofa_helper_forward.1} parent=1 // pred_check_branch
      %44 = sbr.rel (0) target = $region25
    $region24: #{gofa_helper_forward.1} parent=1 // pred_region
      %s46 = ssub.s32 2048, 2048
      %47 = vsyncadd [#allocation6], %s46
      %s48 = sshll.u32 [#allocation5], 4
      %s49 = int_to_ptr.vmem [resolvable:$true] %s48
      %54 = dma.hbm_to_vmem [thread:$0]  %s5, 2048, %s49, [#allocation6], 64, 64, 4
    $region25: #{gofa_helper_forward.1} parent=1 // pred_fallthru
      _
    // Predicated region
    $region26: #{gofa_helper_forward.1} parent=1 // pred_check
      _
    $region27: #{gofa_helper_forward.1} parent=1 // pred_check_branch
      %56 = sbr.rel (0) target = $region29
    $region28: #{gofa_helper_forward.1} parent=1 // pred_region
      %s58 = ssub.s32 2048, 2048
      %59 = vsyncadd [#allocation6], %s58
      %s60 = sshll.u32 [#allocation7], 4
      %s61 = int_to_ptr.vmem [resolvable:$true] %s60
      %66 = dma.hbm_to_vmem [thread:$0]  %s6, 2048, %s61, [#allocation6], 64, 64, 4
    $region29: #{gofa_helper_forward.1} parent=1 // pred_fallthru
      _
    // Predicated region
    $region30: #{gofa_helper_forward.1} parent=1 // pred_check
      _
    $region31: #{gofa_helper_forward.1} parent=1 // pred_check_branch
      %68 = sbr.rel (0) target = $region33
    $region32: #{gofa_helper_forward.1} parent=1 // pred_region
      %s70 = ssub.s32 32, 32
      %71 = vsyncadd [#allocation9], %s70
      %s72 = sshll.u32 [#allocation8], 4
      %s73 = int_to_ptr.vmem [resolvable:$true] %s72
      %78 = dma.hbm_to_vmem [thread:$0]  %s7, 32, %s73, [#allocation9], 16, 16, 1
    $region33: #{gofa_helper_forward.1} parent=1 // pred_fallthru
      _
    // Predicated region
    $region34: #{gofa_helper_forward.1} parent=1 // pred_check
      _
    $region35: #{gofa_helper_forward.1} parent=1 // pred_check_branch
      %80 = sbr.rel (0) target = $region37
    $region36: #{gofa_helper_forward.1} parent=1 // pred_region
      %s82 = ssub.s32 4096, 4096
      %83 = vsyncadd [#allocation9], %s82
      %s84 = sshll.u32 [#allocation10], 4
      %s85 = int_to_ptr.vmem [resolvable:$true] %s84
      %90 = dma.hbm_to_vmem [thread:$0]  %s8, 4096, %s85, [#allocation9], 128, 128, 8
    $region37: #{gofa_helper_forward.1} parent=1 // pred_fallthru
      _
    // Predicated region
    $region38: #{gofa_helper_forward.1} parent=1 // pred_check
      _
    $region39: #{gofa_helper_forward.1} parent=1 // pred_check_branch
      %92 = sbr.rel (0) target = $region41
    $region40: #{gofa_helper_forward.1} parent=1 // pred_region
      %s94 = ssub.s32 4096, 4096
      %95 = vsyncadd [#allocation12], %s94
      %s96 = sshll.u32 [#allocation11], 4
      %s97 = int_to_ptr.vmem [resolvable:$true] %s96
      %102 = dma.hbm_to_vmem [thread:$0]  %s9, 4096, %s97, [#allocation12], 128, 128, 8
    $region41: #{gofa_helper_forward.1} parent=1 // pred_fallthru
      _
    // Predicated region
    $region42: #{gofa_helper_forward.1} parent=1 // pred_check
      _
    $region43: #{gofa_helper_forward.1} parent=1 // pred_check_branch
      %104 = sbr.rel (0) target = $region45
    $region44: #{gofa_helper_forward.1} parent=1 // pred_region
      %s106 = ssub.s32 4096, 4096
      %107 = vsyncadd [#allocation12], %s106
      %s108 = sshll.u32 [#allocation13], 4
      %s109 = int_to_ptr.vmem [resolvable:$true] %s108
      %114 = dma.hbm_to_vmem [thread:$0]  %s10, 4096, %s109, [#allocation12], 64, 64, 4
    $region45: #{gofa_helper_forward.1} parent=1 // pred_fallthru
      _
    // Predicated region
    $region46: #{gofa_helper_forward.1} parent=1 // pred_check
      _
    $region47: #{gofa_helper_forward.1} parent=1 // pred_check_branch
      %116 = sbr.rel (0) target = $region49
    $region48: #{gofa_helper_forward.1} parent=1 // pred_region
      _
    $region49: #{gofa_helper_forward.1} parent=1 // pred_fallthru
      _
    // Predicated region
    $region50: #{gofa_helper_forward.1} parent=1 // pred_check
      _
    $region51: #{gofa_helper_forward.1} parent=1 // pred_check_branch
      %118 = sbr.rel (0) target = $region53
    $region52: #{gofa_helper_forward.1} parent=1 // pred_region
      _
    $region53: #{gofa_helper_forward.1} parent=1 // pred_fallthru
      _
    // Predicated region
    $region54: #{gofa_helper_forward.1} parent=1 // pred_check
      _
    $region55: #{gofa_helper_forward.1} parent=1 // pred_check_branch
      %120 = sbr.rel (0) target = $region57
    $region56: #{gofa_helper_forward.1} parent=1 // pred_region
      %121 = dma.done [#allocation3], 2048
    $region57: #{gofa_helper_forward.1} parent=1 // pred_fallthru
      _
    // Predicated region
    $region58: #{gofa_helper_forward.1} parent=1 // pred_check
      _
    $region59: #{gofa_helper_forward.1} parent=1 // pred_check_branch
      %123 = sbr.rel (0) target = $region61
    $region60: #{gofa_helper_forward.1} parent=1 // pred_region
      %124 = dma.done [#allocation6], 2048
    $region61: #{gofa_helper_forward.1} parent=1 // pred_fallthru
      _
    // Predicated region
    $region62: #{gofa_helper_forward.1} parent=1 // pred_check
      _
    $region63: #{gofa_helper_forward.1} parent=1 // pred_check_branch
      %126 = sbr.rel (0) target = $region65
    $region64: #{gofa_helper_forward.1} parent=1 // pred_region
      %127 = dma.done [#allocation6], 2048
    $region65: #{gofa_helper_forward.1} parent=1 // pred_fallthru
      _
    // Predicated region
    $region66: #{gofa_helper_forward.1} parent=1 // pred_check
      _
    $region67: #{gofa_helper_forward.1} parent=1 // pred_check_branch
      %129 = sbr.rel (0) target = $region69
    $region68: #{gofa_helper_forward.1} parent=1 // pred_region
      %130 = dma.done [#allocation9], 32
    $region69: #{gofa_helper_forward.1} parent=1 // pred_fallthru
      _
    // Predicated region
    $region70: #{gofa_helper_forward.1} parent=1 // pred_check
      _
    $region71: #{gofa_helper_forward.1} parent=1 // pred_check_branch
      %132 = sbr.rel (0) target = $region73
    $region72: #{gofa_helper_forward.1} parent=1 // pred_region
      %133 = dma.done [#allocation9], 4096
    $region73: #{gofa_helper_forward.1} parent=1 // pred_fallthru
      _
    // Predicated region
    $region74: #{gofa_helper_forward.1} parent=1 // pred_check
      _
    $region75: #{gofa_helper_forward.1} parent=1 // pred_check_branch
      %135 = sbr.rel (0) target = $region77
    $region76: #{gofa_helper_forward.1} parent=1 // pred_region
      %136 = dma.done [#allocation12], 4096
    $region77: #{gofa_helper_forward.1} parent=1 // pred_fallthru
      _
    // Predicated region
    $region78: #{gofa_helper_forward.1} parent=1 // pred_check
      _
    $region79: #{gofa_helper_forward.1} parent=1 // pred_check_branch
      %138 = sbr.rel (0) target = $region81
    $region80: #{gofa_helper_forward.1} parent=1 // pred_region
      %139 = dma.done [#allocation12], 4096
    $region81: #{gofa_helper_forward.1} parent=1 // pred_fallthru
      _
    %v141 = vld [vmem:[%s0] sm:$0xf]
    %v142 = vld [vmem:[%s0 + $0x4] sm:$0xf]
    %v143 = vld [vmem:[%s0 + $0x8] sm:$0xf]
    %v144 = vld [vmem:[%s0 + $0xc] sm:$0xf]
    %v145 = vld [vmem:[%s0 + $0x10] sm:$0xf]
    %v146 = vld [vmem:[%s0 + $0x14] sm:$0xf]
    %v147 = vld [vmem:[%s1] sm:$0xf]
    %v148 = vld [vmem:[%s1 + $0x4] sm:$0xf]
    %v149 = vld [vmem:[%s1 + $0x8] sm:$0xf]
    %v150 = vld [vmem:[%s1 + $0xc] sm:$0xf]
    %v151 = vld [vmem:[%s1 + $0x10] sm:$0xf]
    %v152 = vld [vmem:[%s1 + $0x14] sm:$0xf]
    %v153 = vld [vmem:[%s1 + $0x18] sm:$0xf]
    %v154 = vld [vmem:[%s1 + $0x1c] sm:$0xf]
    %v155 = vld [vmem:[%s1 + $0x20] sm:$0xf]
    %v156 = vld [vmem:[%s1 + $0x24] sm:$0xf]
    %v157 = vld [vmem:[%s1 + $0x28] sm:$0xf]
    %v158 = vld [vmem:[%s1 + $0x2c] sm:$0xf]
    %v159 = vld [vmem:[%s1 + $0x30] sm:$0xf]
    %v160 = vld [vmem:[%s1 + $0x34] sm:$0xf]
    %v161 = vld [vmem:[%s1 + $0x38] sm:$0xf]
    %v162 = vld [vmem:[%s1 + $0x3c] sm:$0xf]
    %v169 = vunpack.c.l.b16 %v141
    %v170 = vunpack.c.l.b16 %v142
    %v171 = vunpack.c.l.b16 %v143
    %v172 = vunpack.c.l.b16 %v144
    %v173 = vunpack.c.l.b16 %v145
    %v174 = vunpack.c.l.b16 %v146
    %v175 = vpack.c.b16 %v170, %v169
    %v176 = vpack.c.b16 %v172, %v171
    %v177 = vpack.c.b16 %v174, %v173
    %v197 = vunpack.c.l.b16 %v147
    %v198 = vunpack.c.l.b16 %v148
    %v199 = vunpack.c.l.b16 %v149
    %v200 = vunpack.c.l.b16 %v150
    %v201 = vunpack.c.l.b16 %v151
    %v202 = vunpack.c.l.b16 %v152
    %v203 = vunpack.c.l.b16 %v153
    %v204 = vunpack.c.l.b16 %v154
    %v205 = vunpack.c.l.b16 %v155
    %v206 = vunpack.c.l.b16 %v156
    %v207 = vunpack.c.l.b16 %v157
    %v208 = vunpack.c.l.b16 %v158
    %v209 = vunpack.c.l.b16 %v159
    %v210 = vunpack.c.l.b16 %v160
    %v211 = vunpack.c.l.b16 %v161
    %v212 = vunpack.c.l.b16 %v162
    %v213 = vpack.c.b16 %v198, %v197
    %v214 = vpack.c.b16 %v200, %v199
    %v215 = vpack.c.b16 %v202, %v201
    %v216 = vpack.c.b16 %v204, %v203
    %v217 = vpack.c.b16 %v206, %v205
    %v218 = vpack.c.b16 %v208, %v207
    %v219 = vpack.c.b16 %v210, %v209
    %v220 = vpack.c.b16 %v212, %v211
    %229 = vmatprep.subr.bf16.mxu0 0
    %230 = vmatpush1.bf16.msra.mxu0 %v213
    %231 = vmatprep.subr.bf16.mxu0 0
    %232 = vmatpush1.bf16.msra.mxu0 %v214
    %233 = vmatprep.subr.bf16.mxu0 0
    %234 = vmatpush1.bf16.msra.mxu0 %v215
    %235 = vmatprep.subr.bf16.mxu0 0
    %236 = vmatpush1.bf16.msra.mxu0 %v216
    %237 = vmatprep.subr.bf16.mxu0 0
    %238 = vmatpush1.bf16.msra.mxu0 %v217
    %239 = vmatprep.subr.bf16.mxu0 0
    %240 = vmatpush1.bf16.msra.mxu0 %v218
    %241 = vmatprep.subr.bf16.mxu0 0
    %242 = vmatpush1.bf16.msra.mxu0 %v219
    %243 = vmatprep.subr.bf16.mxu0 0
    %244 = vmatpush1.bf16.msra.mxu0 %v220
    %245 = vmatprep.subr.bf16.mxu0 0
    %246 = vmatpush1.bf16.msra.mxu0 0
    %247 = vmatprep.subr.bf16.mxu0 0
    %248 = vmatpush1.bf16.msra.mxu0 0
    %249 = vmatprep.subr.bf16.mxu0 0
    %250 = vmatpush1.bf16.msra.mxu0 0
    %251 = vmatprep.subr.bf16.mxu0 0
    %252 = vmatpush1.bf16.msra.mxu0 0
    %253 = vmatprep.subr.bf16.mxu0 0
    %254 = vmatpush1.bf16.msra.mxu0 0
    %255 = vmatprep.subr.bf16.mxu0 0
    %256 = vmatpush1.bf16.msra.mxu0 0
    %257 = vmatprep.subr.bf16.mxu0 0
    %258 = vmatpush1.bf16.msra.mxu0 0
    %259 = vmatprep.subr.bf16.mxu0 0
    %260 = vmatpush1.bf16.msra.mxu0 0
    %261 = vmatprep.mubr.bf16.mxu0 0
    %262 = vmatmul.mubr.bf16.gmra.mrb[0].mxu0 %v175
    %v263 = vpop.f32.mrb[0].mxu0
    %v264 = vadd.f32 0.0, %v263
    %v265 = vpop.f32.mrb[0].mxu0
    %v266 = vpop.f32.mrb[0].mxu0
    %v267 = vadd.f32 0.0, %v266
    %v268 = vpop.f32.mrb[0].mxu0
    %269 = vmatprep.mubr.bf16.mxu0 0
    %270 = vmatmul.mubr.bf16.gmra.mrb[0].mxu0 %v176
    %v271 = vpop.f32.mrb[0].mxu0
    %v272 = vadd.f32 0.0, %v271
    %v273 = vpop.f32.mrb[0].mxu0
    %v274 = vpop.f32.mrb[0].mxu0
    %v275 = vadd.f32 0.0, %v274
    %v276 = vpop.f32.mrb[0].mxu0
    %277 = vmatprep.mubr.bf16.mxu0 0
    %278 = vmatmul.mubr.bf16.gmra.mrb[0].mxu0 %v177
    %v279 = vpop.f32.mrb[0].mxu0
    %v280 = vadd.f32 0.0, %v279
    %v281 = vpop.f32.mrb[0].mxu0
    %v282 = vpop.f32.mrb[0].mxu0
    %v283 = vadd.f32 0.0, %v282
    %v284 = vpop.f32.mrb[0].mxu0
    %285 = vdwg.mxu0
    %v286 = vlaneseq
    %v287 = vshrl.u32 %v286, 7
    %v288 = vadd.s32 %v287, 8
    %v289 = vadd.s32 %v287, 16
    %v290 = vlaneseq
    %v291 = vand.u32 %v290, 127
    %vm292 = vcmp.ge.s32.totalorder %v287, %v291
    %vm293 = vcmp.ge.s32.totalorder %v288, %v291
    %vm294 = vcmp.ge.s32.totalorder %v289, %v291
    %v295 = vmul.f32 %v264, %v264
    %v296 = vmul.f32 %v267, %v267
    %v297 = vmul.f32 %v272, %v272
    %v298 = vmul.f32 %v275, %v275
    %v299 = vmul.f32 %v280, %v280
    %v300 = vmul.f32 %v283, %v283
    %301 = vadd.xlane.f32.xlu0 %v295
    %v302 = vpop.xlane.xlu0 %301
    %303 = vadd.xlane.f32.xlu0 %v296
    %v304 = vpop.xlane.xlu0 %303
    %305 = vadd.xlane.f32.xlu0 %v297
    %v306 = vpop.xlane.xlu0 %305
    %307 = vadd.xlane.f32.xlu0 %v298
    %v308 = vpop.xlane.xlu0 %307
    %309 = vadd.xlane.f32.xlu0 %v299
    %v310 = vpop.xlane.xlu0 %309
    %311 = vadd.xlane.f32.xlu0 %v300
    %v312 = vpop.xlane.xlu0 %311
    %v313 = vrcp.pop 128.0
    %v314 = vmul.f32 %v302, %v313
    %v315 = vmul.f32 %v304, %v313
    %v316 = vmul.f32 %v306, %v313
    %v317 = vmul.f32 %v308, %v313
    %v318 = vmul.f32 %v310, %v313
    %v319 = vmul.f32 %v312, %v313
    %v320 = vadd.f32 %v314, 1e-06
    %v321 = vadd.f32 %v315, 1e-06
    %v322 = vadd.f32 %v316, 1e-06
    %v323 = vadd.f32 %v317, 1e-06
    %v324 = vadd.f32 %v318, 1e-06
    %v325 = vadd.f32 %v319, 1e-06
    %v326 = vrsqrt.pop %v320
    %v327 = vrsqrt.pop %v321
    %v328 = vrsqrt.pop %v322
    %v329 = vrsqrt.pop %v323
    %v330 = vrsqrt.pop %v324
    %v331 = vrsqrt.pop %v325
    %v332 = vmul.f32 %v264, %v326
    %v333 = vmul.f32 %v267, %v327
    %v334 = vmul.f32 %v272, %v328
    %v335 = vmul.f32 %v275, %v329
    %v336 = vmul.f32 %v280, %v330
    %v337 = vmul.f32 %v283, %v331
    %v338 = vld [vmem:[%s2] sm:$0x1]
    %v340 = vlaneseq
    %v341 = vshrl.u32 %v340, 7
    %v342 = vsub.s32 0, %v341
    %v343 = vrot.slane %v338, %v342
    %v345 = vmul.f32 %v332, %v343
    %v346 = vmul.f32 %v333, %v343
    %v347 = vmul.f32 %v334, %v343
    %v348 = vmul.f32 %v335, %v343
    %v349 = vmul.f32 %v336, %v343
    %v350 = vmul.f32 %v337, %v343
    %v351 = vpack.c.bf16 %v346, %v345
    %v352 = vpack.c.bf16 %v348, %v347
    %v353 = vpack.c.bf16 %v350, %v349
    %v354 = vld [vmem:[%s3] sm:$0xf]
    %v355 = vld [vmem:[%s3 + $0x4] sm:$0xf]
    %v356 = vld [vmem:[%s3 + $0x8] sm:$0xf]
    %v357 = vld [vmem:[%s3 + $0xc] sm:$0xf]
    %v358 = vld [vmem:[%s3 + $0x10] sm:$0xf]
    %v359 = vld [vmem:[%s3 + $0x14] sm:$0xf]
    %v360 = vld [vmem:[%s3 + $0x18] sm:$0xf]
    %v361 = vld [vmem:[%s3 + $0x1c] sm:$0xf]
    %v362 = vld [vmem:[%s3 + $0x20] sm:$0xf]
    %v363 = vld [vmem:[%s3 + $0x24] sm:$0xf]
    %v364 = vld [vmem:[%s3 + $0x28] sm:$0xf]
    %v365 = vld [vmem:[%s3 + $0x2c] sm:$0xf]
    %v366 = vld [vmem:[%s3 + $0x30] sm:$0xf]
    %v367 = vld [vmem:[%s3 + $0x34] sm:$0xf]
    %v368 = vld [vmem:[%s3 + $0x38] sm:$0xf]
    %v369 = vld [vmem:[%s3 + $0x3c] sm:$0xf]
    %v386 = vunpack.c.l.b16 %v354
    %v387 = vunpack.c.l.b16 %v355
    %v388 = vunpack.c.l.b16 %v356
    %v389 = vunpack.c.l.b16 %v357
    %v390 = vunpack.c.l.b16 %v358
    %v391 = vunpack.c.l.b16 %v359
    %v392 = vunpack.c.l.b16 %v360
    %v393 = vunpack.c.l.b16 %v361
    %v394 = vunpack.c.l.b16 %v362
    %v395 = vunpack.c.l.b16 %v363
    %v396 = vunpack.c.l.b16 %v364
    %v397 = vunpack.c.l.b16 %v365
    %v398 = vunpack.c.l.b16 %v366
    %v399 = vunpack.c.l.b16 %v367
    %v400 = vunpack.c.l.b16 %v368
    %v401 = vunpack.c.l.b16 %v369
    %v402 = vpack.c.b16 %v387, %v386
    %v403 = vpack.c.b16 %v389, %v388
    %v404 = vpack.c.b16 %v391, %v390
    %v405 = vpack.c.b16 %v393, %v392
    %v406 = vpack.c.b16 %v395, %v394
    %v407 = vpack.c.b16 %v397, %v396
    %v408 = vpack.c.b16 %v399, %v398
    %v409 = vpack.c.b16 %v401, %v400
    %418 = vmatprep.subr.bf16.mxu0 0
    %419 = vmatpush1.bf16.msra.mxu0 %v402
    %420 = vmatprep.subr.bf16.mxu0 0
    %421 = vmatpush1.bf16.msra.mxu0 %v403
    %422 = vmatprep.subr.bf16.mxu0 0
    %423 = vmatpush1.bf16.msra.mxu0 %v404
    %424 = vmatprep.subr.bf16.mxu0 0
    %425 = vmatpush1.bf16.msra.mxu0 %v405
    %426 = vmatprep.subr.bf16.mxu0 0
    %427 = vmatpush1.bf16.msra.mxu0 %v406
    %428 = vmatprep.subr.bf16.mxu0 0
    %429 = vmatpush1.bf16.msra.mxu0 %v407
    %430 = vmatprep.subr.bf16.mxu0 0
    %431 = vmatpush1.bf16.msra.mxu0 %v408
    %432 = vmatprep.subr.bf16.mxu0 0
    %433 = vmatpush1.bf16.msra.mxu0 %v409
    %434 = vmatprep.subr.bf16.mxu0 0
    %435 = vmatpush1.bf16.msra.mxu0 0
    %436 = vmatprep.subr.bf16.mxu0 0
    %437 = vmatpush1.bf16.msra.mxu0 0
    %438 = vmatprep.subr.bf16.mxu0 0
    %439 = vmatpush1.bf16.msra.mxu0 0
    %440 = vmatprep.subr.bf16.mxu0 0
    %441 = vmatpush1.bf16.msra.mxu0 0
    %442 = vmatprep.subr.bf16.mxu0 0
    %443 = vmatpush1.bf16.msra.mxu0 0
    %444 = vmatprep.subr.bf16.mxu0 0
    %445 = vmatpush1.bf16.msra.mxu0 0
    %446 = vmatprep.subr.bf16.mxu0 0
    %447 = vmatpush1.bf16.msra.mxu0 0
    %448 = vmatprep.subr.bf16.mxu0 0
    %449 = vmatpush1.bf16.msra.mxu0 0
    %450 = vmatprep.mubr.bf16.mxu0 0
    %451 = vmatmul.mubr.bf16.gmra.mrb[0].mxu0 %v351
    %v452 = vpop.f32.mrb[0].mxu0
    %v453 = vadd.f32 0.0, %v452
    %v454 = vpop.f32.mrb[0].mxu0
    %v455 = vpop.f32.mrb[0].mxu0
    %v456 = vadd.f32 0.0, %v455
    %v457 = vpop.f32.mrb[0].mxu0
    %458 = vmatprep.mubr.bf16.mxu0 0
    %459 = vmatmul.mubr.bf16.gmra.mrb[0].mxu0 %v352
    %v460 = vpop.f32.mrb[0].mxu0
    %v461 = vadd.f32 0.0, %v460
    %v462 = vpop.f32.mrb[0].mxu0
    %v463 = vpop.f32.mrb[0].mxu0
    %v464 = vadd.f32 0.0, %v463
    %v465 = vpop.f32.mrb[0].mxu0
    %466 = vmatprep.mubr.bf16.mxu0 0
    %467 = vmatmul.mubr.bf16.gmra.mrb[0].mxu0 %v353
    %v468 = vpop.f32.mrb[0].mxu0
    %v469 = vadd.f32 0.0, %v468
    %v470 = vpop.f32.mrb[0].mxu0
    %v471 = vpop.f32.mrb[0].mxu0
    %v472 = vadd.f32 0.0, %v471
    %v473 = vpop.f32.mrb[0].mxu0
    %474 = vdwg.mxu0
    %v475 = vld [vmem:[#allocation2] sm:$0xf]
    %v476 = vld [vmem:[#allocation2 + $0x4] sm:$0xf]
    %v477 = vld [vmem:[#allocation2 + $0x8] sm:$0xf]
    %v478 = vld [vmem:[#allocation2 + $0xc] sm:$0xf]
    %v479 = vld [vmem:[#allocation2 + $0x10] sm:$0xf]
    %v480 = vld [vmem:[#allocation2 + $0x14] sm:$0xf]
    %v481 = vld [vmem:[#allocation2 + $0x18] sm:$0xf]
    %v482 = vld [vmem:[#allocation2 + $0x1c] sm:$0xf]
    %v483 = vld [vmem:[#allocation2 + $0x20] sm:$0xf]
    %v484 = vld [vmem:[#allocation2 + $0x24] sm:$0xf]
    %v485 = vld [vmem:[#allocation2 + $0x28] sm:$0xf]
    %v486 = vld [vmem:[#allocation2 + $0x2c] sm:$0xf]
    %v487 = vld [vmem:[#allocation2 + $0x30] sm:$0xf]
    %v488 = vld [vmem:[#allocation2 + $0x34] sm:$0xf]
    %v489 = vld [vmem:[#allocation2 + $0x38] sm:$0xf]
    %v490 = vld [vmem:[#allocation2 + $0x3c] sm:$0xf]
    %v507 = vunpack.c.l.b16 %v475
    %v508 = vunpack.c.l.b16 %v476
    %v509 = vunpack.c.l.b16 %v477
    %v510 = vunpack.c.l.b16 %v478
    %v511 = vunpack.c.l.b16 %v479
    %v512 = vunpack.c.l.b16 %v480
    %v513 = vunpack.c.l.b16 %v481
    %v514 = vunpack.c.l.b16 %v482
    %v515 = vunpack.c.l.b16 %v483
    %v516 = vunpack.c.l.b16 %v484
    %v517 = vunpack.c.l.b16 %v485
    %v518 = vunpack.c.l.b16 %v486
    %v519 = vunpack.c.l.b16 %v487
    %v520 = vunpack.c.l.b16 %v488
    %v521 = vunpack.c.l.b16 %v489
    %v522 = vunpack.c.l.b16 %v490
    %v523 = vpack.c.b16 %v508, %v507
    %v524 = vpack.c.b16 %v510, %v509
    %v525 = vpack.c.b16 %v512, %v511
    %v526 = vpack.c.b16 %v514, %v513
    %v527 = vpack.c.b16 %v516, %v515
    %v528 = vpack.c.b16 %v518, %v517
    %v529 = vpack.c.b16 %v520, %v519
    %v530 = vpack.c.b16 %v522, %v521
    %539 = vmatprep.subr.bf16.mxu0 0
    %540 = vmatpush1.bf16.msra.mxu0 %v523
    %541 = vmatprep.subr.bf16.mxu0 0
    %542 = vmatpush1.bf16.msra.mxu0 %v524
    %543 = vmatprep.subr.bf16.mxu0 0
    %544 = vmatpush1.bf16.msra.mxu0 %v525
    %545 = vmatprep.subr.bf16.mxu0 0
    %546 = vmatpush1.bf16.msra.mxu0 %v526
    %547 = vmatprep.subr.bf16.mxu0 0
    %548 = vmatpush1.bf16.msra.mxu0 %v527
    %549 = vmatprep.subr.bf16.mxu0 0
    %550 = vmatpush1.bf16.msra.mxu0 %v528
    %551 = vmatprep.subr.bf16.mxu0 0
    %552 = vmatpush1.bf16.msra.mxu0 %v529
    %553 = vmatprep.subr.bf16.mxu0 0
    %554 = vmatpush1.bf16.msra.mxu0 %v530
    %555 = vmatprep.subr.bf16.mxu0 0
    %556 = vmatpush1.bf16.msra.mxu0 0
    %557 = vmatprep.subr.bf16.mxu0 0
    %558 = vmatpush1.bf16.msra.mxu0 0
    %559 = vmatprep.subr.bf16.mxu0 0
    %560 = vmatpush1.bf16.msra.mxu0 0
    %561 = vmatprep.subr.bf16.mxu0 0
    %562 = vmatpush1.bf16.msra.mxu0 0
    %563 = vmatprep.subr.bf16.mxu0 0
    %564 = vmatpush1.bf16.msra.mxu0 0
    %565 = vmatprep.subr.bf16.mxu0 0
    %566 = vmatpush1.bf16.msra.mxu0 0
    %567 = vmatprep.subr.bf16.mxu0 0
    %568 = vmatpush1.bf16.msra.mxu0 0
    %569 = vmatprep.subr.bf16.mxu0 0
    %570 = vmatpush1.bf16.msra.mxu0 0
    %571 = vmatprep.mubr.bf16.mxu0 0
    %572 = vmatmul.mubr.bf16.gmra.mrb[0].mxu0 %v351
    %v573 = vpop.f32.mrb[0].mxu0
    %v574 = vadd.f32 0.0, %v573
    %v575 = vpop.f32.mrb[0].mxu0
    %v576 = vpop.f32.mrb[0].mxu0
    %v577 = vadd.f32 0.0, %v576
    %v578 = vpop.f32.mrb[0].mxu0
    %579 = vmatprep.mubr.bf16.mxu0 0
    %580 = vmatmul.mubr.bf16.gmra.mrb[0].mxu0 %v352
    %v581 = vpop.f32.mrb[0].mxu0
    %v582 = vadd.f32 0.0, %v581
    %v583 = vpop.f32.mrb[0].mxu0
    %v584 = vpop.f32.mrb[0].mxu0
    %v585 = vadd.f32 0.0, %v584
    %v586 = vpop.f32.mrb[0].mxu0
    %587 = vmatprep.mubr.bf16.mxu0 0
    %588 = vmatmul.mubr.bf16.gmra.mrb[0].mxu0 %v353
    %v589 = vpop.f32.mrb[0].mxu0
    %v590 = vadd.f32 0.0, %v589
    %v591 = vpop.f32.mrb[0].mxu0
    %v592 = vpop.f32.mrb[0].mxu0
    %v593 = vadd.f32 0.0, %v592
    %v594 = vpop.f32.mrb[0].mxu0
    %595 = vdwg.mxu0
    %v596 = vld [vmem:[#allocation5] sm:$0xf]
    %v597 = vld [vmem:[#allocation5 + $0x4] sm:$0xf]
    %v598 = vld [vmem:[#allocation5 + $0x8] sm:$0xf]
    %v599 = vld [vmem:[#allocation5 + $0xc] sm:$0xf]
    %v600 = vld [vmem:[#allocation5 + $0x10] sm:$0xf]
    %v601 = vld [vmem:[#allocation5 + $0x14] sm:$0xf]
    %v602 = vld [vmem:[#allocation5 + $0x18] sm:$0xf]
    %v603 = vld [vmem:[#allocation5 + $0x1c] sm:$0xf]
    %v604 = vld [vmem:[#allocation5 + $0x20] sm:$0xf]
    %v605 = vld [vmem:[#allocation5 + $0x24] sm:$0xf]
    %v606 = vld [vmem:[#allocation5 + $0x28] sm:$0xf]
    %v607 = vld [vmem:[#allocation5 + $0x2c] sm:$0xf]
    %v608 = vld [vmem:[#allocation5 + $0x30] sm:$0xf]
    %v609 = vld [vmem:[#allocation5 + $0x34] sm:$0xf]
    %v610 = vld [vmem:[#allocation5 + $0x38] sm:$0xf]
    %v611 = vld [vmem:[#allocation5 + $0x3c] sm:$0xf]
    %v628 = vunpack.c.l.b16 %v596
    %v629 = vunpack.c.l.b16 %v597
    %v630 = vunpack.c.l.b16 %v598
    %v631 = vunpack.c.l.b16 %v599
    %v632 = vunpack.c.l.b16 %v600
    %v633 = vunpack.c.l.b16 %v601
    %v634 = vunpack.c.l.b16 %v602
    %v635 = vunpack.c.l.b16 %v603
    %v636 = vunpack.c.l.b16 %v604
    %v637 = vunpack.c.l.b16 %v605
    %v638 = vunpack.c.l.b16 %v606
    %v639 = vunpack.c.l.b16 %v607
    %v640 = vunpack.c.l.b16 %v608
    %v641 = vunpack.c.l.b16 %v609
    %v642 = vunpack.c.l.b16 %v610
    %v643 = vunpack.c.l.b16 %v611
    %v644 = vpack.c.b16 %v629, %v628
    %v645 = vpack.c.b16 %v631, %v630
    %v646 = vpack.c.b16 %v633, %v632
    %v647 = vpack.c.b16 %v635, %v634
    %v648 = vpack.c.b16 %v637, %v636
    %v649 = vpack.c.b16 %v639, %v638
    %v650 = vpack.c.b16 %v641, %v640
    %v651 = vpack.c.b16 %v643, %v642
    %660 = vmatprep.subr.bf16.mxu0 0
    %661 = vmatpush1.bf16.msra.mxu0 %v644
    %662 = vmatprep.subr.bf16.mxu0 0
    %663 = vmatpush1.bf16.msra.mxu0 %v645
    %664 = vmatprep.subr.bf16.mxu0 0
    %665 = vmatpush1.bf16.msra.mxu0 %v646
    %666 = vmatprep.subr.bf16.mxu0 0
    %667 = vmatpush1.bf16.msra.mxu0 %v647
    %668 = vmatprep.subr.bf16.mxu0 0
    %669 = vmatpush1.bf16.msra.mxu0 %v648
    %670 = vmatprep.subr.bf16.mxu0 0
    %671 = vmatpush1.bf16.msra.mxu0 %v649
    %672 = vmatprep.subr.bf16.mxu0 0
    %673 = vmatpush1.bf16.msra.mxu0 %v650
    %674 = vmatprep.subr.bf16.mxu0 0
    %675 = vmatpush1.bf16.msra.mxu0 %v651
    %676 = vmatprep.subr.bf16.mxu0 0
    %677 = vmatpush1.bf16.msra.mxu0 0
    %678 = vmatprep.subr.bf16.mxu0 0
    %679 = vmatpush1.bf16.msra.mxu0 0
    %680 = vmatprep.subr.bf16.mxu0 0
    %681 = vmatpush1.bf16.msra.mxu0 0
    %682 = vmatprep.subr.bf16.mxu0 0
    %683 = vmatpush1.bf16.msra.mxu0 0
    %684 = vmatprep.subr.bf16.mxu0 0
    %685 = vmatpush1.bf16.msra.mxu0 0
    %686 = vmatprep.subr.bf16.mxu0 0
    %687 = vmatpush1.bf16.msra.mxu0 0
    %688 = vmatprep.subr.bf16.mxu0 0
    %689 = vmatpush1.bf16.msra.mxu0 0
    %690 = vmatprep.subr.bf16.mxu0 0
    %691 = vmatpush1.bf16.msra.mxu0 0
    %692 = vmatprep.mubr.bf16.mxu0 0
    %693 = vmatmul.mubr.bf16.gmra.mrb[0].mxu0 %v351
    %v694 = vpop.f32.mrb[0].mxu0
    %v695 = vadd.f32 0.0, %v694
    %v696 = vpop.f32.mrb[0].mxu0
    %v697 = vpop.f32.mrb[0].mxu0
    %v698 = vadd.f32 0.0, %v697
    %v699 = vpop.f32.mrb[0].mxu0
    %700 = vmatprep.mubr.bf16.mxu0 0
    %701 = vmatmul.mubr.bf16.gmra.mrb[0].mxu0 %v352
    %v702 = vpop.f32.mrb[0].mxu0
    %v703 = vadd.f32 0.0, %v702
    %v704 = vpop.f32.mrb[0].mxu0
    %v705 = vpop.f32.mrb[0].mxu0
    %v706 = vadd.f32 0.0, %v705
    %v707 = vpop.f32.mrb[0].mxu0
    %708 = vmatprep.mubr.bf16.mxu0 0
    %709 = vmatmul.mubr.bf16.gmra.mrb[0].mxu0 %v353
    %v710 = vpop.f32.mrb[0].mxu0
    %v711 = vadd.f32 0.0, %v710
    %v712 = vpop.f32.mrb[0].mxu0
    %v713 = vpop.f32.mrb[0].mxu0
    %v714 = vadd.f32 0.0, %v713
    %v715 = vpop.f32.mrb[0].mxu0
    %716 = vdwg.mxu0
    %v717 = vmul.f32 %v453, 0.088388346
    %v718 = vmul.f32 %v456, 0.088388346
    %v719 = vmul.f32 %v461, 0.088388346
    %v720 = vmul.f32 %v464, 0.088388346
    %v721 = vmul.f32 %v469, 0.088388346
    %v722 = vmul.f32 %v472, 0.088388346
    %v723 = vpack.c.bf16 %v718, %v717
    %v724 = vpack.c.bf16 %v719, %v719
    %v725 = vpack.c.bf16 %v721, %v720
    %v726 = vpack.c.bf16 %v722, %v722
    %v727 = vpack.c.bf16 %v577, %v574
    %v728 = vpack.c.bf16 %v582, %v582
    %v729 = vpack.c.bf16 %v590, %v585
    %v730 = vpack.c.bf16 %v593, %v593
    %v731 = vpack.c.bf16 %v698, %v695
    %v732 = vpack.c.bf16 %v703, %v703
    %v733 = vpack.c.bf16 %v711, %v706
    %v734 = vpack.c.bf16 %v714, %v714
    %735 = vmatprep.subr.bf16.mxu0 0
    %736 = vmatpush1.bf16.xpose.msra.mxu0 %v727
    %737 = vmatprep.subr.bf16.mxu0 0
    %738 = vmatpush1.bf16.xpose.msra.mxu0 %v728
    %739 = vmatprep.subr.bf16.mxu0 0
    %740 = vmatpush1.bf16.xpose.msra.mxu0 0
    %741 = vmatprep.subr.bf16.mxu0 0
    %742 = vmatpush1.bf16.xpose.msra.mxu0 0
    %743 = vmatprep.subr.bf16.mxu0 0
    %744 = vmatpush1.bf16.xpose.msra.mxu0 0
    %745 = vmatprep.subr.bf16.mxu0 0
    %746 = vmatpush1.bf16.xpose.msra.mxu0 0
    %747 = vmatprep.subr.bf16.mxu0 0
    %748 = vmatpush1.bf16.xpose.msra.mxu0 0
    %749 = vmatprep.subr.bf16.mxu0 0
    %750 = vmatpush1.bf16.xpose.msra.mxu0 0
    %751 = vmatprep.subr.bf16.mxu0 0
    %752 = vmatpush1.bf16.xpose.msra.mxu0 0
    %753 = vmatprep.subr.bf16.mxu0 0
    %754 = vmatpush1.bf16.xpose.msra.mxu0 0
    %755 = vmatprep.subr.bf16.mxu0 0
    %756 = vmatpush1.bf16.xpose.msra.mxu0 0
    %757 = vmatprep.subr.bf16.mxu0 0
    %758 = vmatpush1.bf16.xpose.msra.mxu0 0
    %759 = vmatprep.subr.bf16.mxu0 0
    %760 = vmatpush1.bf16.xpose.msra.mxu0 0
    %761 = vmatprep.subr.bf16.mxu0 0
    %762 = vmatpush1.bf16.xpose.msra.mxu0 0
    %763 = vmatprep.subr.bf16.mxu0 0
    %764 = vmatpush1.bf16.xpose.msra.mxu0 0
    %765 = vmatprep.subr.bf16.mxu0 0
    %766 = vmatpush1.bf16.xpose.msra.mxu0 0
    %767 = vmatprep.mubr.bf16.mxu0 0
    %768 = vmatmul.mubr.bf16.gmra.mrb[0].mxu0 %v723
    %v769 = vpop.f32.mrb[0].mxu0
    %v770 = vadd.f32 0.0, %v769
    %v771 = vpop.f32.mrb[0].mxu0
    %v772 = vpop.f32.mrb[0].mxu0
    %v773 = vadd.f32 0.0, %v772
    %v774 = vpop.f32.mrb[0].mxu0
    %775 = vmatprep.mubr.bf16.mxu0 0
    %776 = vmatmul.mubr.bf16.gmra.mrb[0].mxu0 %v724
    %v777 = vpop.f32.mrb[0].mxu0
    %v778 = vadd.f32 0.0, %v777
    %v779 = vpop.f32.mrb[0].mxu0
    %v780 = vpop.f32.mrb[0].mxu0
    %v781 = vpop.f32.mrb[0].mxu0
    %782 = vdwg.mxu0
    %783 = vmatprep.subr.bf16.mxu0 0
    %784 = vmatpush1.bf16.xpose.msra.mxu0 %v729
    %785 = vmatprep.subr.bf16.mxu0 0
    %786 = vmatpush1.bf16.xpose.msra.mxu0 %v730
    %787 = vmatprep.subr.bf16.mxu0 0
    %788 = vmatpush1.bf16.xpose.msra.mxu0 0
    %789 = vmatprep.subr.bf16.mxu0 0
    %790 = vmatpush1.bf16.xpose.msra.mxu0 0
    %791 = vmatprep.subr.bf16.mxu0 0
    %792 = vmatpush1.bf16.xpose.msra.mxu0 0
    %793 = vmatprep.subr.bf16.mxu0 0
    %794 = vmatpush1.bf16.xpose.msra.mxu0 0
    %795 = vmatprep.subr.bf16.mxu0 0
    %796 = vmatpush1.bf16.xpose.msra.mxu0 0
    %797 = vmatprep.subr.bf16.mxu0 0
    %798 = vmatpush1.bf16.xpose.msra.mxu0 0
    %799 = vmatprep.subr.bf16.mxu0 0
    %800 = vmatpush1.bf16.xpose.msra.mxu0 0
    %801 = vmatprep.subr.bf16.mxu0 0
    %802 = vmatpush1.bf16.xpose.msra.mxu0 0
    %803 = vmatprep.subr.bf16.mxu0 0
    %804 = vmatpush1.bf16.xpose.msra.mxu0 0
    %805 = vmatprep.subr.bf16.mxu0 0
    %806 = vmatpush1.bf16.xpose.msra.mxu0 0
    %807 = vmatprep.subr.bf16.mxu0 0
    %808 = vmatpush1.bf16.xpose.msra.mxu0 0
    %809 = vmatprep.subr.bf16.mxu0 0
    %810 = vmatpush1.bf16.xpose.msra.mxu0 0
    %811 = vmatprep.subr.bf16.mxu0 0
    %812 = vmatpush1.bf16.xpose.msra.mxu0 0
    %813 = vmatprep.subr.bf16.mxu0 0
    %814 = vmatpush1.bf16.xpose.msra.mxu0 0
    %815 = vmatprep.mubr.bf16.mxu0 0
    %816 = vmatmul.mubr.bf16.gmra.mrb[0].mxu0 %v725
    %v817 = vpop.f32.mrb[0].mxu0
    %v818 = vadd.f32 0.0, %v817
    %v819 = vpop.f32.mrb[0].mxu0
    %v820 = vpop.f32.mrb[0].mxu0
    %v821 = vadd.f32 0.0, %v820
    %v822 = vpop.f32.mrb[0].mxu0
    %823 = vmatprep.mubr.bf16.mxu0 0
    %824 = vmatmul.mubr.bf16.gmra.mrb[0].mxu0 %v726
    %v825 = vpop.f32.mrb[0].mxu0
    %v826 = vadd.f32 0.0, %v825
    %v827 = vpop.f32.mrb[0].mxu0
    %v828 = vpop.f32.mrb[0].mxu0
    %v829 = vpop.f32.mrb[0].mxu0
    %830 = vdwg.mxu0
    %v831 = vsel %vm292, 1, 0
    %v832 = vsel %vm293, 1, 0
    %v833 = vsel %vm294, 1, 0
    %vm834 = vcmp.eq.s32.totalorder %v831, 1
    %vm835 = vcmp.eq.s32.totalorder %v832, 1
    %vm836 = vcmp.eq.s32.totalorder %v833, 1
    %v837 = vsel %vm834, %v770, -1e+30
    %v838 = vsel %vm835, %v773, -1e+30
    %v839 = vsel %vm836, %v778, -1e+30
    %v840 = vsel %vm834, %v818, -1e+30
    %v841 = vsel %vm835, %v821, -1e+30
    %v842 = vsel %vm836, %v826, -1e+30
    %vm843 = vcmask 195584
    %v844 = vsel %vm843, %v837, -inf
    %845 = vmax.xlane.f32.xlu0 %v844
    %v846 = vpop.xlane.xlu0 %845
    %v847 = vsel %vm843, %v838, -inf
    %848 = vmax.xlane.f32.xlu0 %v847
    %v849 = vpop.xlane.xlu0 %848
    %v850 = vsel %vm843, %v839, -inf
    %851 = vmax.xlane.f32.xlu0 %v850
    %v852 = vpop.xlane.xlu0 %851
    %v853 = vsel %vm843, %v840, -inf
    %854 = vmax.xlane.f32.xlu0 %v853
    %v855 = vpop.xlane.xlu0 %854
    %v856 = vsel %vm843, %v841, -inf
    %857 = vmax.xlane.f32.xlu0 %v856
    %v858 = vpop.xlane.xlu0 %857
    %v859 = vsel %vm843, %v842, -inf
    %860 = vmax.xlane.f32.xlu0 %v859
    %v861 = vpop.xlane.xlu0 %860
    %v862 = vsub.f32 %v837, %v846
    %v863 = vsub.f32 %v838, %v849
    %v864 = vsub.f32 %v839, %v852
    %v865 = vsub.f32 %v840, %v855
    %v866 = vsub.f32 %v841, %v858
    %v867 = vsub.f32 %v842, %v861
    %v868 = vmul.f32 %v862, 1.442695
    %v869 = vpow.pop %v868
    %v870 = vmul.f32 %v863, 1.442695
    %v871 = vpow.pop %v870
    %v872 = vmul.f32 %v864, 1.442695
    %v873 = vpow.pop %v872
    %v874 = vmul.f32 %v865, 1.442695
    %v875 = vpow.pop %v874
    %v876 = vmul.f32 %v866, 1.442695
    %v877 = vpow.pop %v876
    %v878 = vmul.f32 %v867, 1.442695
    %v879 = vpow.pop %v878
    %v880 = vsel %vm843, %v869, 0.0
    %881 = vadd.xlane.f32.xlu0 %v880
    %v882 = vpop.xlane.xlu0 %881
    %v883 = vsel %vm843, %v871, 0.0
    %884 = vadd.xlane.f32.xlu0 %v883
    %v885 = vpop.xlane.xlu0 %884
    %v886 = vsel %vm843, %v873, 0.0
    %887 = vadd.xlane.f32.xlu0 %v886
    %v888 = vpop.xlane.xlu0 %887
    %v889 = vsel %vm843, %v875, 0.0
    %890 = vadd.xlane.f32.xlu0 %v889
    %v891 = vpop.xlane.xlu0 %890
    %v892 = vsel %vm843, %v877, 0.0
    %893 = vadd.xlane.f32.xlu0 %v892
    %v894 = vpop.xlane.xlu0 %893
    %v895 = vsel %vm843, %v879, 0.0
    %896 = vadd.xlane.f32.xlu0 %v895
    %v897 = vpop.xlane.xlu0 %896
    %v898 = vrcp.pop %v882
    %v899 = vrcp.pop %v885
    %v900 = vrcp.pop %v888
    %v901 = vrcp.pop %v891
    %v902 = vrcp.pop %v894
    %v903 = vrcp.pop %v897
    %v904 = vmul.f32 %v869, %v898
    %v905 = vmul.f32 %v871, %v899
    %v906 = vmul.f32 %v873, %v900
    %v907 = vmul.f32 %v875, %v901
    %v908 = vmul.f32 %v877, %v902
    %v909 = vmul.f32 %v879, %v903
    %v910 = vpack.c.bf16 %v905, %v904
    %v911 = vpack.c.bf16 %v906, %v906
    %v912 = vpack.c.bf16 %v908, %v907
    %v913 = vpack.c.bf16 %v909, %v909
    %v915 = vsel %vm843, %v910, 0
    %v918 = vsel %vm843, %v911, 0
    %vm920 = vcmask 1043456
    %v922 = vsel %vm920, %v732, 0
    %924 = vmatprep.subr.bf16.mxu0 0
    %925 = vmatpush1.bf16.msra.mxu0 %v731
    %926 = vmatprep.subr.bf16.mxu0 0
    %927 = vmatpush1.bf16.msra.mxu0 %v922
    %928 = vmatprep.subr.bf16.mxu0 0
    %929 = vmatpush1.bf16.msra.mxu0 0
    %930 = vmatprep.subr.bf16.mxu0 0
    %931 = vmatpush1.bf16.msra.mxu0 0
    %932 = vmatprep.subr.bf16.mxu0 0
    %933 = vmatpush1.bf16.msra.mxu0 0
    %934 = vmatprep.subr.bf16.mxu0 0
    %935 = vmatpush1.bf16.msra.mxu0 0
    %936 = vmatprep.subr.bf16.mxu0 0
    %937 = vmatpush1.bf16.msra.mxu0 0
    %938 = vmatprep.subr.bf16.mxu0 0
    %939 = vmatpush1.bf16.msra.mxu0 0
    %940 = vmatprep.subr.bf16.mxu0 0
    %941 = vmatpush1.bf16.msra.mxu0 0
    %942 = vmatprep.subr.bf16.mxu0 0
    %943 = vmatpush1.bf16.msra.mxu0 0
    %944 = vmatprep.subr.bf16.mxu0 0
    %945 = vmatpush1.bf16.msra.mxu0 0
    %946 = vmatprep.subr.bf16.mxu0 0
    %947 = vmatpush1.bf16.msra.mxu0 0
    %948 = vmatprep.subr.bf16.mxu0 0
    %949 = vmatpush1.bf16.msra.mxu0 0
    %950 = vmatprep.subr.bf16.mxu0 0
    %951 = vmatpush1.bf16.msra.mxu0 0
    %952 = vmatprep.subr.bf16.mxu0 0
    %953 = vmatpush1.bf16.msra.mxu0 0
    %954 = vmatprep.subr.bf16.mxu0 0
    %955 = vmatpush1.bf16.msra.mxu0 0
    %956 = vmatprep.mubr.bf16.mxu0 0
    %957 = vmatmul.mubr.bf16.gmra.mrb[0].mxu0 %v915
    %v958 = vpop.f32.mrb[0].mxu0
    %v959 = vadd.f32 0.0, %v958
    %v960 = vpop.f32.mrb[0].mxu0
    %v961 = vpop.f32.mrb[0].mxu0
    %v962 = vadd.f32 0.0, %v961
    %v963 = vpop.f32.mrb[0].mxu0
    %964 = vmatprep.mubr.bf16.mxu0 0
    %965 = vmatmul.mubr.bf16.gmra.mrb[0].mxu0 %v918
    %v966 = vpop.f32.mrb[0].mxu0
    %v967 = vadd.f32 0.0, %v966
    %v968 = vpop.f32.mrb[0].mxu0
    %v969 = vpop.f32.mrb[0].mxu0
    %v970 = vpop.f32.mrb[0].mxu0
    %971 = vdwg.mxu0
    %v973 = vsel %vm843, %v912, 0
    %v976 = vsel %vm843, %v913, 0
    %v979 = vsel %vm920, %v734, 0
    %981 = vmatprep.subr.bf16.mxu0 0
    %982 = vmatpush1.bf16.msra.mxu0 %v733
    %983 = vmatprep.subr.bf16.mxu0 0
    %984 = vmatpush1.bf16.msra.mxu0 %v979
    %985 = vmatprep.subr.bf16.mxu0 0
    %986 = vmatpush1.bf16.msra.mxu0 0
    %987 = vmatprep.subr.bf16.mxu0 0
    %988 = vmatpush1.bf16.msra.mxu0 0
    %989 = vmatprep.subr.bf16.mxu0 0
    %990 = vmatpush1.bf16.msra.mxu0 0
    %991 = vmatprep.subr.bf16.mxu0 0
    %992 = vmatpush1.bf16.msra.mxu0 0
    %993 = vmatprep.subr.bf16.mxu0 0
    %994 = vmatpush1.bf16.msra.mxu0 0
    %995 = vmatprep.subr.bf16.mxu0 0
    %996 = vmatpush1.bf16.msra.mxu0 0
    %997 = vmatprep.subr.bf16.mxu0 0
    %998 = vmatpush1.bf16.msra.mxu0 0
    %999 = vmatprep.subr.bf16.mxu0 0
    %1000 = vmatpush1.bf16.msra.mxu0 0
    %1001 = vmatprep.subr.bf16.mxu0 0
    %1002 = vmatpush1.bf16.msra.mxu0 0
    %1003 = vmatprep.subr.bf16.mxu0 0
    %1004 = vmatpush1.bf16.msra.mxu0 0
    %1005 = vmatprep.subr.bf16.mxu0 0
    %1006 = vmatpush1.bf16.msra.mxu0 0
    %1007 = vmatprep.subr.bf16.mxu0 0
    %1008 = vmatpush1.bf16.msra.mxu0 0
    %1009 = vmatprep.subr.bf16.mxu0 0
    %1010 = vmatpush1.bf16.msra.mxu0 0
    %1011 = vmatprep.subr.bf16.mxu0 0
    %1012 = vmatpush1.bf16.msra.mxu0 0
    %1013 = vmatprep.mubr.bf16.mxu0 0
    %1014 = vmatmul.mubr.bf16.gmra.mrb[0].mxu0 %v973
    %v1015 = vpop.f32.mrb[0].mxu0
    %v1016 = vadd.f32 0.0, %v1015
    %v1017 = vpop.f32.mrb[0].mxu0
    %v1018 = vpop.f32.mrb[0].mxu0
    %v1019 = vadd.f32 0.0, %v1018
    %v1020 = vpop.f32.mrb[0].mxu0
    %1021 = vmatprep.mubr.bf16.mxu0 0
    %1022 = vmatmul.mubr.bf16.gmra.mrb[0].mxu0 %v976
    %v1023 = vpop.f32.mrb[0].mxu0
    %v1024 = vadd.f32 0.0, %v1023
    %v1025 = vpop.f32.mrb[0].mxu0
    %v1026 = vpop.f32.mrb[0].mxu0
    %v1027 = vpop.f32.mrb[0].mxu0
    %1028 = vdwg.mxu0
    %v1029 = vpack.c.bf16 %v962, %v959
    %v1030 = vpack.c.bf16 %v1016, %v967
    %v1031 = vpack.c.bf16 %v1024, %v1019
    %v1032 = vld [vmem:[#allocation7] sm:$0xf]
    %v1033 = vld [vmem:[#allocation7 + $0x4] sm:$0xf]
    %v1034 = vld [vmem:[#allocation7 + $0x8] sm:$0xf]
    %v1035 = vld [vmem:[#allocation7 + $0xc] sm:$0xf]
    %v1036 = vld [vmem:[#allocation7 + $0x10] sm:$0xf]
    %v1037 = vld [vmem:[#allocation7 + $0x14] sm:$0xf]
    %v1038 = vld [vmem:[#allocation7 + $0x18] sm:$0xf]
    %v1039 = vld [vmem:[#allocation7 + $0x1c] sm:$0xf]
    %v1040 = vld [vmem:[#allocation7 + $0x20] sm:$0xf]
    %v1041 = vld [vmem:[#allocation7 + $0x24] sm:$0xf]
    %v1042 = vld [vmem:[#allocation7 + $0x28] sm:$0xf]
    %v1043 = vld [vmem:[#allocation7 + $0x2c] sm:$0xf]
    %v1044 = vld [vmem:[#allocation7 + $0x30] sm:$0xf]
    %v1045 = vld [vmem:[#allocation7 + $0x34] sm:$0xf]
    %v1046 = vld [vmem:[#allocation7 + $0x38] sm:$0xf]
    %v1047 = vld [vmem:[#allocation7 + $0x3c] sm:$0xf]
    %v1064 = vunpack.c.l.b16 %v1032
    %v1065 = vunpack.c.l.b16 %v1033
    %v1066 = vunpack.c.l.b16 %v1034
    %v1067 = vunpack.c.l.b16 %v1035
    %v1068 = vunpack.c.l.b16 %v1036
    %v1069 = vunpack.c.l.b16 %v1037
    %v1070 = vunpack.c.l.b16 %v1038
    %v1071 = vunpack.c.l.b16 %v1039
    %v1072 = vunpack.c.l.b16 %v1040
    %v1073 = vunpack.c.l.b16 %v1041
    %v1074 = vunpack.c.l.b16 %v1042
    %v1075 = vunpack.c.l.b16 %v1043
    %v1076 = vunpack.c.l.b16 %v1044
    %v1077 = vunpack.c.l.b16 %v1045
    %v1078 = vunpack.c.l.b16 %v1046
    %v1079 = vunpack.c.l.b16 %v1047
    %v1080 = vpack.c.b16 %v1065, %v1064
    %v1081 = vpack.c.b16 %v1067, %v1066
    %v1082 = vpack.c.b16 %v1069, %v1068
    %v1083 = vpack.c.b16 %v1071, %v1070
    %v1084 = vpack.c.b16 %v1073, %v1072
    %v1085 = vpack.c.b16 %v1075, %v1074
    %v1086 = vpack.c.b16 %v1077, %v1076
    %v1087 = vpack.c.b16 %v1079, %v1078
    %1096 = vmatprep.subr.bf16.mxu0 0
    %1097 = vmatpush1.bf16.msra.mxu0 %v1080
    %1098 = vmatprep.subr.bf16.mxu0 0
    %1099 = vmatpush1.bf16.msra.mxu0 %v1081
    %1100 = vmatprep.subr.bf16.mxu0 0
    %1101 = vmatpush1.bf16.msra.mxu0 %v1082
    %1102 = vmatprep.subr.bf16.mxu0 0
    %1103 = vmatpush1.bf16.msra.mxu0 %v1083
    %1104 = vmatprep.subr.bf16.mxu0 0
    %1105 = vmatpush1.bf16.msra.mxu0 %v1084
    %1106 = vmatprep.subr.bf16.mxu0 0
    %1107 = vmatpush1.bf16.msra.mxu0 %v1085
    %1108 = vmatprep.subr.bf16.mxu0 0
    %1109 = vmatpush1.bf16.msra.mxu0 %v1086
    %1110 = vmatprep.subr.bf16.mxu0 0
    %1111 = vmatpush1.bf16.msra.mxu0 %v1087
    %1112 = vmatprep.subr.bf16.mxu0 0
    %1113 = vmatpush1.bf16.msra.mxu0 0
    %1114 = vmatprep.subr.bf16.mxu0 0
    %1115 = vmatpush1.bf16.msra.mxu0 0
    %1116 = vmatprep.subr.bf16.mxu0 0
    %1117 = vmatpush1.bf16.msra.mxu0 0
    %1118 = vmatprep.subr.bf16.mxu0 0
    %1119 = vmatpush1.bf16.msra.mxu0 0
    %1120 = vmatprep.subr.bf16.mxu0 0
    %1121 = vmatpush1.bf16.msra.mxu0 0
    %1122 = vmatprep.subr.bf16.mxu0 0
    %1123 = vmatpush1.bf16.msra.mxu0 0
    %1124 = vmatprep.subr.bf16.mxu0 0
    %1125 = vmatpush1.bf16.msra.mxu0 0
    %1126 = vmatprep.subr.bf16.mxu0 0
    %1127 = vmatpush1.bf16.msra.mxu0 0
    %1128 = vmatprep.mubr.bf16.mxu0 0
    %1129 = vmatmul.mubr.bf16.gmra.mrb[0].mxu0 %v1029
    %v1130 = vpop.f32.mrb[0].mxu0
    %v1131 = vadd.f32 0.0, %v1130
    %v1132 = vpop.f32.mrb[0].mxu0
    %v1133 = vpop.f32.mrb[0].mxu0
    %v1134 = vadd.f32 0.0, %v1133
    %v1135 = vpop.f32.mrb[0].mxu0
    %1136 = vmatprep.mubr.bf16.mxu0 0
    %1137 = vmatmul.mubr.bf16.gmra.mrb[0].mxu0 %v1030
    %v1138 = vpop.f32.mrb[0].mxu0
    %v1139 = vadd.f32 0.0, %v1138
    %v1140 = vpop.f32.mrb[0].mxu0
    %v1141 = vpop.f32.mrb[0].mxu0
    %v1142 = vadd.f32 0.0, %v1141
    %v1143 = vpop.f32.mrb[0].mxu0
    %1144 = vmatprep.mubr.bf16.mxu0 0
    %1145 = vmatmul.mubr.bf16.gmra.mrb[0].mxu0 %v1031
    %v1146 = vpop.f32.mrb[0].mxu0
    %v1147 = vadd.f32 0.0, %v1146
    %v1148 = vpop.f32.mrb[0].mxu0
    %v1149 = vpop.f32.mrb[0].mxu0
    %v1150 = vadd.f32 0.0, %v1149
    %v1151 = vpop.f32.mrb[0].mxu0
    %1152 = vdwg.mxu0
    %v1153 = vadd.f32 %v264, %v1131
    %v1154 = vadd.f32 %v267, %v1134
    %v1155 = vadd.f32 %v272, %v1139
    %v1156 = vadd.f32 %v275, %v1142
    %v1157 = vadd.f32 %v280, %v1147
    %v1158 = vadd.f32 %v283, %v1150
    %v1159 = vmul.f32 %v1153, %v1153
    %v1160 = vmul.f32 %v1154, %v1154
    %v1161 = vmul.f32 %v1155, %v1155
    %v1162 = vmul.f32 %v1156, %v1156
    %v1163 = vmul.f32 %v1157, %v1157
    %v1164 = vmul.f32 %v1158, %v1158
    %1165 = vadd.xlane.f32.xlu0 %v1159
    %v1166 = vpop.xlane.xlu0 %1165
    %1167 = vadd.xlane.f32.xlu0 %v1160
    %v1168 = vpop.xlane.xlu0 %1167
    %1169 = vadd.xlane.f32.xlu0 %v1161
    %v1170 = vpop.xlane.xlu0 %1169
    %1171 = vadd.xlane.f32.xlu0 %v1162
    %v1172 = vpop.xlane.xlu0 %1171
    %1173 = vadd.xlane.f32.xlu0 %v1163
    %v1174 = vpop.xlane.xlu0 %1173
    %1175 = vadd.xlane.f32.xlu0 %v1164
    %v1176 = vpop.xlane.xlu0 %1175
    %v1177 = vmul.f32 %v1166, %v313
    %v1178 = vmul.f32 %v1168, %v313
    %v1179 = vmul.f32 %v1170, %v313
    %v1180 = vmul.f32 %v1172, %v313
    %v1181 = vmul.f32 %v1174, %v313
    %v1182 = vmul.f32 %v1176, %v313
    %v1183 = vadd.f32 %v1177, 1e-06
    %v1184 = vadd.f32 %v1178, 1e-06
    %v1185 = vadd.f32 %v1179, 1e-06
    %v1186 = vadd.f32 %v1180, 1e-06
    %v1187 = vadd.f32 %v1181, 1e-06
    %v1188 = vadd.f32 %v1182, 1e-06
    %v1189 = vrsqrt.pop %v1183
    %v1190 = vrsqrt.pop %v1184
    %v1191 = vrsqrt.pop %v1185
    %v1192 = vrsqrt.pop %v1186
    %v1193 = vrsqrt.pop %v1187
    %v1194 = vrsqrt.pop %v1188
    %v1195 = vmul.f32 %v1153, %v1189
    %v1196 = vmul.f32 %v1154, %v1190
    %v1197 = vmul.f32 %v1155, %v1191
    %v1198 = vmul.f32 %v1156, %v1192
    %v1199 = vmul.f32 %v1157, %v1193
    %v1200 = vmul.f32 %v1158, %v1194
    %v1201 = vld [vmem:[#allocation8] sm:$0x1]
    %v1203 = vlaneseq
    %v1204 = vshrl.u32 %v1203, 7
    %v1205 = vsub.s32 0, %v1204
    %v1206 = vrot.slane %v1201, %v1205
    %v1208 = vmul.f32 %v1195, %v1206
    %v1209 = vmul.f32 %v1196, %v1206
    %v1210 = vmul.f32 %v1197, %v1206
    %v1211 = vmul.f32 %v1198, %v1206
    %v1212 = vmul.f32 %v1199, %v1206
    %v1213 = vmul.f32 %v1200, %v1206
    %v1214 = vpack.c.bf16 %v1209, %v1208
    %v1215 = vpack.c.bf16 %v1211, %v1210
    %v1216 = vpack.c.bf16 %v1213, %v1212
    %v1217 = vld [vmem:[#allocation10] sm:$0xff]
    %v1218 = vld [vmem:[#allocation10 + $0x8] sm:$0xff]
    %v1219 = vld [vmem:[#allocation10 + $0x10] sm:$0xff]
    %v1220 = vld [vmem:[#allocation10 + $0x18] sm:$0xff]
    %v1221 = vld [vmem:[#allocation10 + $0x20] sm:$0xff]
    %v1222 = vld [vmem:[#allocation10 + $0x28] sm:$0xff]
    %v1223 = vld [vmem:[#allocation10 + $0x30] sm:$0xff]
    %v1224 = vld [vmem:[#allocation10 + $0x38] sm:$0xff]
    %v1225 = vld [vmem:[#allocation10 + $0x40] sm:$0xff]
    %v1226 = vld [vmem:[#allocation10 + $0x48] sm:$0xff]
    %v1227 = vld [vmem:[#allocation10 + $0x50] sm:$0xff]
    %v1228 = vld [vmem:[#allocation10 + $0x58] sm:$0xff]
    %v1229 = vld [vmem:[#allocation10 + $0x60] sm:$0xff]
    %v1230 = vld [vmem:[#allocation10 + $0x68] sm:$0xff]
    %v1231 = vld [vmem:[#allocation10 + $0x70] sm:$0xff]
    %v1232 = vld [vmem:[#allocation10 + $0x78] sm:$0xff]
    %v1249 = vunpack.c.l.b16 %v1217
    %v1250 = vunpack.c.h.b16 %v1217
    %v1251 = vunpack.c.l.b16 %v1218
    %v1252 = vunpack.c.h.b16 %v1218
    %v1253 = vunpack.c.l.b16 %v1219
    %v1254 = vunpack.c.h.b16 %v1219
    %v1255 = vunpack.c.l.b16 %v1220
    %v1256 = vunpack.c.h.b16 %v1220
    %v1257 = vunpack.c.l.b16 %v1221
    %v1258 = vunpack.c.h.b16 %v1221
    %v1259 = vunpack.c.l.b16 %v1222
    %v1260 = vunpack.c.h.b16 %v1222
    %v1261 = vunpack.c.l.b16 %v1223
    %v1262 = vunpack.c.h.b16 %v1223
    %v1263 = vunpack.c.l.b16 %v1224
    %v1264 = vunpack.c.h.b16 %v1224
    %v1265 = vunpack.c.l.b16 %v1225
    %v1266 = vunpack.c.h.b16 %v1225
    %v1267 = vunpack.c.l.b16 %v1226
    %v1268 = vunpack.c.h.b16 %v1226
    %v1269 = vunpack.c.l.b16 %v1227
    %v1270 = vunpack.c.h.b16 %v1227
    %v1271 = vunpack.c.l.b16 %v1228
    %v1272 = vunpack.c.h.b16 %v1228
    %v1273 = vunpack.c.l.b16 %v1229
    %v1274 = vunpack.c.h.b16 %v1229
    %v1275 = vunpack.c.l.b16 %v1230
    %v1276 = vunpack.c.h.b16 %v1230
    %v1277 = vunpack.c.l.b16 %v1231
    %v1278 = vunpack.c.h.b16 %v1231
    %v1279 = vunpack.c.l.b16 %v1232
    %v1280 = vunpack.c.h.b16 %v1232
    %v1281 = vpack.c.b16 %v1251, %v1249
    %v1282 = vpack.c.b16 %v1252, %v1250
    %v1283 = vpack.c.b16 %v1255, %v1253
    %v1284 = vpack.c.b16 %v1256, %v1254
    %v1285 = vpack.c.b16 %v1259, %v1257
    %v1286 = vpack.c.b16 %v1260, %v1258
    %v1287 = vpack.c.b16 %v1263, %v1261
    %v1288 = vpack.c.b16 %v1264, %v1262
    %v1289 = vpack.c.b16 %v1267, %v1265
    %v1290 = vpack.c.b16 %v1268, %v1266
    %v1291 = vpack.c.b16 %v1271, %v1269
    %v1292 = vpack.c.b16 %v1272, %v1270
    %v1293 = vpack.c.b16 %v1275, %v1273
    %v1294 = vpack.c.b16 %v1276, %v1274
    %v1295 = vpack.c.b16 %v1279, %v1277
    %v1296 = vpack.c.b16 %v1280, %v1278
    %1313 = vmatprep.subr.bf16.mxu0 %v1282
    %1314 = vmatpush1.bf16.msra.mxu0 %v1281
    %1315 = vmatprep.subr.bf16.mxu0 %v1284
    %1316 = vmatpush1.bf16.msra.mxu0 %v1283
    %1317 = vmatprep.subr.bf16.mxu0 %v1286
    %1318 = vmatpush1.bf16.msra.mxu0 %v1285
    %1319 = vmatprep.subr.bf16.mxu0 %v1288
    %1320 = vmatpush1.bf16.msra.mxu0 %v1287
    %1321 = vmatprep.subr.bf16.mxu0 %v1290
    %1322 = vmatpush1.bf16.msra.mxu0 %v1289
    %1323 = vmatprep.subr.bf16.mxu0 %v1292
    %1324 = vmatpush1.bf16.msra.mxu0 %v1291
    %1325 = vmatprep.subr.bf16.mxu0 %v1294
    %1326 = vmatpush1.bf16.msra.mxu0 %v1293
    %1327 = vmatprep.subr.bf16.mxu0 %v1296
    %1328 = vmatpush1.bf16.msra.mxu0 %v1295
    %1329 = vmatprep.subr.bf16.mxu0 0
    %1330 = vmatpush1.bf16.msra.mxu0 0
    %1331 = vmatprep.subr.bf16.mxu0 0
    %1332 = vmatpush1.bf16.msra.mxu0 0
    %1333 = vmatprep.subr.bf16.mxu0 0
    %1334 = vmatpush1.bf16.msra.mxu0 0
    %1335 = vmatprep.subr.bf16.mxu0 0
    %1336 = vmatpush1.bf16.msra.mxu0 0
    %1337 = vmatprep.subr.bf16.mxu0 0
    %1338 = vmatpush1.bf16.msra.mxu0 0
    %1339 = vmatprep.subr.bf16.mxu0 0
    %1340 = vmatpush1.bf16.msra.mxu0 0
    %1341 = vmatprep.subr.bf16.mxu0 0
    %1342 = vmatpush1.bf16.msra.mxu0 0
    %1343 = vmatprep.subr.bf16.mxu0 0
    %1344 = vmatpush1.bf16.msra.mxu0 0
    %1345 = vmatprep.mubr.bf16.mxu0 0
    %1346 = vmatmul.mubr.bf16.gmra.mrb[0].mxu0 %v1214
    %v1347 = vpop.f32.mrb[0].mxu0
    %v1348 = vadd.f32 0.0, %v1347
    %v1349 = vpop.f32.mrb[0].mxu0
    %v1350 = vadd.f32 0.0, %v1349
    %v1351 = vpop.f32.mrb[0].mxu0
    %v1352 = vadd.f32 0.0, %v1351
    %v1353 = vpop.f32.mrb[0].mxu0
    %v1354 = vadd.f32 0.0, %v1353
    %1355 = vmatprep.mubr.bf16.mxu0 0
    %1356 = vmatmul.mubr.bf16.gmra.mrb[0].mxu0 %v1215
    %v1357 = vpop.f32.mrb[0].mxu0
    %v1358 = vadd.f32 0.0, %v1357
    %v1359 = vpop.f32.mrb[0].mxu0
    %v1360 = vadd.f32 0.0, %v1359
    %v1361 = vpop.f32.mrb[0].mxu0
    %v1362 = vadd.f32 0.0, %v1361
    %v1363 = vpop.f32.mrb[0].mxu0
    %v1364 = vadd.f32 0.0, %v1363
    %1365 = vmatprep.mubr.bf16.mxu0 0
    %1366 = vmatmul.mubr.bf16.gmra.mrb[0].mxu0 %v1216
    %v1367 = vpop.f32.mrb[0].mxu0
    %v1368 = vadd.f32 0.0, %v1367
    %v1369 = vpop.f32.mrb[0].mxu0
    %v1370 = vadd.f32 0.0, %v1369
    %v1371 = vpop.f32.mrb[0].mxu0
    %v1372 = vadd.f32 0.0, %v1371
    %v1373 = vpop.f32.mrb[0].mxu0
    %v1374 = vadd.f32 0.0, %v1373
    %1375 = vdwg.mxu0
    %v1376 = vld [vmem:[#allocation11] sm:$0xff]
    %v1377 = vld [vmem:[#allocation11 + $0x8] sm:$0xff]
    %v1378 = vld [vmem:[#allocation11 + $0x10] sm:$0xff]
    %v1379 = vld [vmem:[#allocation11 + $0x18] sm:$0xff]
    %v1380 = vld [vmem:[#allocation11 + $0x20] sm:$0xff]
    %v1381 = vld [vmem:[#allocation11 + $0x28] sm:$0xff]
    %v1382 = vld [vmem:[#allocation11 + $0x30] sm:$0xff]
    %v1383 = vld [vmem:[#allocation11 + $0x38] sm:$0xff]
    %v1384 = vld [vmem:[#allocation11 + $0x40] sm:$0xff]
    %v1385 = vld [vmem:[#allocation11 + $0x48] sm:$0xff]
    %v1386 = vld [vmem:[#allocation11 + $0x50] sm:$0xff]
    %v1387 = vld [vmem:[#allocation11 + $0x58] sm:$0xff]
    %v1388 = vld [vmem:[#allocation11 + $0x60] sm:$0xff]
    %v1389 = vld [vmem:[#allocation11 + $0x68] sm:$0xff]
    %v1390 = vld [vmem:[#allocation11 + $0x70] sm:$0xff]
    %v1391 = vld [vmem:[#allocation11 + $0x78] sm:$0xff]
    %v1408 = vunpack.c.l.b16 %v1376
    %v1409 = vunpack.c.h.b16 %v1376
    %v1410 = vunpack.c.l.b16 %v1377
    %v1411 = vunpack.c.h.b16 %v1377
    %v1412 = vunpack.c.l.b16 %v1378
    %v1413 = vunpack.c.h.b16 %v1378
    %v1414 = vunpack.c.l.b16 %v1379
    %v1415 = vunpack.c.h.b16 %v1379
    %v1416 = vunpack.c.l.b16 %v1380
    %v1417 = vunpack.c.h.b16 %v1380
    %v1418 = vunpack.c.l.b16 %v1381
    %v1419 = vunpack.c.h.b16 %v1381
    %v1420 = vunpack.c.l.b16 %v1382
    %v1421 = vunpack.c.h.b16 %v1382
    %v1422 = vunpack.c.l.b16 %v1383
    %v1423 = vunpack.c.h.b16 %v1383
    %v1424 = vunpack.c.l.b16 %v1384
    %v1425 = vunpack.c.h.b16 %v1384
    %v1426 = vunpack.c.l.b16 %v1385
    %v1427 = vunpack.c.h.b16 %v1385
    %v1428 = vunpack.c.l.b16 %v1386
    %v1429 = vunpack.c.h.b16 %v1386
    %v1430 = vunpack.c.l.b16 %v1387
    %v1431 = vunpack.c.h.b16 %v1387
    %v1432 = vunpack.c.l.b16 %v1388
    %v1433 = vunpack.c.h.b16 %v1388
    %v1434 = vunpack.c.l.b16 %v1389
    %v1435 = vunpack.c.h.b16 %v1389
    %v1436 = vunpack.c.l.b16 %v1390
    %v1437 = vunpack.c.h.b16 %v1390
    %v1438 = vunpack.c.l.b16 %v1391
    %v1439 = vunpack.c.h.b16 %v1391
    %v1440 = vpack.c.b16 %v1410, %v1408
    %v1441 = vpack.c.b16 %v1411, %v1409
    %v1442 = vpack.c.b16 %v1414, %v1412
    %v1443 = vpack.c.b16 %v1415, %v1413
    %v1444 = vpack.c.b16 %v1418, %v1416
    %v1445 = vpack.c.b16 %v1419, %v1417
    %v1446 = vpack.c.b16 %v1422, %v1420
    %v1447 = vpack.c.b16 %v1423, %v1421
    %v1448 = vpack.c.b16 %v1426, %v1424
    %v1449 = vpack.c.b16 %v1427, %v1425
    %v1450 = vpack.c.b16 %v1430, %v1428
    %v1451 = vpack.c.b16 %v1431, %v1429
    %v1452 = vpack.c.b16 %v1434, %v1432
    %v1453 = vpack.c.b16 %v1435, %v1433
    %v1454 = vpack.c.b16 %v1438, %v1436
    %v1455 = vpack.c.b16 %v1439, %v1437
    %1472 = vmatprep.subr.bf16.mxu0 %v1441
    %1473 = vmatpush1.bf16.msra.mxu0 %v1440
    %1474 = vmatprep.subr.bf16.mxu0 %v1443
    %1475 = vmatpush1.bf16.msra.mxu0 %v1442
    %1476 = vmatprep.subr.bf16.mxu0 %v1445
    %1477 = vmatpush1.bf16.msra.mxu0 %v1444
    %1478 = vmatprep.subr.bf16.mxu0 %v1447
    %1479 = vmatpush1.bf16.msra.mxu0 %v1446
    %1480 = vmatprep.subr.bf16.mxu0 %v1449
    %1481 = vmatpush1.bf16.msra.mxu0 %v1448
    %1482 = vmatprep.subr.bf16.mxu0 %v1451
    %1483 = vmatpush1.bf16.msra.mxu0 %v1450
    %1484 = vmatprep.subr.bf16.mxu0 %v1453
    %1485 = vmatpush1.bf16.msra.mxu0 %v1452
    %1486 = vmatprep.subr.bf16.mxu0 %v1455
    %1487 = vmatpush1.bf16.msra.mxu0 %v1454
    %1488 = vmatprep.subr.bf16.mxu0 0
    %1489 = vmatpush1.bf16.msra.mxu0 0
    %1490 = vmatprep.subr.bf16.mxu0 0
    %1491 = vmatpush1.bf16.msra.mxu0 0
    %1492 = vmatprep.subr.bf16.mxu0 0
    %1493 = vmatpush1.bf16.msra.mxu0 0
    %1494 = vmatprep.subr.bf16.mxu0 0
    %1495 = vmatpush1.bf16.msra.mxu0 0
    %1496 = vmatprep.subr.bf16.mxu0 0
    %1497 = vmatpush1.bf16.msra.mxu0 0
    %1498 = vmatprep.subr.bf16.mxu0 0
    %1499 = vmatpush1.bf16.msra.mxu0 0
    %1500 = vmatprep.subr.bf16.mxu0 0
    %1501 = vmatpush1.bf16.msra.mxu0 0
    %1502 = vmatprep.subr.bf16.mxu0 0
    %1503 = vmatpush1.bf16.msra.mxu0 0
    %1504 = vmatprep.mubr.bf16.mxu0 0
    %1505 = vmatmul.mubr.bf16.gmra.mrb[0].mxu0 %v1214
    %v1506 = vpop.f32.mrb[0].mxu0
    %v1507 = vadd.f32 0.0, %v1506
    %v1508 = vpop.f32.mrb[0].mxu0
    %v1509 = vadd.f32 0.0, %v1508
    %v1510 = vpop.f32.mrb[0].mxu0
    %v1511 = vadd.f32 0.0, %v1510
    %v1512 = vpop.f32.mrb[0].mxu0
    %v1513 = vadd.f32 0.0, %v1512
    %1514 = vmatprep.mubr.bf16.mxu0 0
    %1515 = vmatmul.mubr.bf16.gmra.mrb[0].mxu0 %v1215
    %v1516 = vpop.f32.mrb[0].mxu0
    %v1517 = vadd.f32 0.0, %v1516
    %v1518 = vpop.f32.mrb[0].mxu0
    %v1519 = vadd.f32 0.0, %v1518
    %v1520 = vpop.f32.mrb[0].mxu0
    %v1521 = vadd.f32 0.0, %v1520
    %v1522 = vpop.f32.mrb[0].mxu0
    %v1523 = vadd.f32 0.0, %v1522
    %1524 = vmatprep.mubr.bf16.mxu0 0
    %1525 = vmatmul.mubr.bf16.gmra.mrb[0].mxu0 %v1216
    %v1526 = vpop.f32.mrb[0].mxu0
    %v1527 = vadd.f32 0.0, %v1526
    %v1528 = vpop.f32.mrb[0].mxu0
    %v1529 = vadd.f32 0.0, %v1528
    %v1530 = vpop.f32.mrb[0].mxu0
    %v1531 = vadd.f32 0.0, %v1530
    %v1532 = vpop.f32.mrb[0].mxu0
    %v1533 = vadd.f32 0.0, %v1532
    %1534 = vdwg.mxu0
    %v1535 = vxor.u32 %v1348, 2147483648
    %v1536 = vxor.u32 %v1350, 2147483648
    %v1537 = vxor.u32 %v1352, 2147483648
    %v1538 = vxor.u32 %v1354, 2147483648
    %v1539 = vxor.u32 %v1358, 2147483648
    %v1540 = vxor.u32 %v1360, 2147483648
    %v1541 = vxor.u32 %v1362, 2147483648
    %v1542 = vxor.u32 %v1364, 2147483648
    %v1543 = vxor.u32 %v1368, 2147483648
    %v1544 = vxor.u32 %v1370, 2147483648
    %v1545 = vxor.u32 %v1372, 2147483648
    %v1546 = vxor.u32 %v1374, 2147483648
    %v1547 = vmul.f32 %v1535, 1.442695
    %v1548 = vpow.pop %v1547
    %v1549 = vmul.f32 %v1536, 1.442695
    %v1550 = vpow.pop %v1549
    %v1551 = vmul.f32 %v1537, 1.442695
    %v1552 = vpow.pop %v1551
    %v1553 = vmul.f32 %v1538, 1.442695
    %v1554 = vpow.pop %v1553
    %v1555 = vmul.f32 %v1539, 1.442695
    %v1556 = vpow.pop %v1555
    %v1557 = vmul.f32 %v1540, 1.442695
    %v1558 = vpow.pop %v1557
    %v1559 = vmul.f32 %v1541, 1.442695
    %v1560 = vpow.pop %v1559
    %v1561 = vmul.f32 %v1542, 1.442695
    %v1562 = vpow.pop %v1561
    %v1563 = vmul.f32 %v1543, 1.442695
    %v1564 = vpow.pop %v1563
    %v1565 = vmul.f32 %v1544, 1.442695
    %v1566 = vpow.pop %v1565
    %v1567 = vmul.f32 %v1545, 1.442695
    %v1568 = vpow.pop %v1567
    %v1569 = vmul.f32 %v1546, 1.442695
    %v1570 = vpow.pop %v1569
    %v1571 = vadd.f32 %v1548, 1.0
    %v1572 = vadd.f32 %v1550, 1.0
    %v1573 = vadd.f32 %v1552, 1.0
    %v1574 = vadd.f32 %v1554, 1.0
    %v1575 = vadd.f32 %v1556, 1.0
    %v1576 = vadd.f32 %v1558, 1.0
    %v1577 = vadd.f32 %v1560, 1.0
    %v1578 = vadd.f32 %v1562, 1.0
    %v1579 = vadd.f32 %v1564, 1.0
    %v1580 = vadd.f32 %v1566, 1.0
    %v1581 = vadd.f32 %v1568, 1.0
    %v1582 = vadd.f32 %v1570, 1.0
    %v1583 = vrcp.pop %v1571
    %v1584 = vmul.f32 1.0, %v1583
    %v1585 = vrcp.pop %v1572
    %v1586 = vmul.f32 1.0, %v1585
    %v1587 = vrcp.pop %v1573
    %v1588 = vmul.f32 1.0, %v1587
    %v1589 = vrcp.pop %v1574
    %v1590 = vmul.f32 1.0, %v1589
    %v1591 = vrcp.pop %v1575
    %v1592 = vmul.f32 1.0, %v1591
    %v1593 = vrcp.pop %v1576
    %v1594 = vmul.f32 1.0, %v1593
    %v1595 = vrcp.pop %v1577
    %v1596 = vmul.f32 1.0, %v1595
    %v1597 = vrcp.pop %v1578
    %v1598 = vmul.f32 1.0, %v1597
    %v1599 = vrcp.pop %v1579
    %v1600 = vmul.f32 1.0, %v1599
    %v1601 = vrcp.pop %v1580
    %v1602 = vmul.f32 1.0, %v1601
    %v1603 = vrcp.pop %v1581
    %v1604 = vmul.f32 1.0, %v1603
    %v1605 = vrcp.pop %v1582
    %v1606 = vmul.f32 1.0, %v1605
    %v1607 = vmul.f32 %v1348, %v1584
    %v1608 = vmul.f32 %v1350, %v1586
    %v1609 = vmul.f32 %v1352, %v1588
    %v1610 = vmul.f32 %v1354, %v1590
    %v1611 = vmul.f32 %v1358, %v1592
    %v1612 = vmul.f32 %v1360, %v1594
    %v1613 = vmul.f32 %v1362, %v1596
    %v1614 = vmul.f32 %v1364, %v1598
    %v1615 = vmul.f32 %v1368, %v1600
    %v1616 = vmul.f32 %v1370, %v1602
    %v1617 = vmul.f32 %v1372, %v1604
    %v1618 = vmul.f32 %v1374, %v1606
    %v1619 = vmul.f32 %v1607, %v1507
    %v1620 = vmul.f32 %v1608, %v1509
    %v1621 = vmul.f32 %v1609, %v1511
    %v1622 = vmul.f32 %v1610, %v1513
    %v1623 = vmul.f32 %v1611, %v1517
    %v1624 = vmul.f32 %v1612, %v1519
    %v1625 = vmul.f32 %v1613, %v1521
    %v1626 = vmul.f32 %v1614, %v1523
    %v1627 = vmul.f32 %v1615, %v1527
    %v1628 = vmul.f32 %v1616, %v1529
    %v1629 = vmul.f32 %v1617, %v1531
    %v1630 = vmul.f32 %v1618, %v1533
    %v1631 = vpack.c.bf16 %v1621, %v1619
    %v1632 = vpack.c.bf16 %v1622, %v1620
    %v1633 = vpack.c.bf16 %v1625, %v1623
    %v1634 = vpack.c.bf16 %v1626, %v1624
    %v1635 = vpack.c.bf16 %v1629, %v1627
    %v1636 = vpack.c.bf16 %v1630, %v1628
    %v1637 = vld [vmem:[#allocation13] sm:$0xf]
    %v1638 = vld [vmem:[#allocation13 + $0x4] sm:$0xf]
    %v1639 = vld [vmem:[#allocation13 + $0x8] sm:$0xf]
    %v1640 = vld [vmem:[#allocation13 + $0xc] sm:$0xf]
    %v1641 = vld [vmem:[#allocation13 + $0x10] sm:$0xf]
    %v1642 = vld [vmem:[#allocation13 + $0x14] sm:$0xf]
    %v1643 = vld [vmem:[#allocation13 + $0x18] sm:$0xf]
    %v1644 = vld [vmem:[#allocation13 + $0x1c] sm:$0xf]
    %v1645 = vld [vmem:[#allocation13 + $0x20] sm:$0xf]
    %v1646 = vld [vmem:[#allocation13 + $0x24] sm:$0xf]
    %v1647 = vld [vmem:[#allocation13 + $0x28] sm:$0xf]
    %v1648 = vld [vmem:[#allocation13 + $0x2c] sm:$0xf]
    %v1649 = vld [vmem:[#allocation13 + $0x30] sm:$0xf]
    %v1650 = vld [vmem:[#allocation13 + $0x34] sm:$0xf]
    %v1651 = vld [vmem:[#allocation13 + $0x38] sm:$0xf]
    %v1652 = vld [vmem:[#allocation13 + $0x3c] sm:$0xf]
    %v1653 = vld [vmem:[#allocation13 + $0x40] sm:$0xf]
    %v1654 = vld [vmem:[#allocation13 + $0x44] sm:$0xf]
    %v1655 = vld [vmem:[#allocation13 + $0x48] sm:$0xf]
    %v1656 = vld [vmem:[#allocation13 + $0x4c] sm:$0xf]
    %v1657 = vld [vmem:[#allocation13 + $0x50] sm:$0xf]
    %v1658 = vld [vmem:[#allocation13 + $0x54] sm:$0xf]
    %v1659 = vld [vmem:[#allocation13 + $0x58] sm:$0xf]
    %v1660 = vld [vmem:[#allocation13 + $0x5c] sm:$0xf]
    %v1661 = vld [vmem:[#allocation13 + $0x60] sm:$0xf]
    %v1662 = vld [vmem:[#allocation13 + $0x64] sm:$0xf]
    %v1663 = vld [vmem:[#allocation13 + $0x68] sm:$0xf]
    %v1664 = vld [vmem:[#allocation13 + $0x6c] sm:$0xf]
    %v1665 = vld [vmem:[#allocation13 + $0x70] sm:$0xf]
    %v1666 = vld [vmem:[#allocation13 + $0x74] sm:$0xf]
    %v1667 = vld [vmem:[#allocation13 + $0x78] sm:$0xf]
    %v1668 = vld [vmem:[#allocation13 + $0x7c] sm:$0xf]
    %v1701 = vunpack.c.l.b16 %v1637
    %v1702 = vunpack.c.l.b16 %v1638
    %v1703 = vunpack.c.l.b16 %v1639
    %v1704 = vunpack.c.l.b16 %v1640
    %v1705 = vunpack.c.l.b16 %v1641
    %v1706 = vunpack.c.l.b16 %v1642
    %v1707 = vunpack.c.l.b16 %v1643
    %v1708 = vunpack.c.l.b16 %v1644
    %v1709 = vunpack.c.l.b16 %v1645
    %v1710 = vunpack.c.l.b16 %v1646
    %v1711 = vunpack.c.l.b16 %v1647
    %v1712 = vunpack.c.l.b16 %v1648
    %v1713 = vunpack.c.l.b16 %v1649
    %v1714 = vunpack.c.l.b16 %v1650
    %v1715 = vunpack.c.l.b16 %v1651
    %v1716 = vunpack.c.l.b16 %v1652
    %v1717 = vunpack.c.l.b16 %v1653
    %v1718 = vunpack.c.l.b16 %v1654
    %v1719 = vunpack.c.l.b16 %v1655
    %v1720 = vunpack.c.l.b16 %v1656
    %v1721 = vunpack.c.l.b16 %v1657
    %v1722 = vunpack.c.l.b16 %v1658
    %v1723 = vunpack.c.l.b16 %v1659
    %v1724 = vunpack.c.l.b16 %v1660
    %v1725 = vunpack.c.l.b16 %v1661
    %v1726 = vunpack.c.l.b16 %v1662
    %v1727 = vunpack.c.l.b16 %v1663
    %v1728 = vunpack.c.l.b16 %v1664
    %v1729 = vunpack.c.l.b16 %v1665
    %v1730 = vunpack.c.l.b16 %v1666
    %v1731 = vunpack.c.l.b16 %v1667
    %v1732 = vunpack.c.l.b16 %v1668
    %v1733 = vpack.c.b16 %v1702, %v1701
    %v1734 = vpack.c.b16 %v1704, %v1703
    %v1735 = vpack.c.b16 %v1706, %v1705
    %v1736 = vpack.c.b16 %v1708, %v1707
    %v1737 = vpack.c.b16 %v1710, %v1709
    %v1738 = vpack.c.b16 %v1712, %v1711
    %v1739 = vpack.c.b16 %v1714, %v1713
    %v1740 = vpack.c.b16 %v1716, %v1715
    %v1741 = vpack.c.b16 %v1718, %v1717
    %v1742 = vpack.c.b16 %v1720, %v1719
    %v1743 = vpack.c.b16 %v1722, %v1721
    %v1744 = vpack.c.b16 %v1724, %v1723
    %v1745 = vpack.c.b16 %v1726, %v1725
    %v1746 = vpack.c.b16 %v1728, %v1727
    %v1747 = vpack.c.b16 %v1730, %v1729
    %v1748 = vpack.c.b16 %v1732, %v1731
    %1765 = vmatprep.subr.bf16.mxu0 0
    %1766 = vmatpush1.bf16.msra.mxu0 %v1733
    %1767 = vmatprep.subr.bf16.mxu0 0
    %1768 = vmatpush1.bf16.msra.mxu0 %v1734
    %1769 = vmatprep.subr.bf16.mxu0 0
    %1770 = vmatpush1.bf16.msra.mxu0 %v1735
    %1771 = vmatprep.subr.bf16.mxu0 0
    %1772 = vmatpush1.bf16.msra.mxu0 %v1736
    %1773 = vmatprep.subr.bf16.mxu0 0
    %1774 = vmatpush1.bf16.msra.mxu0 %v1737
    %1775 = vmatprep.subr.bf16.mxu0 0
    %1776 = vmatpush1.bf16.msra.mxu0 %v1738
    %1777 = vmatprep.subr.bf16.mxu0 0
    %1778 = vmatpush1.bf16.msra.mxu0 %v1739
    %1779 = vmatprep.subr.bf16.mxu0 0
    %1780 = vmatpush1.bf16.msra.mxu0 %v1740
    %1781 = vmatprep.subr.bf16.mxu0 0
    %1782 = vmatpush1.bf16.msra.mxu0 %v1741
    %1783 = vmatprep.subr.bf16.mxu0 0
    %1784 = vmatpush1.bf16.msra.mxu0 %v1742
    %1785 = vmatprep.subr.bf16.mxu0 0
    %1786 = vmatpush1.bf16.msra.mxu0 %v1743
    %1787 = vmatprep.subr.bf16.mxu0 0
    %1788 = vmatpush1.bf16.msra.mxu0 %v1744
    %1789 = vmatprep.subr.bf16.mxu0 0
    %1790 = vmatpush1.bf16.msra.mxu0 %v1745
    %1791 = vmatprep.subr.bf16.mxu0 0
    %1792 = vmatpush1.bf16.msra.mxu0 %v1746
    %1793 = vmatprep.subr.bf16.mxu0 0
    %1794 = vmatpush1.bf16.msra.mxu0 %v1747
    %1795 = vmatprep.subr.bf16.mxu0 0
    %1796 = vmatpush1.bf16.msra.mxu0 %v1748
    %1797 = vmatprep.mubr.bf16.mxu0 %v1632
    %1798 = vmatmul.mubr.bf16.gmra.mrb[0].mxu0 %v1631
    %v1799 = vpop.f32.mrb[0].mxu0
    %v1800 = vadd.f32 0.0, %v1799
    %v1801 = vpop.f32.mrb[0].mxu0
    %v1802 = vpop.f32.mrb[0].mxu0
    %v1803 = vadd.f32 0.0, %v1802
    %v1804 = vpop.f32.mrb[0].mxu0
    %1805 = vmatprep.mubr.bf16.mxu0 %v1634
    %1806 = vmatmul.mubr.bf16.gmra.mrb[0].mxu0 %v1633
    %v1807 = vpop.f32.mrb[0].mxu0
    %v1808 = vadd.f32 0.0, %v1807
    %v1809 = vpop.f32.mrb[0].mxu0
    %v1810 = vpop.f32.mrb[0].mxu0
    %v1811 = vadd.f32 0.0, %v1810
    %v1812 = vpop.f32.mrb[0].mxu0
    %1813 = vmatprep.mubr.bf16.mxu0 %v1636
    %1814 = vmatmul.mubr.bf16.gmra.mrb[0].mxu0 %v1635
    %v1815 = vpop.f32.mrb[0].mxu0
    %v1816 = vadd.f32 0.0, %v1815
    %v1817 = vpop.f32.mrb[0].mxu0
    %v1818 = vpop.f32.mrb[0].mxu0
    %v1819 = vadd.f32 0.0, %v1818
    %v1820 = vpop.f32.mrb[0].mxu0
    %1821 = vdwg.mxu0
    %v1822 = vadd.f32 %v1153, %v1800
    %v1823 = vadd.f32 %v1154, %v1803
    %v1824 = vadd.f32 %v1155, %v1808
    %v1825 = vadd.f32 %v1156, %v1811
    %v1826 = vadd.f32 %v1157, %v1816
    %v1827 = vadd.f32 %v1158, %v1819
    %v1828 = vmul.f32 %v1822, %v1822
    %v1829 = vmul.f32 %v1823, %v1823
    %v1830 = vmul.f32 %v1824, %v1824
    %v1831 = vmul.f32 %v1825, %v1825
    %v1832 = vmul.f32 %v1826, %v1826
    %v1833 = vmul.f32 %v1827, %v1827
    %1834 = vadd.xlane.f32.xlu0 %v1828
    %v1835 = vpop.xlane.xlu0 %1834
    %1836 = vadd.xlane.f32.xlu0 %v1829
    %v1837 = vpop.xlane.xlu0 %1836
    %1838 = vadd.xlane.f32.xlu0 %v1830
    %v1839 = vpop.xlane.xlu0 %1838
    %1840 = vadd.xlane.f32.xlu0 %v1831
    %v1841 = vpop.xlane.xlu0 %1840
    %1842 = vadd.xlane.f32.xlu0 %v1832
    %v1843 = vpop.xlane.xlu0 %1842
    %1844 = vadd.xlane.f32.xlu0 %v1833
    %v1845 = vpop.xlane.xlu0 %1844
    %v1846 = vmul.f32 %v1835, %v313
    %v1847 = vmul.f32 %v1837, %v313
    %v1848 = vmul.f32 %v1839, %v313
    %v1849 = vmul.f32 %v1841, %v313
    %v1850 = vmul.f32 %v1843, %v313
    %v1851 = vmul.f32 %v1845, %v313
    %v1852 = vadd.f32 %v1846, 1e-06
    %v1853 = vadd.f32 %v1847, 1e-06
    %v1854 = vadd.f32 %v1848, 1e-06
    %v1855 = vadd.f32 %v1849, 1e-06
    %v1856 = vadd.f32 %v1850, 1e-06
    %v1857 = vadd.f32 %v1851, 1e-06
    %v1858 = vrsqrt.pop %v1852
    %v1859 = vrsqrt.pop %v1853
    %v1860 = vrsqrt.pop %v1854
    %v1861 = vrsqrt.pop %v1855
    %v1862 = vrsqrt.pop %v1856
    %v1863 = vrsqrt.pop %v1857
    %v1864 = vmul.f32 %v1822, %v1858
    %v1865 = vmul.f32 %v1823, %v1859
    %v1866 = vmul.f32 %v1824, %v1860
    %v1867 = vmul.f32 %v1825, %v1861
    %v1868 = vmul.f32 %v1826, %v1862
    %v1869 = vmul.f32 %v1827, %v1863
    %s1870 = scalar_lea.vmem %s2, 1
    %v1871 = vld [vmem:[%s1870] sm:$0x1]
    %v1873 = vlaneseq
    %v1874 = vshrl.u32 %v1873, 7
    %v1875 = vsub.s32 0, %v1874
    %v1876 = vrot.slane %v1871, %v1875
    %v1878 = vmul.f32 %v1864, %v1876
    %v1879 = vmul.f32 %v1865, %v1876
    %v1880 = vmul.f32 %v1866, %v1876
    %v1881 = vmul.f32 %v1867, %v1876
    %v1882 = vmul.f32 %v1868, %v1876
    %v1883 = vmul.f32 %v1869, %v1876
    %v1884 = vpack.c.bf16 %v1879, %v1878
    %v1885 = vpack.c.bf16 %v1881, %v1880
    %v1886 = vpack.c.bf16 %v1883, %v1882
    %s1887 = scalar_lea.vmem %s3, 64
    %v1888 = vld [vmem:[%s1887] sm:$0xf]
    %v1889 = vld [vmem:[%s1887 + $0x4] sm:$0xf]
    %v1890 = vld [vmem:[%s1887 + $0x8] sm:$0xf]
    %v1891 = vld [vmem:[%s1887 + $0xc] sm:$0xf]
    %v1892 = vld [vmem:[%s1887 + $0x10] sm:$0xf]
    %v1893 = vld [vmem:[%s1887 + $0x14] sm:$0xf]
    %v1894 = vld [vmem:[%s1887 + $0x18] sm:$0xf]
    %v1895 = vld [vmem:[%s1887 + $0x1c] sm:$0xf]
    %v1896 = vld [vmem:[%s1887 + $0x20] sm:$0xf]
    %v1897 = vld [vmem:[%s1887 + $0x24] sm:$0xf]
    %v1898 = vld [vmem:[%s1887 + $0x28] sm:$0xf]
    %v1899 = vld [vmem:[%s1887 + $0x2c] sm:$0xf]
    %v1900 = vld [vmem:[%s1887 + $0x30] sm:$0xf]
    %v1901 = vld [vmem:[%s1887 + $0x34] sm:$0xf]
    %v1902 = vld [vmem:[%s1887 + $0x38] sm:$0xf]
    %v1903 = vld [vmem:[%s1887 + $0x3c] sm:$0xf]
    %v1920 = vunpack.c.l.b16 %v1888
    %v1921 = vunpack.c.l.b16 %v1889
    %v1922 = vunpack.c.l.b16 %v1890
    %v1923 = vunpack.c.l.b16 %v1891
    %v1924 = vunpack.c.l.b16 %v1892
    %v1925 = vunpack.c.l.b16 %v1893
    %v1926 = vunpack.c.l.b16 %v1894
    %v1927 = vunpack.c.l.b16 %v1895
    %v1928 = vunpack.c.l.b16 %v1896
    %v1929 = vunpack.c.l.b16 %v1897
    %v1930 = vunpack.c.l.b16 %v1898
    %v1931 = vunpack.c.l.b16 %v1899
    %v1932 = vunpack.c.l.b16 %v1900
    %v1933 = vunpack.c.l.b16 %v1901
    %v1934 = vunpack.c.l.b16 %v1902
    %v1935 = vunpack.c.l.b16 %v1903
    %v1936 = vpack.c.b16 %v1921, %v1920
    %v1937 = vpack.c.b16 %v1923, %v1922
    %v1938 = vpack.c.b16 %v1925, %v1924
    %v1939 = vpack.c.b16 %v1927, %v1926
    %v1940 = vpack.c.b16 %v1929, %v1928
    %v1941 = vpack.c.b16 %v1931, %v1930
    %v1942 = vpack.c.b16 %v1933, %v1932
    %v1943 = vpack.c.b16 %v1935, %v1934
    %1952 = vmatprep.subr.bf16.mxu0 0
    %1953 = vmatpush1.bf16.msra.mxu0 %v1936
    %1954 = vmatprep.subr.bf16.mxu0 0
    %1955 = vmatpush1.bf16.msra.mxu0 %v1937
    %1956 = vmatprep.subr.bf16.mxu0 0
    %1957 = vmatpush1.bf16.msra.mxu0 %v1938
    %1958 = vmatprep.subr.bf16.mxu0 0
    %1959 = vmatpush1.bf16.msra.mxu0 %v1939
    %1960 = vmatprep.subr.bf16.mxu0 0
    %1961 = vmatpush1.bf16.msra.mxu0 %v1940
    %1962 = vmatprep.subr.bf16.mxu0 0
    %1963 = vmatpush1.bf16.msra.mxu0 %v1941
    %1964 = vmatprep.subr.bf16.mxu0 0
    %1965 = vmatpush1.bf16.msra.mxu0 %v1942
    %1966 = vmatprep.subr.bf16.mxu0 0
    %1967 = vmatpush1.bf16.msra.mxu0 %v1943
    %1968 = vmatprep.subr.bf16.mxu0 0
    %1969 = vmatpush1.bf16.msra.mxu0 0
    %1970 = vmatprep.subr.bf16.mxu0 0
    %1971 = vmatpush1.bf16.msra.mxu0 0
    %1972 = vmatprep.subr.bf16.mxu0 0
    %1973 = vmatpush1.bf16.msra.mxu0 0
    %1974 = vmatprep.subr.bf16.mxu0 0
    %1975 = vmatpush1.bf16.msra.mxu0 0
    %1976 = vmatprep.subr.bf16.mxu0 0
    %1977 = vmatpush1.bf16.msra.mxu0 0
    %1978 = vmatprep.subr.bf16.mxu0 0
    %1979 = vmatpush1.bf16.msra.mxu0 0
    %1980 = vmatprep.subr.bf16.mxu0 0
    %1981 = vmatpush1.bf16.msra.mxu0 0
    %1982 = vmatprep.subr.bf16.mxu0 0
    %1983 = vmatpush1.bf16.msra.mxu0 0
    %1984 = vmatprep.mubr.bf16.mxu0 0
    %1985 = vmatmul.mubr.bf16.gmra.mrb[0].mxu0 %v1884
    %v1986 = vpop.f32.mrb[0].mxu0
    %v1987 = vadd.f32 0.0, %v1986
    %v1988 = vpop.f32.mrb[0].mxu0
    %v1989 = vpop.f32.mrb[0].mxu0
    %v1990 = vadd.f32 0.0, %v1989
    %v1991 = vpop.f32.mrb[0].mxu0
    %1992 = vmatprep.mubr.bf16.mxu0 0
    %1993 = vmatmul.mubr.bf16.gmra.mrb[0].mxu0 %v1885
    %v1994 = vpop.f32.mrb[0].mxu0
    %v1995 = vadd.f32 0.0, %v1994
    %v1996 = vpop.f32.mrb[0].mxu0
    %v1997 = vpop.f32.mrb[0].mxu0
    %v1998 = vadd.f32 0.0, %v1997
    %v1999 = vpop.f32.mrb[0].mxu0
    %2000 = vmatprep.mubr.bf16.mxu0 0
    %2001 = vmatmul.mubr.bf16.gmra.mrb[0].mxu0 %v1886
    %v2002 = vpop.f32.mrb[0].mxu0
    %v2003 = vadd.f32 0.0, %v2002
    %v2004 = vpop.f32.mrb[0].mxu0
    %v2005 = vpop.f32.mrb[0].mxu0
    %v2006 = vadd.f32 0.0, %v2005
    %v2007 = vpop.f32.mrb[0].mxu0
    %2008 = vdwg.mxu0
    %s2009 = scalar_lea.vmem [#allocation2], 64
    %v2010 = vld [vmem:[%s2009] sm:$0xf]
    %v2011 = vld [vmem:[%s2009 + $0x4] sm:$0xf]
    %v2012 = vld [vmem:[%s2009 + $0x8] sm:$0xf]
    %v2013 = vld [vmem:[%s2009 + $0xc] sm:$0xf]
    %v2014 = vld [vmem:[%s2009 + $0x10] sm:$0xf]
    %v2015 = vld [vmem:[%s2009 + $0x14] sm:$0xf]
    %v2016 = vld [vmem:[%s2009 + $0x18] sm:$0xf]
    %v2017 = vld [vmem:[%s2009 + $0x1c] sm:$0xf]
    %v2018 = vld [vmem:[%s2009 + $0x20] sm:$0xf]
    %v2019 = vld [vmem:[%s2009 + $0x24] sm:$0xf]
    %v2020 = vld [vmem:[%s2009 + $0x28] sm:$0xf]
    %v2021 = vld [vmem:[%s2009 + $0x2c] sm:$0xf]
    %v2022 = vld [vmem:[%s2009 + $0x30] sm:$0xf]
    %v2023 = vld [vmem:[%s2009 + $0x34] sm:$0xf]
    %v2024 = vld [vmem:[%s2009 + $0x38] sm:$0xf]
    %v2025 = vld [vmem:[%s2009 + $0x3c] sm:$0xf]
    %v2042 = vunpack.c.l.b16 %v2010
    %v2043 = vunpack.c.l.b16 %v2011
    %v2044 = vunpack.c.l.b16 %v2012
    %v2045 = vunpack.c.l.b16 %v2013
    %v2046 = vunpack.c.l.b16 %v2014
    %v2047 = vunpack.c.l.b16 %v2015
    %v2048 = vunpack.c.l.b16 %v2016
    %v2049 = vunpack.c.l.b16 %v2017
    %v2050 = vunpack.c.l.b16 %v2018
    %v2051 = vunpack.c.l.b16 %v2019
    %v2052 = vunpack.c.l.b16 %v2020
    %v2053 = vunpack.c.l.b16 %v2021
    %v2054 = vunpack.c.l.b16 %v2022
    %v2055 = vunpack.c.l.b16 %v2023
    %v2056 = vunpack.c.l.b16 %v2024
    %v2057 = vunpack.c.l.b16 %v2025
    %v2058 = vpack.c.b16 %v2043, %v2042
    %v2059 = vpack.c.b16 %v2045, %v2044
    %v2060 = vpack.c.b16 %v2047, %v2046
    %v2061 = vpack.c.b16 %v2049, %v2048
    %v2062 = vpack.c.b16 %v2051, %v2050
    %v2063 = vpack.c.b16 %v2053, %v2052
    %v2064 = vpack.c.b16 %v2055, %v2054
    %v2065 = vpack.c.b16 %v2057, %v2056
    %2074 = vmatprep.subr.bf16.mxu0 0
    %2075 = vmatpush1.bf16.msra.mxu0 %v2058
    %2076 = vmatprep.subr.bf16.mxu0 0
    %2077 = vmatpush1.bf16.msra.mxu0 %v2059
    %2078 = vmatprep.subr.bf16.mxu0 0
    %2079 = vmatpush1.bf16.msra.mxu0 %v2060
    %2080 = vmatprep.subr.bf16.mxu0 0
    %2081 = vmatpush1.bf16.msra.mxu0 %v2061
    %2082 = vmatprep.subr.bf16.mxu0 0
    %2083 = vmatpush1.bf16.msra.mxu0 %v2062
    %2084 = vmatprep.subr.bf16.mxu0 0
    %2085 = vmatpush1.bf16.msra.mxu0 %v2063
    %2086 = vmatprep.subr.bf16.mxu0 0
    %2087 = vmatpush1.bf16.msra.mxu0 %v2064
    %2088 = vmatprep.subr.bf16.mxu0 0
    %2089 = vmatpush1.bf16.msra.mxu0 %v2065
    %2090 = vmatprep.subr.bf16.mxu0 0
    %2091 = vmatpush1.bf16.msra.mxu0 0
    %2092 = vmatprep.subr.bf16.mxu0 0
    %2093 = vmatpush1.bf16.msra.mxu0 0
    %2094 = vmatprep.subr.bf16.mxu0 0
    %2095 = vmatpush1.bf16.msra.mxu0 0
    %2096 = vmatprep.subr.bf16.mxu0 0
    %2097 = vmatpush1.bf16.msra.mxu0 0
    %2098 = vmatprep.subr.bf16.mxu0 0
    %2099 = vmatpush1.bf16.msra.mxu0 0
    %2100 = vmatprep.subr.bf16.mxu0 0
    %2101 = vmatpush1.bf16.msra.mxu0 0
    %2102 = vmatprep.subr.bf16.mxu0 0
    %2103 = vmatpush1.bf16.msra.mxu0 0
    %2104 = vmatprep.subr.bf16.mxu0 0
    %2105 = vmatpush1.bf16.msra.mxu0 0
    %2106 = vmatprep.mubr.bf16.mxu0 0
    %2107 = vmatmul.mubr.bf16.gmra.mrb[0].mxu0 %v1884
    %v2108 = vpop.f32.mrb[0].mxu0
    %v2109 = vadd.f32 0.0, %v2108
    %v2110 = vpop.f32.mrb[0].mxu0
    %v2111 = vpop.f32.mrb[0].mxu0
    %v2112 = vadd.f32 0.0, %v2111
    %v2113 = vpop.f32.mrb[0].mxu0
    %2114 = vmatprep.mubr.bf16.mxu0 0
    %2115 = vmatmul.mubr.bf16.gmra.mrb[0].mxu0 %v1885
    %v2116 = vpop.f32.mrb[0].mxu0
    %v2117 = vadd.f32 0.0, %v2116
    %v2118 = vpop.f32.mrb[0].mxu0
    %v2119 = vpop.f32.mrb[0].mxu0
    %v2120 = vadd.f32 0.0, %v2119
    %v2121 = vpop.f32.mrb[0].mxu0
    %2122 = vmatprep.mubr.bf16.mxu0 0
    %2123 = vmatmul.mubr.bf16.gmra.mrb[0].mxu0 %v1886
    %v2124 = vpop.f32.mrb[0].mxu0
    %v2125 = vadd.f32 0.0, %v2124
    %v2126 = vpop.f32.mrb[0].mxu0
    %v2127 = vpop.f32.mrb[0].mxu0
    %v2128 = vadd.f32 0.0, %v2127
    %v2129 = vpop.f32.mrb[0].mxu0
    %2130 = vdwg.mxu0
    %s2131 = scalar_lea.vmem [#allocation5], 64
    %v2132 = vld [vmem:[%s2131] sm:$0xf]
    %v2133 = vld [vmem:[%s2131 + $0x4] sm:$0xf]
    %v2134 = vld [vmem:[%s2131 + $0x8] sm:$0xf]
    %v2135 = vld [vmem:[%s2131 + $0xc] sm:$0xf]
    %v2136 = vld [vmem:[%s2131 + $0x10] sm:$0xf]
    %v2137 = vld [vmem:[%s2131 + $0x14] sm:$0xf]
    %v2138 = vld [vmem:[%s2131 + $0x18] sm:$0xf]
    %v2139 = vld [vmem:[%s2131 + $0x1c] sm:$0xf]
    %v2140 = vld [vmem:[%s2131 + $0x20] sm:$0xf]
    %v2141 = vld [vmem:[%s2131 + $0x24] sm:$0xf]
    %v2142 = vld [vmem:[%s2131 + $0x28] sm:$0xf]
    %v2143 = vld [vmem:[%s2131 + $0x2c] sm:$0xf]
    %v2144 = vld [vmem:[%s2131 + $0x30] sm:$0xf]
    %v2145 = vld [vmem:[%s2131 + $0x34] sm:$0xf]
    %v2146 = vld [vmem:[%s2131 + $0x38] sm:$0xf]
    %v2147 = vld [vmem:[%s2131 + $0x3c] sm:$0xf]
    %v2164 = vunpack.c.l.b16 %v2132
    %v2165 = vunpack.c.l.b16 %v2133
    %v2166 = vunpack.c.l.b16 %v2134
    %v2167 = vunpack.c.l.b16 %v2135
    %v2168 = vunpack.c.l.b16 %v2136
    %v2169 = vunpack.c.l.b16 %v2137
    %v2170 = vunpack.c.l.b16 %v2138
    %v2171 = vunpack.c.l.b16 %v2139
    %v2172 = vunpack.c.l.b16 %v2140
    %v2173 = vunpack.c.l.b16 %v2141
    %v2174 = vunpack.c.l.b16 %v2142
    %v2175 = vunpack.c.l.b16 %v2143
    %v2176 = vunpack.c.l.b16 %v2144
    %v2177 = vunpack.c.l.b16 %v2145
    %v2178 = vunpack.c.l.b16 %v2146
    %v2179 = vunpack.c.l.b16 %v2147
    %v2180 = vpack.c.b16 %v2165, %v2164
    %v2181 = vpack.c.b16 %v2167, %v2166
    %v2182 = vpack.c.b16 %v2169, %v2168
    %v2183 = vpack.c.b16 %v2171, %v2170
    %v2184 = vpack.c.b16 %v2173, %v2172
    %v2185 = vpack.c.b16 %v2175, %v2174
    %v2186 = vpack.c.b16 %v2177, %v2176
    %v2187 = vpack.c.b16 %v2179, %v2178
    %2196 = vmatprep.subr.bf16.mxu0 0
    %2197 = vmatpush1.bf16.msra.mxu0 %v2180
    %2198 = vmatprep.subr.bf16.mxu0 0
    %2199 = vmatpush1.bf16.msra.mxu0 %v2181
    %2200 = vmatprep.subr.bf16.mxu0 0
    %2201 = vmatpush1.bf16.msra.mxu0 %v2182
    %2202 = vmatprep.subr.bf16.mxu0 0
    %2203 = vmatpush1.bf16.msra.mxu0 %v2183
    %2204 = vmatprep.subr.bf16.mxu0 0
    %2205 = vmatpush1.bf16.msra.mxu0 %v2184
    %2206 = vmatprep.subr.bf16.mxu0 0
    %2207 = vmatpush1.bf16.msra.mxu0 %v2185
    %2208 = vmatprep.subr.bf16.mxu0 0
    %2209 = vmatpush1.bf16.msra.mxu0 %v2186
    %2210 = vmatprep.subr.bf16.mxu0 0
    %2211 = vmatpush1.bf16.msra.mxu0 %v2187
    %2212 = vmatprep.subr.bf16.mxu0 0
    %2213 = vmatpush1.bf16.msra.mxu0 0
    %2214 = vmatprep.subr.bf16.mxu0 0
    %2215 = vmatpush1.bf16.msra.mxu0 0
    %2216 = vmatprep.subr.bf16.mxu0 0
    %2217 = vmatpush1.bf16.msra.mxu0 0
    %2218 = vmatprep.subr.bf16.mxu0 0
    %2219 = vmatpush1.bf16.msra.mxu0 0
    %2220 = vmatprep.subr.bf16.mxu0 0
    %2221 = vmatpush1.bf16.msra.mxu0 0
    %2222 = vmatprep.subr.bf16.mxu0 0
    %2223 = vmatpush1.bf16.msra.mxu0 0
    %2224 = vmatprep.subr.bf16.mxu0 0
    %2225 = vmatpush1.bf16.msra.mxu0 0
    %2226 = vmatprep.subr.bf16.mxu0 0
    %2227 = vmatpush1.bf16.msra.mxu0 0
    %2228 = vmatprep.mubr.bf16.mxu0 0
    %2229 = vmatmul.mubr.bf16.gmra.mrb[0].mxu0 %v1884
    %v2230 = vpop.f32.mrb[0].mxu0
    %v2231 = vadd.f32 0.0, %v2230
    %v2232 = vpop.f32.mrb[0].mxu0
    %v2233 = vpop.f32.mrb[0].mxu0
    %v2234 = vadd.f32 0.0, %v2233
    %v2235 = vpop.f32.mrb[0].mxu0
    %2236 = vmatprep.mubr.bf16.mxu0 0
    %2237 = vmatmul.mubr.bf16.gmra.mrb[0].mxu0 %v1885
    %v2238 = vpop.f32.mrb[0].mxu0
    %v2239 = vadd.f32 0.0, %v2238
    %v2240 = vpop.f32.mrb[0].mxu0
    %v2241 = vpop.f32.mrb[0].mxu0
    %v2242 = vadd.f32 0.0, %v2241
    %v2243 = vpop.f32.mrb[0].mxu0
    %2244 = vmatprep.mubr.bf16.mxu0 0
    %2245 = vmatmul.mubr.bf16.gmra.mrb[0].mxu0 %v1886
    %v2246 = vpop.f32.mrb[0].mxu0
    %v2247 = vadd.f32 0.0, %v2246
    %v2248 = vpop.f32.mrb[0].mxu0
    %v2249 = vpop.f32.mrb[0].mxu0
    %v2250 = vadd.f32 0.0, %v2249
    %v2251 = vpop.f32.mrb[0].mxu0
    %2252 = vdwg.mxu0
    %v2253 = vmul.f32 %v1987, 0.088388346
    %v2254 = vmul.f32 %v1990, 0.088388346
    %v2255 = vmul.f32 %v1995, 0.088388346
    %v2256 = vmul.f32 %v1998, 0.088388346
    %v2257 = vmul.f32 %v2003, 0.088388346
    %v2258 = vmul.f32 %v2006, 0.088388346
    %v2259 = vpack.c.bf16 %v2254, %v2253
    %v2260 = vpack.c.bf16 %v2255, %v2255
    %v2261 = vpack.c.bf16 %v2257, %v2256
    %v2262 = vpack.c.bf16 %v2258, %v2258
    %v2263 = vpack.c.bf16 %v2112, %v2109
    %v2264 = vpack.c.bf16 %v2117, %v2117
    %v2265 = vpack.c.bf16 %v2125, %v2120
    %v2266 = vpack.c.bf16 %v2128, %v2128
    %v2267 = vpack.c.bf16 %v2234, %v2231
    %v2268 = vpack.c.bf16 %v2239, %v2239
    %v2269 = vpack.c.bf16 %v2247, %v2242
    %v2270 = vpack.c.bf16 %v2250, %v2250
    %2271 = vmatprep.subr.bf16.mxu0 0
    %2272 = vmatpush1.bf16.xpose.msra.mxu0 %v2263
    %2273 = vmatprep.subr.bf16.mxu0 0
    %2274 = vmatpush1.bf16.xpose.msra.mxu0 %v2264
    %2275 = vmatprep.subr.bf16.mxu0 0
    %2276 = vmatpush1.bf16.xpose.msra.mxu0 0
    %2277 = vmatprep.subr.bf16.mxu0 0
    %2278 = vmatpush1.bf16.xpose.msra.mxu0 0
    %2279 = vmatprep.subr.bf16.mxu0 0
    %2280 = vmatpush1.bf16.xpose.msra.mxu0 0
    %2281 = vmatprep.subr.bf16.mxu0 0
    %2282 = vmatpush1.bf16.xpose.msra.mxu0 0
    %2283 = vmatprep.subr.bf16.mxu0 0
    %2284 = vmatpush1.bf16.xpose.msra.mxu0 0
    %2285 = vmatprep.subr.bf16.mxu0 0
    %2286 = vmatpush1.bf16.xpose.msra.mxu0 0
    %2287 = vmatprep.subr.bf16.mxu0 0
    %2288 = vmatpush1.bf16.xpose.msra.mxu0 0
    %2289 = vmatprep.subr.bf16.mxu0 0
    %2290 = vmatpush1.bf16.xpose.msra.mxu0 0
    %2291 = vmatprep.subr.bf16.mxu0 0
    %2292 = vmatpush1.bf16.xpose.msra.mxu0 0
    %2293 = vmatprep.subr.bf16.mxu0 0
    %2294 = vmatpush1.bf16.xpose.msra.mxu0 0
    %2295 = vmatprep.subr.bf16.mxu0 0
    %2296 = vmatpush1.bf16.xpose.msra.mxu0 0
    %2297 = vmatprep.subr.bf16.mxu0 0
    %2298 = vmatpush1.bf16.xpose.msra.mxu0 0
    %2299 = vmatprep.subr.bf16.mxu0 0
    %2300 = vmatpush1.bf16.xpose.msra.mxu0 0
    %2301 = vmatprep.subr.bf16.mxu0 0
    %2302 = vmatpush1.bf16.xpose.msra.mxu0 0
    %2303 = vmatprep.mubr.bf16.mxu0 0
    %2304 = vmatmul.mubr.bf16.gmra.mrb[0].mxu0 %v2259
    %v2305 = vpop.f32.mrb[0].mxu0
    %v2306 = vadd.f32 0.0, %v2305
    %v2307 = vpop.f32.mrb[0].mxu0
    %v2308 = vpop.f32.mrb[0].mxu0
    %v2309 = vadd.f32 0.0, %v2308
    %v2310 = vpop.f32.mrb[0].mxu0
    %2311 = vmatprep.mubr.bf16.mxu0 0
    %2312 = vmatmul.mubr.bf16.gmra.mrb[0].mxu0 %v2260
    %v2313 = vpop.f32.mrb[0].mxu0
    %v2314 = vadd.f32 0.0, %v2313
    %v2315 = vpop.f32.mrb[0].mxu0
    %v2316 = vpop.f32.mrb[0].mxu0
    %v2317 = vpop.f32.mrb[0].mxu0
    %2318 = vdwg.mxu0
    %2319 = vmatprep.subr.bf16.mxu0 0
    %2320 = vmatpush1.bf16.xpose.msra.mxu0 %v2265
    %2321 = vmatprep.subr.bf16.mxu0 0
    %2322 = vmatpush1.bf16.xpose.msra.mxu0 %v2266
    %2323 = vmatprep.subr.bf16.mxu0 0
    %2324 = vmatpush1.bf16.xpose.msra.mxu0 0
    %2325 = vmatprep.subr.bf16.mxu0 0
    %2326 = vmatpush1.bf16.xpose.msra.mxu0 0
    %2327 = vmatprep.subr.bf16.mxu0 0
    %2328 = vmatpush1.bf16.xpose.msra.mxu0 0
    %2329 = vmatprep.subr.bf16.mxu0 0
    %2330 = vmatpush1.bf16.xpose.msra.mxu0 0
    %2331 = vmatprep.subr.bf16.mxu0 0
    %2332 = vmatpush1.bf16.xpose.msra.mxu0 0
    %2333 = vmatprep.subr.bf16.mxu0 0
    %2334 = vmatpush1.bf16.xpose.msra.mxu0 0
    %2335 = vmatprep.subr.bf16.mxu0 0
    %2336 = vmatpush1.bf16.xpose.msra.mxu0 0
    %2337 = vmatprep.subr.bf16.mxu0 0
    %2338 = vmatpush1.bf16.xpose.msra.mxu0 0
    %2339 = vmatprep.subr.bf16.mxu0 0
    %2340 = vmatpush1.bf16.xpose.msra.mxu0 0
    %2341 = vmatprep.subr.bf16.mxu0 0
    %2342 = vmatpush1.bf16.xpose.msra.mxu0 0
    %2343 = vmatprep.subr.bf16.mxu0 0
    %2344 = vmatpush1.bf16.xpose.msra.mxu0 0
    %2345 = vmatprep.subr.bf16.mxu0 0
    %2346 = vmatpush1.bf16.xpose.msra.mxu0 0
    %2347 = vmatprep.subr.bf16.mxu0 0
    %2348 = vmatpush1.bf16.xpose.msra.mxu0 0
    %2349 = vmatprep.subr.bf16.mxu0 0
    %2350 = vmatpush1.bf16.xpose.msra.mxu0 0
    %2351 = vmatprep.mubr.bf16.mxu0 0
    %2352 = vmatmul.mubr.bf16.gmra.mrb[0].mxu0 %v2261
    %v2353 = vpop.f32.mrb[0].mxu0
    %v2354 = vadd.f32 0.0, %v2353
    %v2355 = vpop.f32.mrb[0].mxu0
    %v2356 = vpop.f32.mrb[0].mxu0
    %v2357 = vadd.f32 0.0, %v2356
    %v2358 = vpop.f32.mrb[0].mxu0
    %2359 = vmatprep.mubr.bf16.mxu0 0
    %2360 = vmatmul.mubr.bf16.gmra.mrb[0].mxu0 %v2262
    %v2361 = vpop.f32.mrb[0].mxu0
    %v2362 = vadd.f32 0.0, %v2361
    %v2363 = vpop.f32.mrb[0].mxu0
    %v2364 = vpop.f32.mrb[0].mxu0
    %v2365 = vpop.f32.mrb[0].mxu0
    %2366 = vdwg.mxu0
    %v2367 = vsel %vm834, %v2306, -1e+30
    %v2368 = vsel %vm835, %v2309, -1e+30
    %v2369 = vsel %vm836, %v2314, -1e+30
    %v2370 = vsel %vm834, %v2354, -1e+30
    %v2371 = vsel %vm835, %v2357, -1e+30
    %v2372 = vsel %vm836, %v2362, -1e+30
    %v2373 = vsel %vm843, %v2367, -inf
    %2374 = vmax.xlane.f32.xlu0 %v2373
    %v2375 = vpop.xlane.xlu0 %2374
    %v2376 = vsel %vm843, %v2368, -inf
    %2377 = vmax.xlane.f32.xlu0 %v2376
    %v2378 = vpop.xlane.xlu0 %2377
    %v2379 = vsel %vm843, %v2369, -inf
    %2380 = vmax.xlane.f32.xlu0 %v2379
    %v2381 = vpop.xlane.xlu0 %2380
    %v2382 = vsel %vm843, %v2370, -inf
    %2383 = vmax.xlane.f32.xlu0 %v2382
    %v2384 = vpop.xlane.xlu0 %2383
    %v2385 = vsel %vm843, %v2371, -inf
    %2386 = vmax.xlane.f32.xlu0 %v2385
    %v2387 = vpop.xlane.xlu0 %2386
    %v2388 = vsel %vm843, %v2372, -inf
    %2389 = vmax.xlane.f32.xlu0 %v2388
    %v2390 = vpop.xlane.xlu0 %2389
    %v2391 = vsub.f32 %v2367, %v2375
    %v2392 = vsub.f32 %v2368, %v2378
    %v2393 = vsub.f32 %v2369, %v2381
    %v2394 = vsub.f32 %v2370, %v2384
    %v2395 = vsub.f32 %v2371, %v2387
    %v2396 = vsub.f32 %v2372, %v2390
    %v2397 = vmul.f32 %v2391, 1.442695
    %v2398 = vpow.pop %v2397
    %v2399 = vmul.f32 %v2392, 1.442695
    %v2400 = vpow.pop %v2399
    %v2401 = vmul.f32 %v2393, 1.442695
    %v2402 = vpow.pop %v2401
    %v2403 = vmul.f32 %v2394, 1.442695
    %v2404 = vpow.pop %v2403
    %v2405 = vmul.f32 %v2395, 1.442695
    %v2406 = vpow.pop %v2405
    %v2407 = vmul.f32 %v2396, 1.442695
    %v2408 = vpow.pop %v2407
    %v2409 = vsel %vm843, %v2398, 0.0
    %2410 = vadd.xlane.f32.xlu0 %v2409
    %v2411 = vpop.xlane.xlu0 %2410
    %v2412 = vsel %vm843, %v2400, 0.0
    %2413 = vadd.xlane.f32.xlu0 %v2412
    %v2414 = vpop.xlane.xlu0 %2413
    %v2415 = vsel %vm843, %v2402, 0.0
    %2416 = vadd.xlane.f32.xlu0 %v2415
    %v2417 = vpop.xlane.xlu0 %2416
    %v2418 = vsel %vm843, %v2404, 0.0
    %2419 = vadd.xlane.f32.xlu0 %v2418
    %v2420 = vpop.xlane.xlu0 %2419
    %v2421 = vsel %vm843, %v2406, 0.0
    %2422 = vadd.xlane.f32.xlu0 %v2421
    %v2423 = vpop.xlane.xlu0 %2422
    %v2424 = vsel %vm843, %v2408, 0.0
    %2425 = vadd.xlane.f32.xlu0 %v2424
    %v2426 = vpop.xlane.xlu0 %2425
    %v2427 = vrcp.pop %v2411
    %v2428 = vrcp.pop %v2414
    %v2429 = vrcp.pop %v2417
    %v2430 = vrcp.pop %v2420
    %v2431 = vrcp.pop %v2423
    %v2432 = vrcp.pop %v2426
    %v2433 = vmul.f32 %v2398, %v2427
    %v2434 = vmul.f32 %v2400, %v2428
    %v2435 = vmul.f32 %v2402, %v2429
    %v2436 = vmul.f32 %v2404, %v2430
    %v2437 = vmul.f32 %v2406, %v2431
    %v2438 = vmul.f32 %v2408, %v2432
    %v2439 = vpack.c.bf16 %v2434, %v2433
    %v2440 = vpack.c.bf16 %v2435, %v2435
    %v2441 = vpack.c.bf16 %v2437, %v2436
    %v2442 = vpack.c.bf16 %v2438, %v2438
    %v2444 = vsel %vm843, %v2439, 0
    %v2447 = vsel %vm843, %v2440, 0
    %v2450 = vsel %vm920, %v2268, 0
    %2452 = vmatprep.subr.bf16.mxu0 0
    %2453 = vmatpush1.bf16.msra.mxu0 %v2267
    %2454 = vmatprep.subr.bf16.mxu0 0
    %2455 = vmatpush1.bf16.msra.mxu0 %v2450
    %2456 = vmatprep.subr.bf16.mxu0 0
    %2457 = vmatpush1.bf16.msra.mxu0 0
    %2458 = vmatprep.subr.bf16.mxu0 0
    %2459 = vmatpush1.bf16.msra.mxu0 0
    %2460 = vmatprep.subr.bf16.mxu0 0
    %2461 = vmatpush1.bf16.msra.mxu0 0
    %2462 = vmatprep.subr.bf16.mxu0 0
    %2463 = vmatpush1.bf16.msra.mxu0 0
    %2464 = vmatprep.subr.bf16.mxu0 0
    %2465 = vmatpush1.bf16.msra.mxu0 0
    %2466 = vmatprep.subr.bf16.mxu0 0
    %2467 = vmatpush1.bf16.msra.mxu0 0
    %2468 = vmatprep.subr.bf16.mxu0 0
    %2469 = vmatpush1.bf16.msra.mxu0 0
    %2470 = vmatprep.subr.bf16.mxu0 0
    %2471 = vmatpush1.bf16.msra.mxu0 0
    %2472 = vmatprep.subr.bf16.mxu0 0
    %2473 = vmatpush1.bf16.msra.mxu0 0
    %2474 = vmatprep.subr.bf16.mxu0 0
    %2475 = vmatpush1.bf16.msra.mxu0 0
    %2476 = vmatprep.subr.bf16.mxu0 0
    %2477 = vmatpush1.bf16.msra.mxu0 0
    %2478 = vmatprep.subr.bf16.mxu0 0
    %2479 = vmatpush1.bf16.msra.mxu0 0
    %2480 = vmatprep.subr.bf16.mxu0 0
    %2481 = vmatpush1.bf16.msra.mxu0 0
    %2482 = vmatprep.subr.bf16.mxu0 0
    %2483 = vmatpush1.bf16.msra.mxu0 0
    %2484 = vmatprep.mubr.bf16.mxu0 0
    %2485 = vmatmul.mubr.bf16.gmra.mrb[0].mxu0 %v2444
    %v2486 = vpop.f32.mrb[0].mxu0
    %v2487 = vadd.f32 0.0, %v2486
    %v2488 = vpop.f32.mrb[0].mxu0
    %v2489 = vpop.f32.mrb[0].mxu0
    %v2490 = vadd.f32 0.0, %v2489
    %v2491 = vpop.f32.mrb[0].mxu0
    %2492 = vmatprep.mubr.bf16.mxu0 0
    %2493 = vmatmul.mubr.bf16.gmra.mrb[0].mxu0 %v2447
    %v2494 = vpop.f32.mrb[0].mxu0
    %v2495 = vadd.f32 0.0, %v2494
    %v2496 = vpop.f32.mrb[0].mxu0
    %v2497 = vpop.f32.mrb[0].mxu0
    %v2498 = vpop.f32.mrb[0].mxu0
    %2499 = vdwg.mxu0
    %v2501 = vsel %vm843, %v2441, 0
    %v2504 = vsel %vm843, %v2442, 0
    %v2507 = vsel %vm920, %v2270, 0
    %2509 = vmatprep.subr.bf16.mxu0 0
    %2510 = vmatpush1.bf16.msra.mxu0 %v2269
    %2511 = vmatprep.subr.bf16.mxu0 0
    %2512 = vmatpush1.bf16.msra.mxu0 %v2507
    %2513 = vmatprep.subr.bf16.mxu0 0
    %2514 = vmatpush1.bf16.msra.mxu0 0
    %2515 = vmatprep.subr.bf16.mxu0 0
    %2516 = vmatpush1.bf16.msra.mxu0 0
    %2517 = vmatprep.subr.bf16.mxu0 0
    %2518 = vmatpush1.bf16.msra.mxu0 0
    %2519 = vmatprep.subr.bf16.mxu0 0
    %2520 = vmatpush1.bf16.msra.mxu0 0
    %2521 = vmatprep.subr.bf16.mxu0 0
    %2522 = vmatpush1.bf16.msra.mxu0 0
    %2523 = vmatprep.subr.bf16.mxu0 0
    %2524 = vmatpush1.bf16.msra.mxu0 0
    %2525 = vmatprep.subr.bf16.mxu0 0
    %2526 = vmatpush1.bf16.msra.mxu0 0
    %2527 = vmatprep.subr.bf16.mxu0 0
    %2528 = vmatpush1.bf16.msra.mxu0 0
    %2529 = vmatprep.subr.bf16.mxu0 0
    %2530 = vmatpush1.bf16.msra.mxu0 0
    %2531 = vmatprep.subr.bf16.mxu0 0
    %2532 = vmatpush1.bf16.msra.mxu0 0
    %2533 = vmatprep.subr.bf16.mxu0 0
    %2534 = vmatpush1.bf16.msra.mxu0 0
    %2535 = vmatprep.subr.bf16.mxu0 0
    %2536 = vmatpush1.bf16.msra.mxu0 0
    %2537 = vmatprep.subr.bf16.mxu0 0
    %2538 = vmatpush1.bf16.msra.mxu0 0
    %2539 = vmatprep.subr.bf16.mxu0 0
    %2540 = vmatpush1.bf16.msra.mxu0 0
    %2541 = vmatprep.mubr.bf16.mxu0 0
    %2542 = vmatmul.mubr.bf16.gmra.mrb[0].mxu0 %v2501
    %v2543 = vpop.f32.mrb[0].mxu0
    %v2544 = vadd.f32 0.0, %v2543
    %v2545 = vpop.f32.mrb[0].mxu0
    %v2546 = vpop.f32.mrb[0].mxu0
    %v2547 = vadd.f32 0.0, %v2546
    %v2548 = vpop.f32.mrb[0].mxu0
    %2549 = vmatprep.mubr.bf16.mxu0 0
    %2550 = vmatmul.mubr.bf16.gmra.mrb[0].mxu0 %v2504
    %v2551 = vpop.f32.mrb[0].mxu0
    %v2552 = vadd.f32 0.0, %v2551
    %v2553 = vpop.f32.mrb[0].mxu0
    %v2554 = vpop.f32.mrb[0].mxu0
    %v2555 = vpop.f32.mrb[0].mxu0
    %2556 = vdwg.mxu0
    %v2557 = vpack.c.bf16 %v2490, %v2487
    %v2558 = vpack.c.bf16 %v2544, %v2495
    %v2559 = vpack.c.bf16 %v2552, %v2547
    %s2560 = scalar_lea.vmem [#allocation7], 64
    %v2561 = vld [vmem:[%s2560] sm:$0xf]
    %v2562 = vld [vmem:[%s2560 + $0x4] sm:$0xf]
    %v2563 = vld [vmem:[%s2560 + $0x8] sm:$0xf]
    %v2564 = vld [vmem:[%s2560 + $0xc] sm:$0xf]
    %v2565 = vld [vmem:[%s2560 + $0x10] sm:$0xf]
    %v2566 = vld [vmem:[%s2560 + $0x14] sm:$0xf]
    %v2567 = vld [vmem:[%s2560 + $0x18] sm:$0xf]
    %v2568 = vld [vmem:[%s2560 + $0x1c] sm:$0xf]
    %v2569 = vld [vmem:[%s2560 + $0x20] sm:$0xf]
    %v2570 = vld [vmem:[%s2560 + $0x24] sm:$0xf]
    %v2571 = vld [vmem:[%s2560 + $0x28] sm:$0xf]
    %v2572 = vld [vmem:[%s2560 + $0x2c] sm:$0xf]
    %v2573 = vld [vmem:[%s2560 + $0x30] sm:$0xf]
    %v2574 = vld [vmem:[%s2560 + $0x34] sm:$0xf]
    %v2575 = vld [vmem:[%s2560 + $0x38] sm:$0xf]
    %v2576 = vld [vmem:[%s2560 + $0x3c] sm:$0xf]
    %v2593 = vunpack.c.l.b16 %v2561
    %v2594 = vunpack.c.l.b16 %v2562
    %v2595 = vunpack.c.l.b16 %v2563
    %v2596 = vunpack.c.l.b16 %v2564
    %v2597 = vunpack.c.l.b16 %v2565
    %v2598 = vunpack.c.l.b16 %v2566
    %v2599 = vunpack.c.l.b16 %v2567
    %v2600 = vunpack.c.l.b16 %v2568
    %v2601 = vunpack.c.l.b16 %v2569
    %v2602 = vunpack.c.l.b16 %v2570
    %v2603 = vunpack.c.l.b16 %v2571
    %v2604 = vunpack.c.l.b16 %v2572
    %v2605 = vunpack.c.l.b16 %v2573
    %v2606 = vunpack.c.l.b16 %v2574
    %v2607 = vunpack.c.l.b16 %v2575
    %v2608 = vunpack.c.l.b16 %v2576
    %v2609 = vpack.c.b16 %v2594, %v2593
    %v2610 = vpack.c.b16 %v2596, %v2595
    %v2611 = vpack.c.b16 %v2598, %v2597
    %v2612 = vpack.c.b16 %v2600, %v2599
    %v2613 = vpack.c.b16 %v2602, %v2601
    %v2614 = vpack.c.b16 %v2604, %v2603
    %v2615 = vpack.c.b16 %v2606, %v2605
    %v2616 = vpack.c.b16 %v2608, %v2607
    %2625 = vmatprep.subr.bf16.mxu0 0
    %2626 = vmatpush1.bf16.msra.mxu0 %v2609
    %2627 = vmatprep.subr.bf16.mxu0 0
    %2628 = vmatpush1.bf16.msra.mxu0 %v2610
    %2629 = vmatprep.subr.bf16.mxu0 0
    %2630 = vmatpush1.bf16.msra.mxu0 %v2611
    %2631 = vmatprep.subr.bf16.mxu0 0
    %2632 = vmatpush1.bf16.msra.mxu0 %v2612
    %2633 = vmatprep.subr.bf16.mxu0 0
    %2634 = vmatpush1.bf16.msra.mxu0 %v2613
    %2635 = vmatprep.subr.bf16.mxu0 0
    %2636 = vmatpush1.bf16.msra.mxu0 %v2614
    %2637 = vmatprep.subr.bf16.mxu0 0
    %2638 = vmatpush1.bf16.msra.mxu0 %v2615
    %2639 = vmatprep.subr.bf16.mxu0 0
    %2640 = vmatpush1.bf16.msra.mxu0 %v2616
    %2641 = vmatprep.subr.bf16.mxu0 0
    %2642 = vmatpush1.bf16.msra.mxu0 0
    %2643 = vmatprep.subr.bf16.mxu0 0
    %2644 = vmatpush1.bf16.msra.mxu0 0
    %2645 = vmatprep.subr.bf16.mxu0 0
    %2646 = vmatpush1.bf16.msra.mxu0 0
    %2647 = vmatprep.subr.bf16.mxu0 0
    %2648 = vmatpush1.bf16.msra.mxu0 0
    %2649 = vmatprep.subr.bf16.mxu0 0
    %2650 = vmatpush1.bf16.msra.mxu0 0
    %2651 = vmatprep.subr.bf16.mxu0 0
    %2652 = vmatpush1.bf16.msra.mxu0 0
    %2653 = vmatprep.subr.bf16.mxu0 0
    %2654 = vmatpush1.bf16.msra.mxu0 0
    %2655 = vmatprep.subr.bf16.mxu0 0
    %2656 = vmatpush1.bf16.msra.mxu0 0
    %2657 = vmatprep.mubr.bf16.mxu0 0
    %2658 = vmatmul.mubr.bf16.gmra.mrb[0].mxu0 %v2557
    %v2659 = vpop.f32.mrb[0].mxu0
    %v2660 = vadd.f32 0.0, %v2659
    %v2661 = vpop.f32.mrb[0].mxu0
    %v2662 = vpop.f32.mrb[0].mxu0
    %v2663 = vadd.f32 0.0, %v2662
    %v2664 = vpop.f32.mrb[0].mxu0
    %2665 = vmatprep.mubr.bf16.mxu0 0
    %2666 = vmatmul.mubr.bf16.gmra.mrb[0].mxu0 %v2558
    %v2667 = vpop.f32.mrb[0].mxu0
    %v2668 = vadd.f32 0.0, %v2667
    %v2669 = vpop.f32.mrb[0].mxu0
    %v2670 = vpop.f32.mrb[0].mxu0
    %v2671 = vadd.f32 0.0, %v2670
    %v2672 = vpop.f32.mrb[0].mxu0
    %2673 = vmatprep.mubr.bf16.mxu0 0
    %2674 = vmatmul.mubr.bf16.gmra.mrb[0].mxu0 %v2559
    %v2675 = vpop.f32.mrb[0].mxu0
    %v2676 = vadd.f32 0.0, %v2675
    %v2677 = vpop.f32.mrb[0].mxu0
    %v2678 = vpop.f32.mrb[0].mxu0
    %v2679 = vadd.f32 0.0, %v2678
    %v2680 = vpop.f32.mrb[0].mxu0
    %2681 = vdwg.mxu0
    %v2682 = vadd.f32 %v1822, %v2660
    %v2683 = vadd.f32 %v1823, %v2663
    %v2684 = vadd.f32 %v1824, %v2668
    %v2685 = vadd.f32 %v1825, %v2671
    %v2686 = vadd.f32 %v1826, %v2676
    %v2687 = vadd.f32 %v1827, %v2679
    %v2688 = vmul.f32 %v2682, %v2682
    %v2689 = vmul.f32 %v2683, %v2683
    %v2690 = vmul.f32 %v2684, %v2684
    %v2691 = vmul.f32 %v2685, %v2685
    %v2692 = vmul.f32 %v2686, %v2686
    %v2693 = vmul.f32 %v2687, %v2687
    %2694 = vadd.xlane.f32.xlu0 %v2688
    %v2695 = vpop.xlane.xlu0 %2694
    %2696 = vadd.xlane.f32.xlu0 %v2689
    %v2697 = vpop.xlane.xlu0 %2696
    %2698 = vadd.xlane.f32.xlu0 %v2690
    %v2699 = vpop.xlane.xlu0 %2698
    %2700 = vadd.xlane.f32.xlu0 %v2691
    %v2701 = vpop.xlane.xlu0 %2700
    %2702 = vadd.xlane.f32.xlu0 %v2692
    %v2703 = vpop.xlane.xlu0 %2702
    %2704 = vadd.xlane.f32.xlu0 %v2693
    %v2705 = vpop.xlane.xlu0 %2704
    %v2706 = vmul.f32 %v2695, %v313
    %v2707 = vmul.f32 %v2697, %v313
    %v2708 = vmul.f32 %v2699, %v313
    %v2709 = vmul.f32 %v2701, %v313
    %v2710 = vmul.f32 %v2703, %v313
    %v2711 = vmul.f32 %v2705, %v313
    %v2712 = vadd.f32 %v2706, 1e-06
    %v2713 = vadd.f32 %v2707, 1e-06
    %v2714 = vadd.f32 %v2708, 1e-06
    %v2715 = vadd.f32 %v2709, 1e-06
    %v2716 = vadd.f32 %v2710, 1e-06
    %v2717 = vadd.f32 %v2711, 1e-06
    %v2718 = vrsqrt.pop %v2712
    %v2719 = vrsqrt.pop %v2713
    %v2720 = vrsqrt.pop %v2714
    %v2721 = vrsqrt.pop %v2715
    %v2722 = vrsqrt.pop %v2716
    %v2723 = vrsqrt.pop %v2717
    %v2724 = vmul.f32 %v2682, %v2718
    %v2725 = vmul.f32 %v2683, %v2719
    %v2726 = vmul.f32 %v2684, %v2720
    %v2727 = vmul.f32 %v2685, %v2721
    %v2728 = vmul.f32 %v2686, %v2722
    %v2729 = vmul.f32 %v2687, %v2723
    %s2730 = scalar_lea.vmem [#allocation8], 1
    %v2731 = vld [vmem:[%s2730] sm:$0x1]
    %v2733 = vlaneseq
    %v2734 = vshrl.u32 %v2733, 7
    %v2735 = vsub.s32 0, %v2734
    %v2736 = vrot.slane %v2731, %v2735
    %v2738 = vmul.f32 %v2724, %v2736
    %v2739 = vmul.f32 %v2725, %v2736
    %v2740 = vmul.f32 %v2726, %v2736
    %v2741 = vmul.f32 %v2727, %v2736
    %v2742 = vmul.f32 %v2728, %v2736
    %v2743 = vmul.f32 %v2729, %v2736
    %v2744 = vpack.c.bf16 %v2739, %v2738
    %v2745 = vpack.c.bf16 %v2741, %v2740
    %v2746 = vpack.c.bf16 %v2743, %v2742
    %s2747 = scalar_lea.vmem [#allocation10], 128
    %v2748 = vld [vmem:[%s2747] sm:$0xff]
    %v2749 = vld [vmem:[%s2747 + $0x8] sm:$0xff]
    %v2750 = vld [vmem:[%s2747 + $0x10] sm:$0xff]
    %v2751 = vld [vmem:[%s2747 + $0x18] sm:$0xff]
    %v2752 = vld [vmem:[%s2747 + $0x20] sm:$0xff]
    %v2753 = vld [vmem:[%s2747 + $0x28] sm:$0xff]
    %v2754 = vld [vmem:[%s2747 + $0x30] sm:$0xff]
    %v2755 = vld [vmem:[%s2747 + $0x38] sm:$0xff]
    %v2756 = vld [vmem:[%s2747 + $0x40] sm:$0xff]
    %v2757 = vld [vmem:[%s2747 + $0x48] sm:$0xff]
    %v2758 = vld [vmem:[%s2747 + $0x50] sm:$0xff]
    %v2759 = vld [vmem:[%s2747 + $0x58] sm:$0xff]
    %v2760 = vld [vmem:[%s2747 + $0x60] sm:$0xff]
    %v2761 = vld [vmem:[%s2747 + $0x68] sm:$0xff]
    %v2762 = vld [vmem:[%s2747 + $0x70] sm:$0xff]
    %v2763 = vld [vmem:[%s2747 + $0x78] sm:$0xff]
    %v2780 = vunpack.c.l.b16 %v2748
    %v2781 = vunpack.c.h.b16 %v2748
    %v2782 = vunpack.c.l.b16 %v2749
    %v2783 = vunpack.c.h.b16 %v2749
    %v2784 = vunpack.c.l.b16 %v2750
    %v2785 = vunpack.c.h.b16 %v2750
    %v2786 = vunpack.c.l.b16 %v2751
    %v2787 = vunpack.c.h.b16 %v2751
    %v2788 = vunpack.c.l.b16 %v2752
    %v2789 = vunpack.c.h.b16 %v2752
    %v2790 = vunpack.c.l.b16 %v2753
    %v2791 = vunpack.c.h.b16 %v2753
    %v2792 = vunpack.c.l.b16 %v2754
    %v2793 = vunpack.c.h.b16 %v2754
    %v2794 = vunpack.c.l.b16 %v2755
    %v2795 = vunpack.c.h.b16 %v2755
    %v2796 = vunpack.c.l.b16 %v2756
    %v2797 = vunpack.c.h.b16 %v2756
    %v2798 = vunpack.c.l.b16 %v2757
    %v2799 = vunpack.c.h.b16 %v2757
    %v2800 = vunpack.c.l.b16 %v2758
    %v2801 = vunpack.c.h.b16 %v2758
    %v2802 = vunpack.c.l.b16 %v2759
    %v2803 = vunpack.c.h.b16 %v2759
    %v2804 = vunpack.c.l.b16 %v2760
    %v2805 = vunpack.c.h.b16 %v2760
    %v2806 = vunpack.c.l.b16 %v2761
    %v2807 = vunpack.c.h.b16 %v2761
    %v2808 = vunpack.c.l.b16 %v2762
    %v2809 = vunpack.c.h.b16 %v2762
    %v2810 = vunpack.c.l.b16 %v2763
    %v2811 = vunpack.c.h.b16 %v2763
    %v2812 = vpack.c.b16 %v2782, %v2780
    %v2813 = vpack.c.b16 %v2783, %v2781
    %v2814 = vpack.c.b16 %v2786, %v2784
    %v2815 = vpack.c.b16 %v2787, %v2785
    %v2816 = vpack.c.b16 %v2790, %v2788
    %v2817 = vpack.c.b16 %v2791, %v2789
    %v2818 = vpack.c.b16 %v2794, %v2792
    %v2819 = vpack.c.b16 %v2795, %v2793
    %v2820 = vpack.c.b16 %v2798, %v2796
    %v2821 = vpack.c.b16 %v2799, %v2797
    %v2822 = vpack.c.b16 %v2802, %v2800
    %v2823 = vpack.c.b16 %v2803, %v2801
    %v2824 = vpack.c.b16 %v2806, %v2804
    %v2825 = vpack.c.b16 %v2807, %v2805
    %v2826 = vpack.c.b16 %v2810, %v2808
    %v2827 = vpack.c.b16 %v2811, %v2809
    %2844 = vmatprep.subr.bf16.mxu0 %v2813
    %2845 = vmatpush1.bf16.msra.mxu0 %v2812
    %2846 = vmatprep.subr.bf16.mxu0 %v2815
    %2847 = vmatpush1.bf16.msra.mxu0 %v2814
    %2848 = vmatprep.subr.bf16.mxu0 %v2817
    %2849 = vmatpush1.bf16.msra.mxu0 %v2816
    %2850 = vmatprep.subr.bf16.mxu0 %v2819
    %2851 = vmatpush1.bf16.msra.mxu0 %v2818
    %2852 = vmatprep.subr.bf16.mxu0 %v2821
    %2853 = vmatpush1.bf16.msra.mxu0 %v2820
    %2854 = vmatprep.subr.bf16.mxu0 %v2823
    %2855 = vmatpush1.bf16.msra.mxu0 %v2822
    %2856 = vmatprep.subr.bf16.mxu0 %v2825
    %2857 = vmatpush1.bf16.msra.mxu0 %v2824
    %2858 = vmatprep.subr.bf16.mxu0 %v2827
    %2859 = vmatpush1.bf16.msra.mxu0 %v2826
    %2860 = vmatprep.subr.bf16.mxu0 0
    %2861 = vmatpush1.bf16.msra.mxu0 0
    %2862 = vmatprep.subr.bf16.mxu0 0
    %2863 = vmatpush1.bf16.msra.mxu0 0
    %2864 = vmatprep.subr.bf16.mxu0 0
    %2865 = vmatpush1.bf16.msra.mxu0 0
    %2866 = vmatprep.subr.bf16.mxu0 0
    %2867 = vmatpush1.bf16.msra.mxu0 0
    %2868 = vmatprep.subr.bf16.mxu0 0
    %2869 = vmatpush1.bf16.msra.mxu0 0
    %2870 = vmatprep.subr.bf16.mxu0 0
    %2871 = vmatpush1.bf16.msra.mxu0 0
    %2872 = vmatprep.subr.bf16.mxu0 0
    %2873 = vmatpush1.bf16.msra.mxu0 0
    %2874 = vmatprep.subr.bf16.mxu0 0
    %2875 = vmatpush1.bf16.msra.mxu0 0
    %2876 = vmatprep.mubr.bf16.mxu0 0
    %2877 = vmatmul.mubr.bf16.gmra.mrb[0].mxu0 %v2744
    %v2878 = vpop.f32.mrb[0].mxu0
    %v2879 = vadd.f32 0.0, %v2878
    %v2880 = vpop.f32.mrb[0].mxu0
    %v2881 = vadd.f32 0.0, %v2880
    %v2882 = vpop.f32.mrb[0].mxu0
    %v2883 = vadd.f32 0.0, %v2882
    %v2884 = vpop.f32.mrb[0].mxu0
    %v2885 = vadd.f32 0.0, %v2884
    %2886 = vmatprep.mubr.bf16.mxu0 0
    %2887 = vmatmul.mubr.bf16.gmra.mrb[0].mxu0 %v2745
    %v2888 = vpop.f32.mrb[0].mxu0
    %v2889 = vadd.f32 0.0, %v2888
    %v2890 = vpop.f32.mrb[0].mxu0
    %v2891 = vadd.f32 0.0, %v2890
    %v2892 = vpop.f32.mrb[0].mxu0
    %v2893 = vadd.f32 0.0, %v2892
    %v2894 = vpop.f32.mrb[0].mxu0
    %v2895 = vadd.f32 0.0, %v2894
    %2896 = vmatprep.mubr.bf16.mxu0 0
    %2897 = vmatmul.mubr.bf16.gmra.mrb[0].mxu0 %v2746
    %v2898 = vpop.f32.mrb[0].mxu0
    %v2899 = vadd.f32 0.0, %v2898
    %v2900 = vpop.f32.mrb[0].mxu0
    %v2901 = vadd.f32 0.0, %v2900
    %v2902 = vpop.f32.mrb[0].mxu0
    %v2903 = vadd.f32 0.0, %v2902
    %v2904 = vpop.f32.mrb[0].mxu0
    %v2905 = vadd.f32 0.0, %v2904
    %2906 = vdwg.mxu0
    %s2907 = scalar_lea.vmem [#allocation11], 128
    %v2908 = vld [vmem:[%s2907] sm:$0xff]
    %v2909 = vld [vmem:[%s2907 + $0x8] sm:$0xff]
    %v2910 = vld [vmem:[%s2907 + $0x10] sm:$0xff]
    %v2911 = vld [vmem:[%s2907 + $0x18] sm:$0xff]
    %v2912 = vld [vmem:[%s2907 + $0x20] sm:$0xff]
    %v2913 = vld [vmem:[%s2907 + $0x28] sm:$0xff]
    %v2914 = vld [vmem:[%s2907 + $0x30] sm:$0xff]
    %v2915 = vld [vmem:[%s2907 + $0x38] sm:$0xff]
    %v2916 = vld [vmem:[%s2907 + $0x40] sm:$0xff]
    %v2917 = vld [vmem:[%s2907 + $0x48] sm:$0xff]
    %v2918 = vld [vmem:[%s2907 + $0x50] sm:$0xff]
    %v2919 = vld [vmem:[%s2907 + $0x58] sm:$0xff]
    %v2920 = vld [vmem:[%s2907 + $0x60] sm:$0xff]
    %v2921 = vld [vmem:[%s2907 + $0x68] sm:$0xff]
    %v2922 = vld [vmem:[%s2907 + $0x70] sm:$0xff]
    %v2923 = vld [vmem:[%s2907 + $0x78] sm:$0xff]
    %v2940 = vunpack.c.l.b16 %v2908
    %v2941 = vunpack.c.h.b16 %v2908
    %v2942 = vunpack.c.l.b16 %v2909
    %v2943 = vunpack.c.h.b16 %v2909
    %v2944 = vunpack.c.l.b16 %v2910
    %v2945 = vunpack.c.h.b16 %v2910
    %v2946 = vunpack.c.l.b16 %v2911
    %v2947 = vunpack.c.h.b16 %v2911
    %v2948 = vunpack.c.l.b16 %v2912
    %v2949 = vunpack.c.h.b16 %v2912
    %v2950 = vunpack.c.l.b16 %v2913
    %v2951 = vunpack.c.h.b16 %v2913
    %v2952 = vunpack.c.l.b16 %v2914
    %v2953 = vunpack.c.h.b16 %v2914
    %v2954 = vunpack.c.l.b16 %v2915
    %v2955 = vunpack.c.h.b16 %v2915
    %v2956 = vunpack.c.l.b16 %v2916
    %v2957 = vunpack.c.h.b16 %v2916
    %v2958 = vunpack.c.l.b16 %v2917
    %v2959 = vunpack.c.h.b16 %v2917
    %v2960 = vunpack.c.l.b16 %v2918
    %v2961 = vunpack.c.h.b16 %v2918
    %v2962 = vunpack.c.l.b16 %v2919
    %v2963 = vunpack.c.h.b16 %v2919
    %v2964 = vunpack.c.l.b16 %v2920
    %v2965 = vunpack.c.h.b16 %v2920
    %v2966 = vunpack.c.l.b16 %v2921
    %v2967 = vunpack.c.h.b16 %v2921
    %v2968 = vunpack.c.l.b16 %v2922
    %v2969 = vunpack.c.h.b16 %v2922
    %v2970 = vunpack.c.l.b16 %v2923
    %v2971 = vunpack.c.h.b16 %v2923
    %v2972 = vpack.c.b16 %v2942, %v2940
    %v2973 = vpack.c.b16 %v2943, %v2941
    %v2974 = vpack.c.b16 %v2946, %v2944
    %v2975 = vpack.c.b16 %v2947, %v2945
    %v2976 = vpack.c.b16 %v2950, %v2948
    %v2977 = vpack.c.b16 %v2951, %v2949
    %v2978 = vpack.c.b16 %v2954, %v2952
    %v2979 = vpack.c.b16 %v2955, %v2953
    %v2980 = vpack.c.b16 %v2958, %v2956
    %v2981 = vpack.c.b16 %v2959, %v2957
    %v2982 = vpack.c.b16 %v2962, %v2960
    %v2983 = vpack.c.b16 %v2963, %v2961
    %v2984 = vpack.c.b16 %v2966, %v2964
    %v2985 = vpack.c.b16 %v2967, %v2965
    %v2986 = vpack.c.b16 %v2970, %v2968
    %v2987 = vpack.c.b16 %v2971, %v2969
    %3004 = vmatprep.subr.bf16.mxu0 %v2973
    %3005 = vmatpush1.bf16.msra.mxu0 %v2972
    %3006 = vmatprep.subr.bf16.mxu0 %v2975
    %3007 = vmatpush1.bf16.msra.mxu0 %v2974
    %3008 = vmatprep.subr.bf16.mxu0 %v2977
    %3009 = vmatpush1.bf16.msra.mxu0 %v2976
    %3010 = vmatprep.subr.bf16.mxu0 %v2979
    %3011 = vmatpush1.bf16.msra.mxu0 %v2978
    %3012 = vmatprep.subr.bf16.mxu0 %v2981
    %3013 = vmatpush1.bf16.msra.mxu0 %v2980
    %3014 = vmatprep.subr.bf16.mxu0 %v2983
    %3015 = vmatpush1.bf16.msra.mxu0 %v2982
    %3016 = vmatprep.subr.bf16.mxu0 %v2985
    %3017 = vmatpush1.bf16.msra.mxu0 %v2984
    %3018 = vmatprep.subr.bf16.mxu0 %v2987
    %3019 = vmatpush1.bf16.msra.mxu0 %v2986
    %3020 = vmatprep.subr.bf16.mxu0 0
    %3021 = vmatpush1.bf16.msra.mxu0 0
    %3022 = vmatprep.subr.bf16.mxu0 0
    %3023 = vmatpush1.bf16.msra.mxu0 0
    %3024 = vmatprep.subr.bf16.mxu0 0
    %3025 = vmatpush1.bf16.msra.mxu0 0
    %3026 = vmatprep.subr.bf16.mxu0 0
    %3027 = vmatpush1.bf16.msra.mxu0 0
    %3028 = vmatprep.subr.bf16.mxu0 0
    %3029 = vmatpush1.bf16.msra.mxu0 0
    %3030 = vmatprep.subr.bf16.mxu0 0
    %3031 = vmatpush1.bf16.msra.mxu0 0
    %3032 = vmatprep.subr.bf16.mxu0 0
    %3033 = vmatpush1.bf16.msra.mxu0 0
    %3034 = vmatprep.subr.bf16.mxu0 0
    %3035 = vmatpush1.bf16.msra.mxu0 0
    %3036 = vmatprep.mubr.bf16.mxu0 0
    %3037 = vmatmul.mubr.bf16.gmra.mrb[0].mxu0 %v2744
    %v3038 = vpop.f32.mrb[0].mxu0
    %v3039 = vadd.f32 0.0, %v3038
    %v3040 = vpop.f32.mrb[0].mxu0
    %v3041 = vadd.f32 0.0, %v3040
    %v3042 = vpop.f32.mrb[0].mxu0
    %v3043 = vadd.f32 0.0, %v3042
    %v3044 = vpop.f32.mrb[0].mxu0
    %v3045 = vadd.f32 0.0, %v3044
    %3046 = vmatprep.mubr.bf16.mxu0 0
    %3047 = vmatmul.mubr.bf16.gmra.mrb[0].mxu0 %v2745
    %v3048 = vpop.f32.mrb[0].mxu0
    %v3049 = vadd.f32 0.0, %v3048
    %v3050 = vpop.f32.mrb[0].mxu0
    %v3051 = vadd.f32 0.0, %v3050
    %v3052 = vpop.f32.mrb[0].mxu0
    %v3053 = vadd.f32 0.0, %v3052
    %v3054 = vpop.f32.mrb[0].mxu0
    %v3055 = vadd.f32 0.0, %v3054
    %3056 = vmatprep.mubr.bf16.mxu0 0
    %3057 = vmatmul.mubr.bf16.gmra.mrb[0].mxu0 %v2746
    %v3058 = vpop.f32.mrb[0].mxu0
    %v3059 = vadd.f32 0.0, %v3058
    %v3060 = vpop.f32.mrb[0].mxu0
    %v3061 = vadd.f32 0.0, %v3060
    %v3062 = vpop.f32.mrb[0].mxu0
    %v3063 = vadd.f32 0.0, %v3062
    %v3064 = vpop.f32.mrb[0].mxu0
    %v3065 = vadd.f32 0.0, %v3064
    %3066 = vdwg.mxu0
    %v3067 = vxor.u32 %v2879, 2147483648
    %v3068 = vxor.u32 %v2881, 2147483648
    %v3069 = vxor.u32 %v2883, 2147483648
    %v3070 = vxor.u32 %v2885, 2147483648
    %v3071 = vxor.u32 %v2889, 2147483648
    %v3072 = vxor.u32 %v2891, 2147483648
    %v3073 = vxor.u32 %v2893, 2147483648
    %v3074 = vxor.u32 %v2895, 2147483648
    %v3075 = vxor.u32 %v2899, 2147483648
    %v3076 = vxor.u32 %v2901, 2147483648
    %v3077 = vxor.u32 %v2903, 2147483648
    %v3078 = vxor.u32 %v2905, 2147483648
    %v3079 = vmul.f32 %v3067, 1.442695
    %v3080 = vpow.pop %v3079
    %v3081 = vmul.f32 %v3068, 1.442695
    %v3082 = vpow.pop %v3081
    %v3083 = vmul.f32 %v3069, 1.442695
    %v3084 = vpow.pop %v3083
    %v3085 = vmul.f32 %v3070, 1.442695
    %v3086 = vpow.pop %v3085
    %v3087 = vmul.f32 %v3071, 1.442695
    %v3088 = vpow.pop %v3087
    %v3089 = vmul.f32 %v3072, 1.442695
    %v3090 = vpow.pop %v3089
    %v3091 = vmul.f32 %v3073, 1.442695
    %v3092 = vpow.pop %v3091
    %v3093 = vmul.f32 %v3074, 1.442695
    %v3094 = vpow.pop %v3093
    %v3095 = vmul.f32 %v3075, 1.442695
    %v3096 = vpow.pop %v3095
    %v3097 = vmul.f32 %v3076, 1.442695
    %v3098 = vpow.pop %v3097
    %v3099 = vmul.f32 %v3077, 1.442695
    %v3100 = vpow.pop %v3099
    %v3101 = vmul.f32 %v3078, 1.442695
    %v3102 = vpow.pop %v3101
    %v3103 = vadd.f32 %v3080, 1.0
    %v3104 = vadd.f32 %v3082, 1.0
    %v3105 = vadd.f32 %v3084, 1.0
    %v3106 = vadd.f32 %v3086, 1.0
    %v3107 = vadd.f32 %v3088, 1.0
    %v3108 = vadd.f32 %v3090, 1.0
    %v3109 = vadd.f32 %v3092, 1.0
    %v3110 = vadd.f32 %v3094, 1.0
    %v3111 = vadd.f32 %v3096, 1.0
    %v3112 = vadd.f32 %v3098, 1.0
    %v3113 = vadd.f32 %v3100, 1.0
    %v3114 = vadd.f32 %v3102, 1.0
    %v3115 = vrcp.pop %v3103
    %v3116 = vmul.f32 1.0, %v3115
    %v3117 = vrcp.pop %v3104
    %v3118 = vmul.f32 1.0, %v3117
    %v3119 = vrcp.pop %v3105
    %v3120 = vmul.f32 1.0, %v3119
    %v3121 = vrcp.pop %v3106
    %v3122 = vmul.f32 1.0, %v3121
    %v3123 = vrcp.pop %v3107
    %v3124 = vmul.f32 1.0, %v3123
    %v3125 = vrcp.pop %v3108
    %v3126 = vmul.f32 1.0, %v3125
    %v3127 = vrcp.pop %v3109
    %v3128 = vmul.f32 1.0, %v3127
    %v3129 = vrcp.pop %v3110
    %v3130 = vmul.f32 1.0, %v3129
    %v3131 = vrcp.pop %v3111
    %v3132 = vmul.f32 1.0, %v3131
    %v3133 = vrcp.pop %v3112
    %v3134 = vmul.f32 1.0, %v3133
    %v3135 = vrcp.pop %v3113
    %v3136 = vmul.f32 1.0, %v3135
    %v3137 = vrcp.pop %v3114
    %v3138 = vmul.f32 1.0, %v3137
    %v3139 = vmul.f32 %v2879, %v3116
    %v3140 = vmul.f32 %v2881, %v3118
    %v3141 = vmul.f32 %v2883, %v3120
    %v3142 = vmul.f32 %v2885, %v3122
    %v3143 = vmul.f32 %v2889, %v3124
    %v3144 = vmul.f32 %v2891, %v3126
    %v3145 = vmul.f32 %v2893, %v3128
    %v3146 = vmul.f32 %v2895, %v3130
    %v3147 = vmul.f32 %v2899, %v3132
    %v3148 = vmul.f32 %v2901, %v3134
    %v3149 = vmul.f32 %v2903, %v3136
    %v3150 = vmul.f32 %v2905, %v3138
    %v3151 = vmul.f32 %v3139, %v3039
    %v3152 = vmul.f32 %v3140, %v3041
    %v3153 = vmul.f32 %v3141, %v3043
    %v3154 = vmul.f32 %v3142, %v3045
    %v3155 = vmul.f32 %v3143, %v3049
    %v3156 = vmul.f32 %v3144, %v3051
    %v3157 = vmul.f32 %v3145, %v3053
    %v3158 = vmul.f32 %v3146, %v3055
    %v3159 = vmul.f32 %v3147, %v3059
    %v3160 = vmul.f32 %v3148, %v3061
    %v3161 = vmul.f32 %v3149, %v3063
    %v3162 = vmul.f32 %v3150, %v3065
    %v3163 = vpack.c.bf16 %v3153, %v3151
    %v3164 = vpack.c.bf16 %v3154, %v3152
    %v3165 = vpack.c.bf16 %v3157, %v3155
    %v3166 = vpack.c.bf16 %v3158, %v3156
    %v3167 = vpack.c.bf16 %v3161, %v3159
    %v3168 = vpack.c.bf16 %v3162, %v3160
    %s3169 = scalar_lea.vmem [#allocation13], 128
    %v3170 = vld [vmem:[%s3169] sm:$0xf]
    %v3171 = vld [vmem:[%s3169 + $0x4] sm:$0xf]
    %v3172 = vld [vmem:[%s3169 + $0x8] sm:$0xf]
    %v3173 = vld [vmem:[%s3169 + $0xc] sm:$0xf]
    %v3174 = vld [vmem:[%s3169 + $0x10] sm:$0xf]
    %v3175 = vld [vmem:[%s3169 + $0x14] sm:$0xf]
    %v3176 = vld [vmem:[%s3169 + $0x18] sm:$0xf]
    %v3177 = vld [vmem:[%s3169 + $0x1c] sm:$0xf]
    %v3178 = vld [vmem:[%s3169 + $0x20] sm:$0xf]
    %v3179 = vld [vmem:[%s3169 + $0x24] sm:$0xf]
    %v3180 = vld [vmem:[%s3169 + $0x28] sm:$0xf]
    %v3181 = vld [vmem:[%s3169 + $0x2c] sm:$0xf]
    %v3182 = vld [vmem:[%s3169 + $0x30] sm:$0xf]
    %v3183 = vld [vmem:[%s3169 + $0x34] sm:$0xf]
    %v3184 = vld [vmem:[%s3169 + $0x38] sm:$0xf]
    %v3185 = vld [vmem:[%s3169 + $0x3c] sm:$0xf]
    %v3186 = vld [vmem:[%s3169 + $0x40] sm:$0xf]
    %v3187 = vld [vmem:[%s3169 + $0x44] sm:$0xf]
    %v3188 = vld [vmem:[%s3169 + $0x48] sm:$0xf]
    %v3189 = vld [vmem:[%s3169 + $0x4c] sm:$0xf]
    %v3190 = vld [vmem:[%s3169 + $0x50] sm:$0xf]
    %v3191 = vld [vmem:[%s3169 + $0x54] sm:$0xf]
    %v3192 = vld [vmem:[%s3169 + $0x58] sm:$0xf]
    %v3193 = vld [vmem:[%s3169 + $0x5c] sm:$0xf]
    %v3194 = vld [vmem:[%s3169 + $0x60] sm:$0xf]
    %v3195 = vld [vmem:[%s3169 + $0x64] sm:$0xf]
    %v3196 = vld [vmem:[%s3169 + $0x68] sm:$0xf]
    %v3197 = vld [vmem:[%s3169 + $0x6c] sm:$0xf]
    %v3198 = vld [vmem:[%s3169 + $0x70] sm:$0xf]
    %v3199 = vld [vmem:[%s3169 + $0x74] sm:$0xf]
    %v3200 = vld [vmem:[%s3169 + $0x78] sm:$0xf]
    %v3201 = vld [vmem:[%s3169 + $0x7c] sm:$0xf]
    %v3234 = vunpack.c.l.b16 %v3170
    %v3235 = vunpack.c.l.b16 %v3171
    %v3236 = vunpack.c.l.b16 %v3172
    %v3237 = vunpack.c.l.b16 %v3173
    %v3238 = vunpack.c.l.b16 %v3174
    %v3239 = vunpack.c.l.b16 %v3175
    %v3240 = vunpack.c.l.b16 %v3176
    %v3241 = vunpack.c.l.b16 %v3177
    %v3242 = vunpack.c.l.b16 %v3178
    %v3243 = vunpack.c.l.b16 %v3179
    %v3244 = vunpack.c.l.b16 %v3180
    %v3245 = vunpack.c.l.b16 %v3181
    %v3246 = vunpack.c.l.b16 %v3182
    %v3247 = vunpack.c.l.b16 %v3183
    %v3248 = vunpack.c.l.b16 %v3184
    %v3249 = vunpack.c.l.b16 %v3185
    %v3250 = vunpack.c.l.b16 %v3186
    %v3251 = vunpack.c.l.b16 %v3187
    %v3252 = vunpack.c.l.b16 %v3188
    %v3253 = vunpack.c.l.b16 %v3189
    %v3254 = vunpack.c.l.b16 %v3190
    %v3255 = vunpack.c.l.b16 %v3191
    %v3256 = vunpack.c.l.b16 %v3192
    %v3257 = vunpack.c.l.b16 %v3193
    %v3258 = vunpack.c.l.b16 %v3194
    %v3259 = vunpack.c.l.b16 %v3195
    %v3260 = vunpack.c.l.b16 %v3196
    %v3261 = vunpack.c.l.b16 %v3197
    %v3262 = vunpack.c.l.b16 %v3198
    %v3263 = vunpack.c.l.b16 %v3199
    %v3264 = vunpack.c.l.b16 %v3200
    %v3265 = vunpack.c.l.b16 %v3201
    %v3266 = vpack.c.b16 %v3235, %v3234
    %v3267 = vpack.c.b16 %v3237, %v3236
    %v3268 = vpack.c.b16 %v3239, %v3238
    %v3269 = vpack.c.b16 %v3241, %v3240
    %v3270 = vpack.c.b16 %v3243, %v3242
    %v3271 = vpack.c.b16 %v3245, %v3244
    %v3272 = vpack.c.b16 %v3247, %v3246
    %v3273 = vpack.c.b16 %v3249, %v3248
    %v3274 = vpack.c.b16 %v3251, %v3250
    %v3275 = vpack.c.b16 %v3253, %v3252
    %v3276 = vpack.c.b16 %v3255, %v3254
    %v3277 = vpack.c.b16 %v3257, %v3256
    %v3278 = vpack.c.b16 %v3259, %v3258
    %v3279 = vpack.c.b16 %v3261, %v3260
    %v3280 = vpack.c.b16 %v3263, %v3262
    %v3281 = vpack.c.b16 %v3265, %v3264
    %3298 = vmatprep.subr.bf16.mxu0 0
    %3299 = vmatpush1.bf16.msra.mxu0 %v3266
    %3300 = vmatprep.subr.bf16.mxu0 0
    %3301 = vmatpush1.bf16.msra.mxu0 %v3267
    %3302 = vmatprep.subr.bf16.mxu0 0
    %3303 = vmatpush1.bf16.msra.mxu0 %v3268
    %3304 = vmatprep.subr.bf16.mxu0 0
    %3305 = vmatpush1.bf16.msra.mxu0 %v3269
    %3306 = vmatprep.subr.bf16.mxu0 0
    %3307 = vmatpush1.bf16.msra.mxu0 %v3270
    %3308 = vmatprep.subr.bf16.mxu0 0
    %3309 = vmatpush1.bf16.msra.mxu0 %v3271
    %3310 = vmatprep.subr.bf16.mxu0 0
    %3311 = vmatpush1.bf16.msra.mxu0 %v3272
    %3312 = vmatprep.subr.bf16.mxu0 0
    %3313 = vmatpush1.bf16.msra.mxu0 %v3273
    %3314 = vmatprep.subr.bf16.mxu0 0
    %3315 = vmatpush1.bf16.msra.mxu0 %v3274
    %3316 = vmatprep.subr.bf16.mxu0 0
    %3317 = vmatpush1.bf16.msra.mxu0 %v3275
    %3318 = vmatprep.subr.bf16.mxu0 0
    %3319 = vmatpush1.bf16.msra.mxu0 %v3276
    %3320 = vmatprep.subr.bf16.mxu0 0
    %3321 = vmatpush1.bf16.msra.mxu0 %v3277
    %3322 = vmatprep.subr.bf16.mxu0 0
    %3323 = vmatpush1.bf16.msra.mxu0 %v3278
    %3324 = vmatprep.subr.bf16.mxu0 0
    %3325 = vmatpush1.bf16.msra.mxu0 %v3279
    %3326 = vmatprep.subr.bf16.mxu0 0
    %3327 = vmatpush1.bf16.msra.mxu0 %v3280
    %3328 = vmatprep.subr.bf16.mxu0 0
    %3329 = vmatpush1.bf16.msra.mxu0 %v3281
    %3330 = vmatprep.mubr.bf16.mxu0 %v3164
    %3331 = vmatmul.mubr.bf16.gmra.mrb[0].mxu0 %v3163
    %v3332 = vpop.f32.mrb[0].mxu0
    %v3333 = vadd.f32 0.0, %v3332
    %v3334 = vpop.f32.mrb[0].mxu0
    %v3335 = vpop.f32.mrb[0].mxu0
    %v3336 = vadd.f32 0.0, %v3335
    %v3337 = vpop.f32.mrb[0].mxu0
    %3338 = vmatprep.mubr.bf16.mxu0 %v3166
    %3339 = vmatmul.mubr.bf16.gmra.mrb[0].mxu0 %v3165
    %v3340 = vpop.f32.mrb[0].mxu0
    %v3341 = vadd.f32 0.0, %v3340
    %v3342 = vpop.f32.mrb[0].mxu0
    %v3343 = vpop.f32.mrb[0].mxu0
    %v3344 = vadd.f32 0.0, %v3343
    %v3345 = vpop.f32.mrb[0].mxu0
    %3346 = vmatprep.mubr.bf16.mxu0 %v3168
    %3347 = vmatmul.mubr.bf16.gmra.mrb[0].mxu0 %v3167
    %v3348 = vpop.f32.mrb[0].mxu0
    %v3349 = vadd.f32 0.0, %v3348
    %v3350 = vpop.f32.mrb[0].mxu0
    %v3351 = vpop.f32.mrb[0].mxu0
    %v3352 = vadd.f32 0.0, %v3351
    %v3353 = vpop.f32.mrb[0].mxu0
    %3354 = vdwg.mxu0
    %v3355 = vadd.f32 %v2682, %v3333
    %v3356 = vadd.f32 %v2683, %v3336
    %v3357 = vadd.f32 %v2684, %v3341
    %v3358 = vadd.f32 %v2685, %v3344
    %v3359 = vadd.f32 %v2686, %v3349
    %v3360 = vadd.f32 %v2687, %v3352
    %v3361 = vmul.f32 %v3355, %v3355
    %v3362 = vmul.f32 %v3356, %v3356
    %v3363 = vmul.f32 %v3357, %v3357
    %v3364 = vmul.f32 %v3358, %v3358
    %v3365 = vmul.f32 %v3359, %v3359
    %v3366 = vmul.f32 %v3360, %v3360
    %3367 = vadd.xlane.f32.xlu0 %v3361
    %v3368 = vpop.xlane.xlu0 %3367
    %3369 = vadd.xlane.f32.xlu0 %v3362
    %v3370 = vpop.xlane.xlu0 %3369
    %3371 = vadd.xlane.f32.xlu0 %v3363
    %v3372 = vpop.xlane.xlu0 %3371
    %3373 = vadd.xlane.f32.xlu0 %v3364
    %v3374 = vpop.xlane.xlu0 %3373
    %3375 = vadd.xlane.f32.xlu0 %v3365
    %v3376 = vpop.xlane.xlu0 %3375
    %3377 = vadd.xlane.f32.xlu0 %v3366
    %v3378 = vpop.xlane.xlu0 %3377
    %v3379 = vmul.f32 %v3368, %v313
    %v3380 = vmul.f32 %v3370, %v313
    %v3381 = vmul.f32 %v3372, %v313
    %v3382 = vmul.f32 %v3374, %v313
    %v3383 = vmul.f32 %v3376, %v313
    %v3384 = vmul.f32 %v3378, %v313
    %v3385 = vadd.f32 %v3379, 1e-06
    %v3386 = vadd.f32 %v3380, 1e-06
    %v3387 = vadd.f32 %v3381, 1e-06
    %v3388 = vadd.f32 %v3382, 1e-06
    %v3389 = vadd.f32 %v3383, 1e-06
    %v3390 = vadd.f32 %v3384, 1e-06
    %v3391 = vrsqrt.pop %v3385
    %v3392 = vrsqrt.pop %v3386
    %v3393 = vrsqrt.pop %v3387
    %v3394 = vrsqrt.pop %v3388
    %v3395 = vrsqrt.pop %v3389
    %v3396 = vrsqrt.pop %v3390
    %v3397 = vmul.f32 %v3355, %v3391
    %v3398 = vmul.f32 %v3356, %v3392
    %v3399 = vmul.f32 %v3357, %v3393
    %v3400 = vmul.f32 %v3358, %v3394
    %v3401 = vmul.f32 %v3359, %v3395
    %v3402 = vmul.f32 %v3360, %v3396
    %v3403 = vld [vmem:[%s11] sm:$0x1]
    %v3405 = vlaneseq
    %v3406 = vshrl.u32 %v3405, 7
    %v3407 = vsub.s32 0, %v3406
    %v3408 = vrot.slane %v3403, %v3407
    %v3410 = vmul.f32 %v3397, %v3408
    %v3411 = vmul.f32 %v3398, %v3408
    %v3412 = vmul.f32 %v3399, %v3408
    %v3413 = vmul.f32 %v3400, %v3408
    %v3414 = vmul.f32 %v3401, %v3408
    %v3415 = vmul.f32 %v3402, %v3408
    %v3416 = vpack.c.bf16 %v3411, %v3410
    %v3417 = vpack.c.bf16 %v3413, %v3412
    %v3418 = vpack.c.bf16 %v3415, %v3414
    %v3419 = vld [vmem:[%s12] sm:$0xf]
    %v3420 = vld [vmem:[%s12 + $0x4] sm:$0xf]
    %v3421 = vld [vmem:[%s12 + $0x8] sm:$0xf]
    %v3422 = vld [vmem:[%s12 + $0xc] sm:$0xf]
    %v3423 = vld [vmem:[%s12 + $0x10] sm:$0xf]
    %v3424 = vld [vmem:[%s12 + $0x14] sm:$0xf]
    %v3425 = vld [vmem:[%s12 + $0x18] sm:$0xf]
    %v3426 = vld [vmem:[%s12 + $0x1c] sm:$0xf]
    %v3427 = vld [vmem:[%s12 + $0x20] sm:$0xf]
    %v3428 = vld [vmem:[%s12 + $0x24] sm:$0xf]
    %v3429 = vld [vmem:[%s12 + $0x28] sm:$0xf]
    %v3430 = vld [vmem:[%s12 + $0x2c] sm:$0xf]
    %v3431 = vld [vmem:[%s12 + $0x30] sm:$0xf]
    %v3432 = vld [vmem:[%s12 + $0x34] sm:$0xf]
    %v3433 = vld [vmem:[%s12 + $0x38] sm:$0xf]
    %v3434 = vld [vmem:[%s12 + $0x3c] sm:$0xf]
    %v3451 = vunpack.c.l.b16 %v3419
    %v3452 = vunpack.c.l.b16 %v3420
    %v3453 = vunpack.c.l.b16 %v3421
    %v3454 = vunpack.c.l.b16 %v3422
    %v3455 = vunpack.c.l.b16 %v3423
    %v3456 = vunpack.c.l.b16 %v3424
    %v3457 = vunpack.c.l.b16 %v3425
    %v3458 = vunpack.c.l.b16 %v3426
    %v3459 = vunpack.c.l.b16 %v3427
    %v3460 = vunpack.c.l.b16 %v3428
    %v3461 = vunpack.c.l.b16 %v3429
    %v3462 = vunpack.c.l.b16 %v3430
    %v3463 = vunpack.c.l.b16 %v3431
    %v3464 = vunpack.c.l.b16 %v3432
    %v3465 = vunpack.c.l.b16 %v3433
    %v3466 = vunpack.c.l.b16 %v3434
    %v3467 = vpack.c.b16 %v3452, %v3451
    %v3468 = vpack.c.b16 %v3454, %v3453
    %v3469 = vpack.c.b16 %v3456, %v3455
    %v3470 = vpack.c.b16 %v3458, %v3457
    %v3471 = vpack.c.b16 %v3460, %v3459
    %v3472 = vpack.c.b16 %v3462, %v3461
    %v3473 = vpack.c.b16 %v3464, %v3463
    %v3474 = vpack.c.b16 %v3466, %v3465
    %3483 = vmatprep.subr.bf16.mxu0 0
    %3484 = vmatpush1.bf16.msra.mxu0 %v3467
    %3485 = vmatprep.subr.bf16.mxu0 0
    %3486 = vmatpush1.bf16.msra.mxu0 %v3468
    %3487 = vmatprep.subr.bf16.mxu0 0
    %3488 = vmatpush1.bf16.msra.mxu0 %v3469
    %3489 = vmatprep.subr.bf16.mxu0 0
    %3490 = vmatpush1.bf16.msra.mxu0 %v3470
    %3491 = vmatprep.subr.bf16.mxu0 0
    %3492 = vmatpush1.bf16.msra.mxu0 %v3471
    %3493 = vmatprep.subr.bf16.mxu0 0
    %3494 = vmatpush1.bf16.msra.mxu0 %v3472
    %3495 = vmatprep.subr.bf16.mxu0 0
    %3496 = vmatpush1.bf16.msra.mxu0 %v3473
    %3497 = vmatprep.subr.bf16.mxu0 0
    %3498 = vmatpush1.bf16.msra.mxu0 %v3474
    %3499 = vmatprep.subr.bf16.mxu0 0
    %3500 = vmatpush1.bf16.msra.mxu0 0
    %3501 = vmatprep.subr.bf16.mxu0 0
    %3502 = vmatpush1.bf16.msra.mxu0 0
    %3503 = vmatprep.subr.bf16.mxu0 0
    %3504 = vmatpush1.bf16.msra.mxu0 0
    %3505 = vmatprep.subr.bf16.mxu0 0
    %3506 = vmatpush1.bf16.msra.mxu0 0
    %3507 = vmatprep.subr.bf16.mxu0 0
    %3508 = vmatpush1.bf16.msra.mxu0 0
    %3509 = vmatprep.subr.bf16.mxu0 0
    %3510 = vmatpush1.bf16.msra.mxu0 0
    %3511 = vmatprep.subr.bf16.mxu0 0
    %3512 = vmatpush1.bf16.msra.mxu0 0
    %3513 = vmatprep.subr.bf16.mxu0 0
    %3514 = vmatpush1.bf16.msra.mxu0 0
    %3515 = vmatprep.mubr.bf16.mxu0 0
    %3516 = vmatmul.mubr.bf16.gmra.mrb[0].mxu0 %v3416
    %v3517 = vpop.f32.mrb[0].mxu0
    %v3518 = vadd.f32 0.0, %v3517
    %v3519 = vpop.f32.mrb[0].mxu0
    %v3520 = vpop.f32.mrb[0].mxu0
    %v3521 = vadd.f32 0.0, %v3520
    %v3522 = vpop.f32.mrb[0].mxu0
    %3523 = vmatprep.mubr.bf16.mxu0 0
    %3524 = vmatmul.mubr.bf16.gmra.mrb[0].mxu0 %v3417
    %v3525 = vpop.f32.mrb[0].mxu0
    %v3526 = vadd.f32 0.0, %v3525
    %v3527 = vpop.f32.mrb[0].mxu0
    %v3528 = vpop.f32.mrb[0].mxu0
    %v3529 = vadd.f32 0.0, %v3528
    %v3530 = vpop.f32.mrb[0].mxu0
    %3531 = vmatprep.mubr.bf16.mxu0 0
    %3532 = vmatmul.mubr.bf16.gmra.mrb[0].mxu0 %v3418
    %v3533 = vpop.f32.mrb[0].mxu0
    %v3534 = vadd.f32 0.0, %v3533
    %v3535 = vpop.f32.mrb[0].mxu0
    %v3536 = vpop.f32.mrb[0].mxu0
    %v3537 = vadd.f32 0.0, %v3536
    %v3538 = vpop.f32.mrb[0].mxu0
    %3539 = vdwg.mxu0
    %3540 = vst [vmem:[#allocation14] sm:$0xff] %v3518
    %3541 = vst [vmem:[#allocation14 + $0x8] sm:$0xff] %v3521
    %3542 = vst [vmem:[#allocation14 + $0x10] sm:$0xff] %v3526
    %3543 = vst [vmem:[#allocation14 + $0x18] sm:$0xff] %v3529
    %3544 = vst [vmem:[#allocation14 + $0x20] sm:$0xff] %v3534
    %3545 = vst [vmem:[#allocation14 + $0x28] sm:$0xff] %v3537
    // Predicated region
    $region82: #{gofa_helper_forward.1} parent=1 // pred_check
      _
    $region83: #{gofa_helper_forward.1} parent=1 // pred_check_branch
      %3547 = sbr.rel (0) target = $region85
    $region84: #{gofa_helper_forward.1} parent=1 // pred_region
      %s3549 = ssub.s32 768, 768
      %3550 = vsyncadd [#allocation4], %s3549
      %s3551 = sshll.u32 [#allocation14], 4
      %s3552 = int_to_ptr.vmem [resolvable:$true] %s3551
      %3557 = dma.vmem_to_hbm [thread:$0]  %s3552, 768, %s13, [#allocation4], 128, 128, 8
    $region85: #{gofa_helper_forward.1} parent=1 // pred_fallthru
      _
    // Predicated region
    $region86: #{gofa_helper_forward.1} parent=1 // pred_check
      _
    $region87: #{gofa_helper_forward.1} parent=1 // pred_check_branch
      %3559 = sbr.rel (0) target = $region89
    $region88: #{gofa_helper_forward.1} parent=1 // pred_region
      %3560 = dma.done [#allocation4], 768
    $region89: #{gofa_helper_forward.1} parent=1 // pred_fallthru
      _
    %3561 = vsyncpa [#allocation3], 1
    %3562 = vsyncpa [#allocation6], 1
    %3563 = vsyncpa [#allocation9], 1
    %3564 = vsyncpa [#allocation12], 1
    %3565 = vsyncpa [#allocation4], 1

</llo_original>
